<compile_context>
chip_gen: v5e
topology: v5e:2x2
jax: 0.10.0
libtpu: 0.0.40
codegen_flags: <defaults>
</compile_context>

<pallas_src>
import numpy as np
import jax
import jax.numpy as jnp
from jax import lax
from jax.experimental import pallas as pl
from jax.experimental.pallas import tpu as pltpu


def _round_up(x, m):
    return (x + m - 1) // m * m


# ---------------------------------------------------------------------------
# Pallas kernels
# ---------------------------------------------------------------------------
def _stacked_lstm_kernel(x_ref, wih_ref, whh_ref, b_ref, out_ref,
                         gx_ref, h_sc, c_sc):
    """Whole stacked LSTM in ONE pallas_call (no grid).

    x_ref   : (T, BP, HP)     time-major, zero-padded layer-0 input
    wih_ref : (L, HP, 4*HP)   input->gate weights, each gate lane-aligned to HP
    whh_ref : (L, HP, 4*HP)   hidden->gate weights, same layout
    b_ref   : (L, 1, 4*HP)    b_ih + b_hh, gate lane-aligned
    out_ref : (T, BP, HP)     last layer's hidden sequence; also reused as the
                              inter-layer activation buffer (stays in VMEM)
    gx_ref  : (T, BP, 4*HP)   scratch: hoisted input projection for all steps
    h_sc/c_sc: (BP, HP)       scratch: recurrent state
    """
    T, BP, HP = out_ref.shape
    L = wih_ref.shape[0]

    def sigmoid(z):                      # one EUP tanh instead of exp + divide
        return 0.5 * (jnp.tanh(0.5 * z) + 1.0)

    for l in range(L):                   # static layer loop, weights resident
        src = x_ref if l == 0 else out_ref
        w_hh = whh_ref[l]                # hoisted (HP, 4HP) load

        # Phase 1: input projection for ALL timesteps as one big matmul.
        x_flat = src[...].reshape(T * BP, HP)
        gx = jnp.dot(x_flat, wih_ref[l],
                     preferred_element_type=jnp.float32) + b_ref[l]
        gx_ref[...] = gx.reshape(T, BP, 4 * HP)

        # Phase 2: recurrence; per step only h @ W_hh, state in VMEM scratch.
        h_sc[...] = jnp.zeros_like(h_sc)
        c_sc[...] = jnp.zeros_like(c_sc)

        def step(t, carry):
            gates = gx_ref[t] + jnp.dot(h_sc[...], w_hh,
                                        preferred_element_type=jnp.float32)
            i_g = sigmoid(gates[:, 0 * HP:1 * HP])   # lane-aligned 128-wide
            f_g = sigmoid(gates[:, 1 * HP:2 * HP])
            g_g = jnp.tanh(gates[:, 2 * HP:3 * HP])
            o_g = sigmoid(gates[:, 3 * HP:4 * HP])
            c_new = f_g * c_sc[...] + i_g * g_g
            h_new = o_g * jnp.tanh(c_new)
            c_sc[...] = c_new
            h_sc[...] = h_new
            out_ref[t] = h_new           # layer output == next layer's input
            return carry

        lax.fori_loop(0, T, step, 0, unroll=True)


def _linear_kernel(x_ref, w_ref, b_ref, o_ref):
    o_ref[...] = (jnp.dot(x_ref[...], w_ref[...],
                          preferred_element_type=jnp.float32) + b_ref[...])


# ---------------------------------------------------------------------------
# Wrappers
# ---------------------------------------------------------------------------
def stacked_lstm(x_bte, lstm_params):
    """x_bte: (B, T, E) batch-first fp32. Returns ((T, BP, HP) padded hidden
    sequence of the last layer, HP)."""
    B, T, E = x_bte.shape
    H = lstm_params[0]["w_hh"].shape[1]
    L = len(lstm_params)
    HP = _round_up(max(E, H), 128)       # shared padded feature/hidden width
    BP = _round_up(max(B, 8), 8)         # sublane-aligned batch

    # Time-major, zero-padded input slab.
    x_tm = jnp.transpose(x_bte, (1, 0, 2)).astype(jnp.float32)      # (T, B, E)
    x_pad = jnp.zeros((T, BP, HP), jnp.float32).at[:, :B, :E].set(x_tm)

    # Stack + pad weights so every gate occupies its own lane-aligned HP block.
    wih = jnp.zeros((L, HP, 4, HP), jnp.float32)
    whh = jnp.zeros((L, HP, 4, HP), jnp.float32)
    bias = jnp.zeros((L, 4, HP), jnp.float32)
    for l, p in enumerate(lstm_params):
        in_dim = p["w_ih"].shape[1]
        wih = wih.at[l, :in_dim, :, :H].set(
            jnp.asarray(p["w_ih"], jnp.float32).T.reshape(in_dim, 4, H))
        whh = whh.at[l, :H, :, :H].set(
            jnp.asarray(p["w_hh"], jnp.float32).T.reshape(H, 4, H))
        bias = bias.at[l, :, :H].set(
            jnp.asarray(p["b_ih"] + p["b_hh"], jnp.float32).reshape(4, H))
    wih = wih.reshape(L, HP, 4 * HP)
    whh = whh.reshape(L, HP, 4 * HP)
    bias = bias.reshape(L, 1, 4 * HP)

    h_seq = pl.pallas_call(
        _stacked_lstm_kernel,
        out_shape=jax.ShapeDtypeStruct((T, BP, HP), jnp.float32),
        scratch_shapes=[
            pltpu.VMEM((T, BP, 4 * HP), jnp.float32),   # hoisted gates_x
            pltpu.VMEM((BP, HP), jnp.float32),          # h_t
            pltpu.VMEM((BP, HP), jnp.float32),          # c_t
        ],
    )(x_pad, wih, whh, bias)
    return h_seq, HP


def linear(packed, w, b):
    """packed: (P, HP) padded features; w: (V, H) PyTorch layout; b: (V,)."""
    P, HP = packed.shape
    V, H = w.shape
    VP = _round_up(V, 128)               # lane-dense output tile
    PP = _round_up(max(P, 8), 8)
    x_pad = jnp.zeros((PP, HP), jnp.float32).at[:P].set(packed)
    w_pad = jnp.zeros((HP, VP), jnp.float32).at[:H, :V].set(
        jnp.asarray(w, jnp.float32).T)
    b_pad = jnp.zeros((1, VP), jnp.float32).at[0, :V].set(
        jnp.asarray(b, jnp.float32))
    out = pl.pallas_call(
        _linear_kernel,
        out_shape=jax.ShapeDtypeStruct((PP, VP), jnp.float32),
    )(x_pad, w_pad, b_pad)
    return out[:P, :V]


def lstm_model_forward(params, input_features, caps, lens):
    """Mirrors LSTMModel.forward.

    input_features: (B, E) float32
    caps:           (B, T_cap) int32 token ids
    lens:           python list of ints, sorted descending
                    (pack_padded_sequence enforce_sorted=True semantics)
    Returns (sum(lens), vocabulary_size) logits over the packed sequence.
    """
    lens = [int(l) for l in lens]
    assert all(lens[i] >= lens[i + 1] for i in range(len(lens) - 1)), \
        "pack_padded_sequence(enforce_sorted=True) requires descending lens"

    # Embedding lookup (glue, plain JAX gather) + cat of the image feature.
    embeddings = jnp.take(params["embedding"], caps, axis=0)        # (B, Tc, E)
    embeddings = jnp.concatenate([input_features[:, None, :], embeddings],
                                 axis=1)                            # (B, T, E)
    B, T, E = embeddings.shape

    # Fused stacked LSTM (time-major, padded, single kernel).
    h_seq_pad, HP = stacked_lstm(embeddings, params["lstm"])        # (T, BP, HP)

    # pack_padded_sequence(batch_first=True).data ordering:
    # for each timestep t, batch rows with lens[b] > t, in batch order.
    # TODO(synk): index lists are built from Python lens at trace time, so a
    # change in lens retraces; a fully dynamic packed gather is not expressed
    # as a kernel here.
    idx_b, idx_t = [], []
    for t in range(max(lens)):
        for b in range(B):
            if lens[b] > t:
                idx_b.append(b)
                idx_t.append(t)
    packed = h_seq_pad[np.array(idx_t), np.array(idx_b)]            # (P, HP)

    # Final projection to vocabulary (Pallas matmul, lane-dense padded output).
    return linear(packed, params["linear_w"], params["linear_b"])


# ---------------------------------------------------------------------------
# Deterministic parameter construction
# ---------------------------------------------------------------------------
def init_params(key, embedding_size, hidden_size, vocab_size, num_layers):
    keys = jax.random.split(key, 3 + 4 * num_layers)
    params = {
        "embedding": 0.1 * jax.random.normal(keys[0], (vocab_size, embedding_size),
                                             jnp.float32),
        "linear_w": 0.1 * jax.random.normal(keys[1], (vocab_size, hidden_size),
                                            jnp.float32),
        "linear_b": 0.1 * jax.random.normal(keys[2], (vocab_size,), jnp.float32),
        "lstm": [],
    }
    for l in range(num_layers):
        in_dim = embedding_size if l == 0 else hidden_size
        k = keys[3 + 4 * l:3 + 4 * (l + 1)]
        params["lstm"].append({
            "w_ih": 0.1 * jax.random.normal(k[0], (4 * hidden_size, in_dim), jnp.float32),
            "w_hh": 0.1 * jax.random.normal(k[1], (4 * hidden_size, hidden_size), jnp.float32),
            "b_ih": 0.1 * jax.random.normal(k[2], (4 * hidden_size,), jnp.float32),
            "b_hh": 0.1 * jax.random.normal(k[3], (4 * hidden_size,), jnp.float32),
        })
    return params


if __name__ == "__main__":
    batch = 2
    embedding_size = 32
    hidden_size = 32
    vocab_size = 50
    num_layers = 2
    cap_len = 8                      # caption tokens; total seq = cap_len + 1
    lens = [9, 7]                    # sorted descending, <= cap_len + 1

    key = jax.random.PRNGKey(0)
    k_param, k_feat, k_cap = jax.random.split(key, 3)

    params = init_params(k_param, embedding_size, hidden_size, vocab_size, num_layers)
    input_features = jax.random.normal(k_feat, (batch, embedding_size), jnp.float32)
    caps = jax.random.randint(k_cap, (batch, cap_len), 0, vocab_size, dtype=jnp.int32)

    out = lstm_model_forward(params, input_features, caps, lens)
    out = jax.block_until_ready(out)
    assert out.shape == (sum(lens), vocab_size), out.shape
    assert bool(jnp.all(jnp.isfinite(out)))
    print("KERNEL_OK")
</pallas_src>

<mosaic_0001>
module attributes {stable_mosaic.version = 11 : i64} {
  func.func @_stacked_lstm_kernel(%arg0: memref<9x8x128xf32, #tpu.memory_space<vmem>>, %arg1: memref<2x128x512xf32, #tpu.memory_space<vmem>>, %arg2: memref<2x128x512xf32, #tpu.memory_space<vmem>>, %arg3: memref<2x1x512xf32, #tpu.memory_space<vmem>>, %arg4: memref<9x8x128xf32, #tpu.memory_space<vmem>>, %arg5: memref<9x8x512xf32, #tpu.memory_space<vmem>>, %arg6: memref<8x128xf32, #tpu.memory_space<vmem>>, %arg7: memref<8x128xf32, #tpu.memory_space<vmem>>) attributes {dimension_semantics = [], scalar_prefetch = 0 : i64, scratch_operands = 3 : i64, tpu.core_type = #tpu.core_type<tc>} {
    %c0 = arith.constant 0 : index
    %c0_0 = arith.constant 0 : index
    %c0_1 = arith.constant 0 : index
    %0 = vector.load %arg2[%c0, %c0_0, %c0_1] : memref<2x128x512xf32, #tpu.memory_space<vmem>>, vector<1x128x512xf32>
    %1 = vector.shape_cast %0 : vector<1x128x512xf32> to vector<128x512xf32>
    %c0_2 = arith.constant 0 : index
    %c0_3 = arith.constant 0 : index
    %c0_4 = arith.constant 0 : index
    %2 = vector.load %arg0[%c0_2, %c0_3, %c0_4] : memref<9x8x128xf32, #tpu.memory_space<vmem>>, vector<9x8x128xf32>
    %3 = vector.shape_cast %2 : vector<9x8x128xf32> to vector<72x128xf32>
    %c0_5 = arith.constant 0 : index
    %c0_6 = arith.constant 0 : index
    %c0_7 = arith.constant 0 : index
    %4 = vector.load %arg1[%c0_5, %c0_6, %c0_7] : memref<2x128x512xf32, #tpu.memory_space<vmem>>, vector<1x128x512xf32>
    %5 = vector.shape_cast %4 : vector<1x128x512xf32> to vector<128x512xf32>
    %cst = arith.constant dense<0.000000e+00> : vector<72x512xf32>
    %6 = tpu.matmul %3, %5, %cst {dimension_numbers = #tpu.dot_dimension_numbers<[1], [0], [0], [1], [0, 0, 1, 1], [], []>} : vector<72x128xf32>, vector<128x512xf32>, vector<72x512xf32> -> vector<72x512xf32>
    %c0_8 = arith.constant 0 : index
    %c0_9 = arith.constant 0 : index
    %c0_10 = arith.constant 0 : index
    %7 = vector.load %arg3[%c0_8, %c0_9, %c0_10] : memref<2x1x512xf32, #tpu.memory_space<vmem>>, vector<1x1x512xf32>
    %8 = vector.shape_cast %7 : vector<1x1x512xf32> to vector<1x512xf32>
    %9 = vector.broadcast %8 : vector<1x512xf32> to vector<72x512xf32>
    %10 = arith.addf %6, %9 : vector<72x512xf32>
    %11 = vector.shape_cast %10 : vector<72x512xf32> to vector<9x8x512xf32>
    %c0_11 = arith.constant 0 : index
    %c0_12 = arith.constant 0 : index
    %c0_13 = arith.constant 0 : index
    %12 = vector.load %arg5[%c0_11, %c0_12, %c0_13] : memref<9x8x512xf32, #tpu.memory_space<vmem>>, vector<9x8x512xf32>
    tpu.vector_store %arg5[%c0_11, %c0_12, %c0_13], %11 {strides = array<i32>} : memref<9x8x512xf32, #tpu.memory_space<vmem>>, vector<9x8x512xf32>,
    %cst_14 = arith.constant 0.000000e+00 : f32
    %13 = vector.broadcast %cst_14 : f32 to vector<8x128xf32>
    %c0_15 = arith.constant 0 : index
    %c0_16 = arith.constant 0 : index
    %14 = vector.load %arg6[%c0_15, %c0_16] : memref<8x128xf32, #tpu.memory_space<vmem>>, vector<8x128xf32>
    tpu.vector_store %arg6[%c0_15, %c0_16], %13 {strides = array<i32>} : memref<8x128xf32, #tpu.memory_space<vmem>>, vector<8x128xf32>,
    %cst_17 = arith.constant 0.000000e+00 : f32
    %15 = vector.broadcast %cst_17 : f32 to vector<8x128xf32>
    %c0_18 = arith.constant 0 : index
    %c0_19 = arith.constant 0 : index
    %16 = vector.load %arg7[%c0_18, %c0_19] : memref<8x128xf32, #tpu.memory_space<vmem>>, vector<8x128xf32>
    tpu.vector_store %arg7[%c0_18, %c0_19], %15 {strides = array<i32>} : memref<8x128xf32, #tpu.memory_space<vmem>>, vector<8x128xf32>,
    %c0_i32 = arith.constant 0 : i32
    %17 = arith.index_cast %c0_i32 : i32 to index
    %c0_20 = arith.constant 0 : index
    %c0_21 = arith.constant 0 : index
    %18 = vector.load %arg5[%17, %c0_20, %c0_21] : memref<9x8x512xf32, #tpu.memory_space<vmem>>, vector<1x8x512xf32>
    %19 = vector.shape_cast %18 : vector<1x8x512xf32> to vector<8x512xf32>
    %c0_22 = arith.constant 0 : index
    %c0_23 = arith.constant 0 : index
    %20 = vector.load %arg6[%c0_22, %c0_23] : memref<8x128xf32, #tpu.memory_space<vmem>>, vector<8x128xf32>
    %cst_24 = arith.constant dense<0.000000e+00> : vector<8x512xf32>
    %21 = tpu.matmul %20, %1, %cst_24 {dimension_numbers = #tpu.dot_dimension_numbers<[1], [0], [0], [1], [0, 0, 1, 1], [], []>} : vector<8x128xf32>, vector<128x512xf32>, vector<8x512xf32> -> vector<8x512xf32>
    %22 = arith.addf %19, %21 : vector<8x512xf32>
    %23 = vector.extract_strided_slice %22 {offsets = [0, 0], sizes = [8, 128], strides = [1, 1]} : vector<8x512xf32> to vector<8x128xf32>
    %cst_25 = arith.constant 5.000000e-01 : f32
    %24 = vector.broadcast %cst_25 : f32 to vector<8x128xf32>
    %25 = arith.mulf %24, %23 : vector<8x128xf32>
    %26 = math.tanh %25 : vector<8x128xf32>
    %cst_26 = arith.constant 1.000000e+00 : f32
    %27 = vector.broadcast %cst_26 : f32 to vector<8x128xf32>
    %28 = arith.addf %26, %27 : vector<8x128xf32>
    %cst_27 = arith.constant 5.000000e-01 : f32
    %29 = vector.broadcast %cst_27 : f32 to vector<8x128xf32>
    %30 = arith.mulf %29, %28 : vector<8x128xf32>
    %31 = vector.extract_strided_slice %22 {offsets = [0, 128], sizes = [8, 128], strides = [1, 1]} : vector<8x512xf32> to vector<8x128xf32>
    %cst_28 = arith.constant 5.000000e-01 : f32
    %32 = vector.broadcast %cst_28 : f32 to vector<8x128xf32>
    %33 = arith.mulf %32, %31 : vector<8x128xf32>
    %34 = math.tanh %33 : vector<8x128xf32>
    %cst_29 = arith.constant 1.000000e+00 : f32
    %35 = vector.broadcast %cst_29 : f32 to vector<8x128xf32>
    %36 = arith.addf %34, %35 : vector<8x128xf32>
    %cst_30 = arith.constant 5.000000e-01 : f32
    %37 = vector.broadcast %cst_30 : f32 to vector<8x128xf32>
    %38 = arith.mulf %37, %36 : vector<8x128xf32>
    %39 = vector.extract_strided_slice %22 {offsets = [0, 256], sizes = [8, 128], strides = [1, 1]} : vector<8x512xf32> to vector<8x128xf32>
    %40 = math.tanh %39 : vector<8x128xf32>
    %41 = vector.extract_strided_slice %22 {offsets = [0, 384], sizes = [8, 128], strides = [1, 1]} : vector<8x512xf32> to vector<8x128xf32>
    %cst_31 = arith.constant 5.000000e-01 : f32
    %42 = vector.broadcast %cst_31 : f32 to vector<8x128xf32>
    %43 = arith.mulf %42, %41 : vector<8x128xf32>
    %44 = math.tanh %43 : vector<8x128xf32>
    %cst_32 = arith.constant 1.000000e+00 : f32
    %45 = vector.broadcast %cst_32 : f32 to vector<8x128xf32>
    %46 = arith.addf %44, %45 : vector<8x128xf32>
    %cst_33 = arith.constant 5.000000e-01 : f32
    %47 = vector.broadcast %cst_33 : f32 to vector<8x128xf32>
    %48 = arith.mulf %47, %46 : vector<8x128xf32>
    %c0_34 = arith.constant 0 : index
    %c0_35 = arith.constant 0 : index
    %49 = vector.load %arg7[%c0_34, %c0_35] : memref<8x128xf32, #tpu.memory_space<vmem>>, vector<8x128xf32>
    %50 = arith.mulf %38, %49 : vector<8x128xf32>
    %51 = arith.mulf %30, %40 : vector<8x128xf32>
    %52 = arith.addf %50, %51 : vector<8x128xf32>
    %53 = math.tanh %52 : vector<8x128xf32>
    %54 = arith.mulf %48, %53 : vector<8x128xf32>
    %c0_36 = arith.constant 0 : index
    %c0_37 = arith.constant 0 : index
    %55 = vector.load %arg7[%c0_36, %c0_37] : memref<8x128xf32, #tpu.memory_space<vmem>>, vector<8x128xf32>
    tpu.vector_store %arg7[%c0_36, %c0_37], %52 {strides = array<i32>} : memref<8x128xf32, #tpu.memory_space<vmem>>, vector<8x128xf32>,
    %c0_38 = arith.constant 0 : index
    %c0_39 = arith.constant 0 : index
    %56 = vector.load %arg6[%c0_38, %c0_39] : memref<8x128xf32, #tpu.memory_space<vmem>>, vector<8x128xf32>
    tpu.vector_store %arg6[%c0_38, %c0_39], %54 {strides = array<i32>} : memref<8x128xf32, #tpu.memory_space<vmem>>, vector<8x128xf32>,
    %57 = arith.index_cast %c0_i32 : i32 to index
    %c0_40 = arith.constant 0 : index
    %c0_41 = arith.constant 0 : index
    %58 = vector.load %arg4[%57, %c0_40, %c0_41] : memref<9x8x128xf32, #tpu.memory_space<vmem>>, vector<1x8x128xf32>
    %59 = vector.shape_cast %58 : vector<1x8x128xf32> to vector<8x128xf32>
    %60 = vector.shape_cast %54 : vector<8x128xf32> to vector<1x8x128xf32>
    tpu.vector_store %arg4[%57, %c0_40, %c0_41], %60 {strides = array<i32>} : memref<9x8x128xf32, #tpu.memory_space<vmem>>, vector<1x8x128xf32>,
    %c1_i32 = arith.constant 1 : i32
    %61 = arith.index_cast %c1_i32 : i32 to index
    %c0_42 = arith.constant 0 : index
    %c0_43 = arith.constant 0 : index
    %62 = vector.load %arg5[%61, %c0_42, %c0_43] : memref<9x8x512xf32, #tpu.memory_space<vmem>>, vector<1x8x512xf32>
    %63 = vector.shape_cast %62 : vector<1x8x512xf32> to vector<8x512xf32>
    %c0_44 = arith.constant 0 : index
    %c0_45 = arith.constant 0 : index
    %64 = vector.load %arg6[%c0_44, %c0_45] : memref<8x128xf32, #tpu.memory_space<vmem>>, vector<8x128xf32>
    %cst_46 = arith.constant dense<0.000000e+00> : vector<8x512xf32>
    %65 = tpu.matmul %64, %1, %cst_46 {dimension_numbers = #tpu.dot_dimension_numbers<[1], [0], [0], [1], [0, 0, 1, 1], [], []>} : vector<8x128xf32>, vector<128x512xf32>, vector<8x512xf32> -> vector<8x512xf32>
    %66 = arith.addf %63, %65 : vector<8x512xf32>
    %67 = vector.extract_strided_slice %66 {offsets = [0, 0], sizes = [8, 128], strides = [1, 1]} : vector<8x512xf32> to vector<8x128xf32>
    %cst_47 = arith.constant 5.000000e-01 : f32
    %68 = vector.broadcast %cst_47 : f32 to vector<8x128xf32>
    %69 = arith.mulf %68, %67 : vector<8x128xf32>
    %70 = math.tanh %69 : vector<8x128xf32>
    %cst_48 = arith.constant 1.000000e+00 : f32
    %71 = vector.broadcast %cst_48 : f32 to vector<8x128xf32>
    %72 = arith.addf %70, %71 : vector<8x128xf32>
    %cst_49 = arith.constant 5.000000e-01 : f32
    %73 = vector.broadcast %cst_49 : f32 to vector<8x128xf32>
    %74 = arith.mulf %73, %72 : vector<8x128xf32>
    %75 = vector.extract_strided_slice %66 {offsets = [0, 128], sizes = [8, 128], strides = [1, 1]} : vector<8x512xf32> to vector<8x128xf32>
    %cst_50 = arith.constant 5.000000e-01 : f32
    %76 = vector.broadcast %cst_50 : f32 to vector<8x128xf32>
    %77 = arith.mulf %76, %75 : vector<8x128xf32>
    %78 = math.tanh %77 : vector<8x128xf32>
    %cst_51 = arith.constant 1.000000e+00 : f32
    %79 = vector.broadcast %cst_51 : f32 to vector<8x128xf32>
    %80 = arith.addf %78, %79 : vector<8x128xf32>
    %cst_52 = arith.constant 5.000000e-01 : f32
    %81 = vector.broadcast %cst_52 : f32 to vector<8x128xf32>
    %82 = arith.mulf %81, %80 : vector<8x128xf32>
    %83 = vector.extract_strided_slice %66 {offsets = [0, 256], sizes = [8, 128], strides = [1, 1]} : vector<8x512xf32> to vector<8x128xf32>
    %84 = math.tanh %83 : vector<8x128xf32>
    %85 = vector.extract_strided_slice %66 {offsets = [0, 384], sizes = [8, 128], strides = [1, 1]} : vector<8x512xf32> to vector<8x128xf32>
    %cst_53 = arith.constant 5.000000e-01 : f32
    %86 = vector.broadcast %cst_53 : f32 to vector<8x128xf32>
    %87 = arith.mulf %86, %85 : vector<8x128xf32>
    %88 = math.tanh %87 : vector<8x128xf32>
    %cst_54 = arith.constant 1.000000e+00 : f32
    %89 = vector.broadcast %cst_54 : f32 to vector<8x128xf32>
    %90 = arith.addf %88, %89 : vector<8x128xf32>
    %cst_55 = arith.constant 5.000000e-01 : f32
    %91 = vector.broadcast %cst_55 : f32 to vector<8x128xf32>
    %92 = arith.mulf %91, %90 : vector<8x128xf32>
    %c0_56 = arith.constant 0 : index
    %c0_57 = arith.constant 0 : index
    %93 = vector.load %arg7[%c0_56, %c0_57] : memref<8x128xf32, #tpu.memory_space<vmem>>, vector<8x128xf32>
    %94 = arith.mulf %82, %93 : vector<8x128xf32>
    %95 = arith.mulf %74, %84 : vector<8x128xf32>
    %96 = arith.addf %94, %95 : vector<8x128xf32>
    %97 = math.tanh %96 : vector<8x128xf32>
    %98 = arith.mulf %92, %97 : vector<8x128xf32>
    %c0_58 = arith.constant 0 : index
    %c0_59 = arith.constant 0 : index
    %99 = vector.load %arg7[%c0_58, %c0_59] : memref<8x128xf32, #tpu.memory_space<vmem>>, vector<8x128xf32>
    tpu.vector_store %arg7[%c0_58, %c0_59], %96 {strides = array<i32>} : memref<8x128xf32, #tpu.memory_space<vmem>>, vector<8x128xf32>,
    %c0_60 = arith.constant 0 : index
    %c0_61 = arith.constant 0 : index
    %100 = vector.load %arg6[%c0_60, %c0_61] : memref<8x128xf32, #tpu.memory_space<vmem>>, vector<8x128xf32>
    tpu.vector_store %arg6[%c0_60, %c0_61], %98 {strides = array<i32>} : memref<8x128xf32, #tpu.memory_space<vmem>>, vector<8x128xf32>,
    %101 = arith.index_cast %c1_i32 : i32 to index
    %c0_62 = arith.constant 0 : index
    %c0_63 = arith.constant 0 : index
    %102 = vector.load %arg4[%101, %c0_62, %c0_63] : memref<9x8x128xf32, #tpu.memory_space<vmem>>, vector<1x8x128xf32>
    %103 = vector.shape_cast %102 : vector<1x8x128xf32> to vector<8x128xf32>
    %104 = vector.shape_cast %98 : vector<8x128xf32> to vector<1x8x128xf32>
    tpu.vector_store %arg4[%101, %c0_62, %c0_63], %104 {strides = array<i32>} : memref<9x8x128xf32, #tpu.memory_space<vmem>>, vector<1x8x128xf32>,
    %c2_i32 = arith.constant 2 : i32
    %105 = arith.index_cast %c2_i32 : i32 to index
    %c0_64 = arith.constant 0 : index
    %c0_65 = arith.constant 0 : index
    %106 = vector.load %arg5[%105, %c0_64, %c0_65] : memref<9x8x512xf32, #tpu.memory_space<vmem>>, vector<1x8x512xf32>
    %107 = vector.shape_cast %106 : vector<1x8x512xf32> to vector<8x512xf32>
    %c0_66 = arith.constant 0 : index
    %c0_67 = arith.constant 0 : index
    %108 = vector.load %arg6[%c0_66, %c0_67] : memref<8x128xf32, #tpu.memory_space<vmem>>, vector<8x128xf32>
    %cst_68 = arith.constant dense<0.000000e+00> : vector<8x512xf32>
    %109 = tpu.matmul %108, %1, %cst_68 {dimension_numbers = #tpu.dot_dimension_numbers<[1], [0], [0], [1], [0, 0, 1, 1], [], []>} : vector<8x128xf32>, vector<128x512xf32>, vector<8x512xf32> -> vector<8x512xf32>
    %110 = arith.addf %107, %109 : vector<8x512xf32>
    %111 = vector.extract_strided_slice %110 {offsets = [0, 0], sizes = [8, 128], strides = [1, 1]} : vector<8x512xf32> to vector<8x128xf32>
    %cst_69 = arith.constant 5.000000e-01 : f32
    %112 = vector.broadcast %cst_69 : f32 to vector<8x128xf32>
    %113 = arith.mulf %112, %111 : vector<8x128xf32>
    %114 = math.tanh %113 : vector<8x128xf32>
    %cst_70 = arith.constant 1.000000e+00 : f32
    %115 = vector.broadcast %cst_70 : f32 to vector<8x128xf32>
    %116 = arith.addf %114, %115 : vector<8x128xf32>
    %cst_71 = arith.constant 5.000000e-01 : f32
    %117 = vector.broadcast %cst_71 : f32 to vector<8x128xf32>
    %118 = arith.mulf %117, %116 : vector<8x128xf32>
    %119 = vector.extract_strided_slice %110 {offsets = [0, 128], sizes = [8, 128], strides = [1, 1]} : vector<8x512xf32> to vector<8x128xf32>
    %cst_72 = arith.constant 5.000000e-01 : f32
    %120 = vector.broadcast %cst_72 : f32 to vector<8x128xf32>
    %121 = arith.mulf %120, %119 : vector<8x128xf32>
    %122 = math.tanh %121 : vector<8x128xf32>
    %cst_73 = arith.constant 1.000000e+00 : f32
    %123 = vector.broadcast %cst_73 : f32 to vector<8x128xf32>
    %124 = arith.addf %122, %123 : vector<8x128xf32>
    %cst_74 = arith.constant 5.000000e-01 : f32
    %125 = vector.broadcast %cst_74 : f32 to vector<8x128xf32>
    %126 = arith.mulf %125, %124 : vector<8x128xf32>
    %127 = vector.extract_strided_slice %110 {offsets = [0, 256], sizes = [8, 128], strides = [1, 1]} : vector<8x512xf32> to vector<8x128xf32>
    %128 = math.tanh %127 : vector<8x128xf32>
    %129 = vector.extract_strided_slice %110 {offsets = [0, 384], sizes = [8, 128], strides = [1, 1]} : vector<8x512xf32> to vector<8x128xf32>
    %cst_75 = arith.constant 5.000000e-01 : f32
    %130 = vector.broadcast %cst_75 : f32 to vector<8x128xf32>
    %131 = arith.mulf %130, %129 : vector<8x128xf32>
    %132 = math.tanh %131 : vector<8x128xf32>
    %cst_76 = arith.constant 1.000000e+00 : f32
    %133 = vector.broadcast %cst_76 : f32 to vector<8x128xf32>
    %134 = arith.addf %132, %133 : vector<8x128xf32>
    %cst_77 = arith.constant 5.000000e-01 : f32
    %135 = vector.broadcast %cst_77 : f32 to vector<8x128xf32>
    %136 = arith.mulf %135, %134 : vector<8x128xf32>
    %c0_78 = arith.constant 0 : index
    %c0_79 = arith.constant 0 : index
    %137 = vector.load %arg7[%c0_78, %c0_79] : memref<8x128xf32, #tpu.memory_space<vmem>>, vector<8x128xf32>
    %138 = arith.mulf %126, %137 : vector<8x128xf32>
    %139 = arith.mulf %118, %128 : vector<8x128xf32>
    %140 = arith.addf %138, %139 : vector<8x128xf32>
    %141 = math.tanh %140 : vector<8x128xf32>
    %142 = arith.mulf %136, %141 : vector<8x128xf32>
    %c0_80 = arith.constant 0 : index
    %c0_81 = arith.constant 0 : index
    %143 = vector.load %arg7[%c0_80, %c0_81] : memref<8x128xf32, #tpu.memory_space<vmem>>, vector<8x128xf32>
    tpu.vector_store %arg7[%c0_80, %c0_81], %140 {strides = array<i32>} : memref<8x128xf32, #tpu.memory_space<vmem>>, vector<8x128xf32>,
    %c0_82 = arith.constant 0 : index
    %c0_83 = arith.constant 0 : index
    %144 = vector.load %arg6[%c0_82, %c0_83] : memref<8x128xf32, #tpu.memory_space<vmem>>, vector<8x128xf32>
    tpu.vector_store %arg6[%c0_82, %c0_83], %142 {strides = array<i32>} : memref<8x128xf32, #tpu.memory_space<vmem>>, vector<8x128xf32>,
    %145 = arith.index_cast %c2_i32 : i32 to index
    %c0_84 = arith.constant 0 : index
    %c0_85 = arith.constant 0 : index
    %146 = vector.load %arg4[%145, %c0_84, %c0_85] : memref<9x8x128xf32, #tpu.memory_space<vmem>>, vector<1x8x128xf32>
    %147 = vector.shape_cast %146 : vector<1x8x128xf32> to vector<8x128xf32>
    %148 = vector.shape_cast %142 : vector<8x128xf32> to vector<1x8x128xf32>
    tpu.vector_store %arg4[%145, %c0_84, %c0_85], %148 {strides = array<i32>} : memref<9x8x128xf32, #tpu.memory_space<vmem>>, vector<1x8x128xf32>,
    %c3_i32 = arith.constant 3 : i32
    %149 = arith.index_cast %c3_i32 : i32 to index
    %c0_86 = arith.constant 0 : index
    %c0_87 = arith.constant 0 : index
    %150 = vector.load %arg5[%149, %c0_86, %c0_87] : memref<9x8x512xf32, #tpu.memory_space<vmem>>, vector<1x8x512xf32>
    %151 = vector.shape_cast %150 : vector<1x8x512xf32> to vector<8x512xf32>
    %c0_88 = arith.constant 0 : index
    %c0_89 = arith.constant 0 : index
    %152 = vector.load %arg6[%c0_88, %c0_89] : memref<8x128xf32, #tpu.memory_space<vmem>>, vector<8x128xf32>
    %cst_90 = arith.constant dense<0.000000e+00> : vector<8x512xf32>
    %153 = tpu.matmul %152, %1, %cst_90 {dimension_numbers = #tpu.dot_dimension_numbers<[1], [0], [0], [1], [0, 0, 1, 1], [], []>} : vector<8x128xf32>, vector<128x512xf32>, vector<8x512xf32> -> vector<8x512xf32>
    %154 = arith.addf %151, %153 : vector<8x512xf32>
    %155 = vector.extract_strided_slice %154 {offsets = [0, 0], sizes = [8, 128], strides = [1, 1]} : vector<8x512xf32> to vector<8x128xf32>
    %cst_91 = arith.constant 5.000000e-01 : f32
    %156 = vector.broadcast %cst_91 : f32 to vector<8x128xf32>
    %157 = arith.mulf %156, %155 : vector<8x128xf32>
    %158 = math.tanh %157 : vector<8x128xf32>
    %cst_92 = arith.constant 1.000000e+00 : f32
    %159 = vector.broadcast %cst_92 : f32 to vector<8x128xf32>
    %160 = arith.addf %158, %159 : vector<8x128xf32>
    %cst_93 = arith.constant 5.000000e-01 : f32
    %161 = vector.broadcast %cst_93 : f32 to vector<8x128xf32>
    %162 = arith.mulf %161, %160 : vector<8x128xf32>
    %163 = vector.extract_strided_slice %154 {offsets = [0, 128], sizes = [8, 128], strides = [1, 1]} : vector<8x512xf32> to vector<8x128xf32>
    %cst_94 = arith.constant 5.000000e-01 : f32
    %164 = vector.broadcast %cst_94 : f32 to vector<8x128xf32>
    %165 = arith.mulf %164, %163 : vector<8x128xf32>
    %166 = math.tanh %165 : vector<8x128xf32>
    %cst_95 = arith.constant 1.000000e+00 : f32
    %167 = vector.broadcast %cst_95 : f32 to vector<8x128xf32>
    %168 = arith.addf %166, %167 : vector<8x128xf32>
    %cst_96 = arith.constant 5.000000e-01 : f32
    %169 = vector.broadcast %cst_96 : f32 to vector<8x128xf32>
    %170 = arith.mulf %169, %168 : vector<8x128xf32>
    %171 = vector.extract_strided_slice %154 {offsets = [0, 256], sizes = [8, 128], strides = [1, 1]} : vector<8x512xf32> to vector<8x128xf32>
    %172 = math.tanh %171 : vector<8x128xf32>
    %173 = vector.extract_strided_slice %154 {offsets = [0, 384], sizes = [8, 128], strides = [1, 1]} : vector<8x512xf32> to vector<8x128xf32>
    %cst_97 = arith.constant 5.000000e-01 : f32
    %174 = vector.broadcast %cst_97 : f32 to vector<8x128xf32>
    %175 = arith.mulf %174, %173 : vector<8x128xf32>
    %176 = math.tanh %175 : vector<8x128xf32>
    %cst_98 = arith.constant 1.000000e+00 : f32
    %177 = vector.broadcast %cst_98 : f32 to vector<8x128xf32>
    %178 = arith.addf %176, %177 : vector<8x128xf32>
    %cst_99 = arith.constant 5.000000e-01 : f32
    %179 = vector.broadcast %cst_99 : f32 to vector<8x128xf32>
    %180 = arith.mulf %179, %178 : vector<8x128xf32>
    %c0_100 = arith.constant 0 : index
    %c0_101 = arith.constant 0 : index
    %181 = vector.load %arg7[%c0_100, %c0_101] : memref<8x128xf32, #tpu.memory_space<vmem>>, vector<8x128xf32>
    %182 = arith.mulf %170, %181 : vector<8x128xf32>
    %183 = arith.mulf %162, %172 : vector<8x128xf32>
    %184 = arith.addf %182, %183 : vector<8x128xf32>
    %185 = math.tanh %184 : vector<8x128xf32>
    %186 = arith.mulf %180, %185 : vector<8x128xf32>
    %c0_102 = arith.constant 0 : index
    %c0_103 = arith.constant 0 : index
    %187 = vector.load %arg7[%c0_102, %c0_103] : memref<8x128xf32, #tpu.memory_space<vmem>>, vector<8x128xf32>
    tpu.vector_store %arg7[%c0_102, %c0_103], %184 {strides = array<i32>} : memref<8x128xf32, #tpu.memory_space<vmem>>, vector<8x128xf32>,
    %c0_104 = arith.constant 0 : index
    %c0_105 = arith.constant 0 : index
    %188 = vector.load %arg6[%c0_104, %c0_105] : memref<8x128xf32, #tpu.memory_space<vmem>>, vector<8x128xf32>
    tpu.vector_store %arg6[%c0_104, %c0_105], %186 {strides = array<i32>} : memref<8x128xf32, #tpu.memory_space<vmem>>, vector<8x128xf32>,
    %189 = arith.index_cast %c3_i32 : i32 to index
    %c0_106 = arith.constant 0 : index
    %c0_107 = arith.constant 0 : index
    %190 = vector.load %arg4[%189, %c0_106, %c0_107] : memref<9x8x128xf32, #tpu.memory_space<vmem>>, vector<1x8x128xf32>
    %191 = vector.shape_cast %190 : vector<1x8x128xf32> to vector<8x128xf32>
    %192 = vector.shape_cast %186 : vector<8x128xf32> to vector<1x8x128xf32>
    tpu.vector_store %arg4[%189, %c0_106, %c0_107], %192 {strides = array<i32>} : memref<9x8x128xf32, #tpu.memory_space<vmem>>, vector<1x8x128xf32>,
    %c4_i32 = arith.constant 4 : i32
    %193 = arith.index_cast %c4_i32 : i32 to index
    %c0_108 = arith.constant 0 : index
    %c0_109 = arith.constant 0 : index
    %194 = vector.load %arg5[%193, %c0_108, %c0_109] : memref<9x8x512xf32, #tpu.memory_space<vmem>>, vector<1x8x512xf32>
    %195 = vector.shape_cast %194 : vector<1x8x512xf32> to vector<8x512xf32>
    %c0_110 = arith.constant 0 : index
    %c0_111 = arith.constant 0 : index
    %196 = vector.load %arg6[%c0_110, %c0_111] : memref<8x128xf32, #tpu.memory_space<vmem>>, vector<8x128xf32>
    %cst_112 = arith.constant dense<0.000000e+00> : vector<8x512xf32>
    %197 = tpu.matmul %196, %1, %cst_112 {dimension_numbers = #tpu.dot_dimension_numbers<[1], [0], [0], [1], [0, 0, 1, 1], [], []>} : vector<8x128xf32>, vector<128x512xf32>, vector<8x512xf32> -> vector<8x512xf32>
    %198 = arith.addf %195, %197 : vector<8x512xf32>
    %199 = vector.extract_strided_slice %198 {offsets = [0, 0], sizes = [8, 128], strides = [1, 1]} : vector<8x512xf32> to vector<8x128xf32>
    %cst_113 = arith.constant 5.000000e-01 : f32
    %200 = vector.broadcast %cst_113 : f32 to vector<8x128xf32>
    %201 = arith.mulf %200, %199 : vector<8x128xf32>
    %202 = math.tanh %201 : vector<8x128xf32>
    %cst_114 = arith.constant 1.000000e+00 : f32
    %203 = vector.broadcast %cst_114 : f32 to vector<8x128xf32>
    %204 = arith.addf %202, %203 : vector<8x128xf32>
    %cst_115 = arith.constant 5.000000e-01 : f32
    %205 = vector.broadcast %cst_115 : f32 to vector<8x128xf32>
    %206 = arith.mulf %205, %204 : vector<8x128xf32>
    %207 = vector.extract_strided_slice %198 {offsets = [0, 128], sizes = [8, 128], strides = [1, 1]} : vector<8x512xf32> to vector<8x128xf32>
    %cst_116 = arith.constant 5.000000e-01 : f32
    %208 = vector.broadcast %cst_116 : f32 to vector<8x128xf32>
    %209 = arith.mulf %208, %207 : vector<8x128xf32>
    %210 = math.tanh %209 : vector<8x128xf32>
    %cst_117 = arith.constant 1.000000e+00 : f32
    %211 = vector.broadcast %cst_117 : f32 to vector<8x128xf32>
    %212 = arith.addf %210, %211 : vector<8x128xf32>
    %cst_118 = arith.constant 5.000000e-01 : f32
    %213 = vector.broadcast %cst_118 : f32 to vector<8x128xf32>
    %214 = arith.mulf %213, %212 : vector<8x128xf32>
    %215 = vector.extract_strided_slice %198 {offsets = [0, 256], sizes = [8, 128], strides = [1, 1]} : vector<8x512xf32> to vector<8x128xf32>
    %216 = math.tanh %215 : vector<8x128xf32>
    %217 = vector.extract_strided_slice %198 {offsets = [0, 384], sizes = [8, 128], strides = [1, 1]} : vector<8x512xf32> to vector<8x128xf32>
    %cst_119 = arith.constant 5.000000e-01 : f32
    %218 = vector.broadcast %cst_119 : f32 to vector<8x128xf32>
    %219 = arith.mulf %218, %217 : vector<8x128xf32>
    %220 = math.tanh %219 : vector<8x128xf32>
    %cst_120 = arith.constant 1.000000e+00 : f32
    %221 = vector.broadcast %cst_120 : f32 to vector<8x128xf32>
    %222 = arith.addf %220, %221 : vector<8x128xf32>
    %cst_121 = arith.constant 5.000000e-01 : f32
    %223 = vector.broadcast %cst_121 : f32 to vector<8x128xf32>
    %224 = arith.mulf %223, %222 : vector<8x128xf32>
    %c0_122 = arith.constant 0 : index
    %c0_123 = arith.constant 0 : index
    %225 = vector.load %arg7[%c0_122, %c0_123] : memref<8x128xf32, #tpu.memory_space<vmem>>, vector<8x128xf32>
    %226 = arith.mulf %214, %225 : vector<8x128xf32>
    %227 = arith.mulf %206, %216 : vector<8x128xf32>
    %228 = arith.addf %226, %227 : vector<8x128xf32>
    %229 = math.tanh %228 : vector<8x128xf32>
    %230 = arith.mulf %224, %229 : vector<8x128xf32>
    %c0_124 = arith.constant 0 : index
    %c0_125 = arith.constant 0 : index
    %231 = vector.load %arg7[%c0_124, %c0_125] : memref<8x128xf32, #tpu.memory_space<vmem>>, vector<8x128xf32>
    tpu.vector_store %arg7[%c0_124, %c0_125], %228 {strides = array<i32>} : memref<8x128xf32, #tpu.memory_space<vmem>>, vector<8x128xf32>,
    %c0_126 = arith.constant 0 : index
    %c0_127 = arith.constant 0 : index
    %232 = vector.load %arg6[%c0_126, %c0_127] : memref<8x128xf32, #tpu.memory_space<vmem>>, vector<8x128xf32>
    tpu.vector_store %arg6[%c0_126, %c0_127], %230 {strides = array<i32>} : memref<8x128xf32, #tpu.memory_space<vmem>>, vector<8x128xf32>,
    %233 = arith.index_cast %c4_i32 : i32 to index
    %c0_128 = arith.constant 0 : index
    %c0_129 = arith.constant 0 : index
    %234 = vector.load %arg4[%233, %c0_128, %c0_129] : memref<9x8x128xf32, #tpu.memory_space<vmem>>, vector<1x8x128xf32>
    %235 = vector.shape_cast %234 : vector<1x8x128xf32> to vector<8x128xf32>
    %236 = vector.shape_cast %230 : vector<8x128xf32> to vector<1x8x128xf32>
    tpu.vector_store %arg4[%233, %c0_128, %c0_129], %236 {strides = array<i32>} : memref<9x8x128xf32, #tpu.memory_space<vmem>>, vector<1x8x128xf32>,
    %c5_i32 = arith.constant 5 : i32
    %237 = arith.index_cast %c5_i32 : i32 to index
    %c0_130 = arith.constant 0 : index
    %c0_131 = arith.constant 0 : index
    %238 = vector.load %arg5[%237, %c0_130, %c0_131] : memref<9x8x512xf32, #tpu.memory_space<vmem>>, vector<1x8x512xf32>
    %239 = vector.shape_cast %238 : vector<1x8x512xf32> to vector<8x512xf32>
    %c0_132 = arith.constant 0 : index
    %c0_133 = arith.constant 0 : index
    %240 = vector.load %arg6[%c0_132, %c0_133] : memref<8x128xf32, #tpu.memory_space<vmem>>, vector<8x128xf32>
    %cst_134 = arith.constant dense<0.000000e+00> : vector<8x512xf32>
    %241 = tpu.matmul %240, %1, %cst_134 {dimension_numbers = #tpu.dot_dimension_numbers<[1], [0], [0], [1], [0, 0, 1, 1], [], []>} : vector<8x128xf32>, vector<128x512xf32>, vector<8x512xf32> -> vector<8x512xf32>
    %242 = arith.addf %239, %241 : vector<8x512xf32>
    %243 = vector.extract_strided_slice %242 {offsets = [0, 0], sizes = [8, 128], strides = [1, 1]} : vector<8x512xf32> to vector<8x128xf32>
    %cst_135 = arith.constant 5.000000e-01 : f32
    %244 = vector.broadcast %cst_135 : f32 to vector<8x128xf32>
    %245 = arith.mulf %244, %243 : vector<8x128xf32>
    %246 = math.tanh %245 : vector<8x128xf32>
    %cst_136 = arith.constant 1.000000e+00 : f32
    %247 = vector.broadcast %cst_136 : f32 to vector<8x128xf32>
    %248 = arith.addf %246, %247 : vector<8x128xf32>
    %cst_137 = arith.constant 5.000000e-01 : f32
    %249 = vector.broadcast %cst_137 : f32 to vector<8x128xf32>
    %250 = arith.mulf %249, %248 : vector<8x128xf32>
    %251 = vector.extract_strided_slice %242 {offsets = [0, 128], sizes = [8, 128], strides = [1, 1]} : vector<8x512xf32> to vector<8x128xf32>
    %cst_138 = arith.constant 5.000000e-01 : f32
    %252 = vector.broadcast %cst_138 : f32 to vector<8x128xf32>
    %253 = arith.mulf %252, %251 : vector<8x128xf32>
    %254 = math.tanh %253 : vector<8x128xf32>
    %cst_139 = arith.constant 1.000000e+00 : f32
    %255 = vector.broadcast %cst_139 : f32 to vector<8x128xf32>
    %256 = arith.addf %254, %255 : vector<8x128xf32>
    %cst_140 = arith.constant 5.000000e-01 : f32
    %257 = vector.broadcast %cst_140 : f32 to vector<8x128xf32>
    %258 = arith.mulf %257, %256 : vector<8x128xf32>
    %259 = vector.extract_strided_slice %242 {offsets = [0, 256], sizes = [8, 128], strides = [1, 1]} : vector<8x512xf32> to vector<8x128xf32>
    %260 = math.tanh %259 : vector<8x128xf32>
    %261 = vector.extract_strided_slice %242 {offsets = [0, 384], sizes = [8, 128], strides = [1, 1]} : vector<8x512xf32> to vector<8x128xf32>
    %cst_141 = arith.constant 5.000000e-01 : f32
    %262 = vector.broadcast %cst_141 : f32 to vector<8x128xf32>
    %263 = arith.mulf %262, %261 : vector<8x128xf32>
    %264 = math.tanh %263 : vector<8x128xf32>
    %cst_142 = arith.constant 1.000000e+00 : f32
    %265 = vector.broadcast %cst_142 : f32 to vector<8x128xf32>
    %266 = arith.addf %264, %265 : vector<8x128xf32>
    %cst_143 = arith.constant 5.000000e-01 : f32
    %267 = vector.broadcast %cst_143 : f32 to vector<8x128xf32>
    %268 = arith.mulf %267, %266 : vector<8x128xf32>
    %c0_144 = arith.constant 0 : index
    %c0_145 = arith.constant 0 : index
    %269 = vector.load %arg7[%c0_144, %c0_145] : memref<8x128xf32, #tpu.memory_space<vmem>>, vector<8x128xf32>
    %270 = arith.mulf %258, %269 : vector<8x128xf32>
    %271 = arith.mulf %250, %260 : vector<8x128xf32>
    %272 = arith.addf %270, %271 : vector<8x128xf32>
    %273 = math.tanh %272 : vector<8x128xf32>
    %274 = arith.mulf %268, %273 : vector<8x128xf32>
    %c0_146 = arith.constant 0 : index
    %c0_147 = arith.constant 0 : index
    %275 = vector.load %arg7[%c0_146, %c0_147] : memref<8x128xf32, #tpu.memory_space<vmem>>, vector<8x128xf32>
    tpu.vector_store %arg7[%c0_146, %c0_147], %272 {strides = array<i32>} : memref<8x128xf32, #tpu.memory_space<vmem>>, vector<8x128xf32>,
    %c0_148 = arith.constant 0 : index
    %c0_149 = arith.constant 0 : index
    %276 = vector.load %arg6[%c0_148, %c0_149] : memref<8x128xf32, #tpu.memory_space<vmem>>, vector<8x128xf32>
    tpu.vector_store %arg6[%c0_148, %c0_149], %274 {strides = array<i32>} : memref<8x128xf32, #tpu.memory_space<vmem>>, vector<8x128xf32>,
    %277 = arith.index_cast %c5_i32 : i32 to index
    %c0_150 = arith.constant 0 : index
    %c0_151 = arith.constant 0 : index
    %278 = vector.load %arg4[%277, %c0_150, %c0_151] : memref<9x8x128xf32, #tpu.memory_space<vmem>>, vector<1x8x128xf32>
    %279 = vector.shape_cast %278 : vector<1x8x128xf32> to vector<8x128xf32>
    %280 = vector.shape_cast %274 : vector<8x128xf32> to vector<1x8x128xf32>
    tpu.vector_store %arg4[%277, %c0_150, %c0_151], %280 {strides = array<i32>} : memref<9x8x128xf32, #tpu.memory_space<vmem>>, vector<1x8x128xf32>,
    %c6_i32 = arith.constant 6 : i32
    %281 = arith.index_cast %c6_i32 : i32 to index
    %c0_152 = arith.constant 0 : index
    %c0_153 = arith.constant 0 : index
    %282 = vector.load %arg5[%281, %c0_152, %c0_153] : memref<9x8x512xf32, #tpu.memory_space<vmem>>, vector<1x8x512xf32>
    %283 = vector.shape_cast %282 : vector<1x8x512xf32> to vector<8x512xf32>
    %c0_154 = arith.constant 0 : index
    %c0_155 = arith.constant 0 : index
    %284 = vector.load %arg6[%c0_154, %c0_155] : memref<8x128xf32, #tpu.memory_space<vmem>>, vector<8x128xf32>
    %cst_156 = arith.constant dense<0.000000e+00> : vector<8x512xf32>
    %285 = tpu.matmul %284, %1, %cst_156 {dimension_numbers = #tpu.dot_dimension_numbers<[1], [0], [0], [1], [0, 0, 1, 1], [], []>} : vector<8x128xf32>, vector<128x512xf32>, vector<8x512xf32> -> vector<8x512xf32>
    %286 = arith.addf %283, %285 : vector<8x512xf32>
    %287 = vector.extract_strided_slice %286 {offsets = [0, 0], sizes = [8, 128], strides = [1, 1]} : vector<8x512xf32> to vector<8x128xf32>
    %cst_157 = arith.constant 5.000000e-01 : f32
    %288 = vector.broadcast %cst_157 : f32 to vector<8x128xf32>
    %289 = arith.mulf %288, %287 : vector<8x128xf32>
    %290 = math.tanh %289 : vector<8x128xf32>
    %cst_158 = arith.constant 1.000000e+00 : f32
    %291 = vector.broadcast %cst_158 : f32 to vector<8x128xf32>
    %292 = arith.addf %290, %291 : vector<8x128xf32>
    %cst_159 = arith.constant 5.000000e-01 : f32
    %293 = vector.broadcast %cst_159 : f32 to vector<8x128xf32>
    %294 = arith.mulf %293, %292 : vector<8x128xf32>
    %295 = vector.extract_strided_slice %286 {offsets = [0, 128], sizes = [8, 128], strides = [1, 1]} : vector<8x512xf32> to vector<8x128xf32>
    %cst_160 = arith.constant 5.000000e-01 : f32
    %296 = vector.broadcast %cst_160 : f32 to vector<8x128xf32>
    %297 = arith.mulf %296, %295 : vector<8x128xf32>
    %298 = math.tanh %297 : vector<8x128xf32>
    %cst_161 = arith.constant 1.000000e+00 : f32
    %299 = vector.broadcast %cst_161 : f32 to vector<8x128xf32>
    %300 = arith.addf %298, %299 : vector<8x128xf32>
    %cst_162 = arith.constant 5.000000e-01 : f32
    %301 = vector.broadcast %cst_162 : f32 to vector<8x128xf32>
    %302 = arith.mulf %301, %300 : vector<8x128xf32>
    %303 = vector.extract_strided_slice %286 {offsets = [0, 256], sizes = [8, 128], strides = [1, 1]} : vector<8x512xf32> to vector<8x128xf32>
    %304 = math.tanh %303 : vector<8x128xf32>
    %305 = vector.extract_strided_slice %286 {offsets = [0, 384], sizes = [8, 128], strides = [1, 1]} : vector<8x512xf32> to vector<8x128xf32>
    %cst_163 = arith.constant 5.000000e-01 : f32
    %306 = vector.broadcast %cst_163 : f32 to vector<8x128xf32>
    %307 = arith.mulf %306, %305 : vector<8x128xf32>
    %308 = math.tanh %307 : vector<8x128xf32>
    %cst_164 = arith.constant 1.000000e+00 : f32
    %309 = vector.broadcast %cst_164 : f32 to vector<8x128xf32>
    %310 = arith.addf %308, %309 : vector<8x128xf32>
    %cst_165 = arith.constant 5.000000e-01 : f32
    %311 = vector.broadcast %cst_165 : f32 to vector<8x128xf32>
    %312 = arith.mulf %311, %310 : vector<8x128xf32>
    %c0_166 = arith.constant 0 : index
    %c0_167 = arith.constant 0 : index
    %313 = vector.load %arg7[%c0_166, %c0_167] : memref<8x128xf32, #tpu.memory_space<vmem>>, vector<8x128xf32>
    %314 = arith.mulf %302, %313 : vector<8x128xf32>
    %315 = arith.mulf %294, %304 : vector<8x128xf32>
    %316 = arith.addf %314, %315 : vector<8x128xf32>
    %317 = math.tanh %316 : vector<8x128xf32>
    %318 = arith.mulf %312, %317 : vector<8x128xf32>
    %c0_168 = arith.constant 0 : index
    %c0_169 = arith.constant 0 : index
    %319 = vector.load %arg7[%c0_168, %c0_169] : memref<8x128xf32, #tpu.memory_space<vmem>>, vector<8x128xf32>
    tpu.vector_store %arg7[%c0_168, %c0_169], %316 {strides = array<i32>} : memref<8x128xf32, #tpu.memory_space<vmem>>, vector<8x128xf32>,
    %c0_170 = arith.constant 0 : index
    %c0_171 = arith.constant 0 : index
    %320 = vector.load %arg6[%c0_170, %c0_171] : memref<8x128xf32, #tpu.memory_space<vmem>>, vector<8x128xf32>
    tpu.vector_store %arg6[%c0_170, %c0_171], %318 {strides = array<i32>} : memref<8x128xf32, #tpu.memory_space<vmem>>, vector<8x128xf32>,
    %321 = arith.index_cast %c6_i32 : i32 to index
    %c0_172 = arith.constant 0 : index
    %c0_173 = arith.constant 0 : index
    %322 = vector.load %arg4[%321, %c0_172, %c0_173] : memref<9x8x128xf32, #tpu.memory_space<vmem>>, vector<1x8x128xf32>
    %323 = vector.shape_cast %322 : vector<1x8x128xf32> to vector<8x128xf32>
    %324 = vector.shape_cast %318 : vector<8x128xf32> to vector<1x8x128xf32>
    tpu.vector_store %arg4[%321, %c0_172, %c0_173], %324 {strides = array<i32>} : memref<9x8x128xf32, #tpu.memory_space<vmem>>, vector<1x8x128xf32>,
    %c7_i32 = arith.constant 7 : i32
    %325 = arith.index_cast %c7_i32 : i32 to index
    %c0_174 = arith.constant 0 : index
    %c0_175 = arith.constant 0 : index
    %326 = vector.load %arg5[%325, %c0_174, %c0_175] : memref<9x8x512xf32, #tpu.memory_space<vmem>>, vector<1x8x512xf32>
    %327 = vector.shape_cast %326 : vector<1x8x512xf32> to vector<8x512xf32>
    %c0_176 = arith.constant 0 : index
    %c0_177 = arith.constant 0 : index
    %328 = vector.load %arg6[%c0_176, %c0_177] : memref<8x128xf32, #tpu.memory_space<vmem>>, vector<8x128xf32>
    %cst_178 = arith.constant dense<0.000000e+00> : vector<8x512xf32>
    %329 = tpu.matmul %328, %1, %cst_178 {dimension_numbers = #tpu.dot_dimension_numbers<[1], [0], [0], [1], [0, 0, 1, 1], [], []>} : vector<8x128xf32>, vector<128x512xf32>, vector<8x512xf32> -> vector<8x512xf32>
    %330 = arith.addf %327, %329 : vector<8x512xf32>
    %331 = vector.extract_strided_slice %330 {offsets = [0, 0], sizes = [8, 128], strides = [1, 1]} : vector<8x512xf32> to vector<8x128xf32>
    %cst_179 = arith.constant 5.000000e-01 : f32
    %332 = vector.broadcast %cst_179 : f32 to vector<8x128xf32>
    %333 = arith.mulf %332, %331 : vector<8x128xf32>
    %334 = math.tanh %333 : vector<8x128xf32>
    %cst_180 = arith.constant 1.000000e+00 : f32
    %335 = vector.broadcast %cst_180 : f32 to vector<8x128xf32>
    %336 = arith.addf %334, %335 : vector<8x128xf32>
    %cst_181 = arith.constant 5.000000e-01 : f32
    %337 = vector.broadcast %cst_181 : f32 to vector<8x128xf32>
    %338 = arith.mulf %337, %336 : vector<8x128xf32>
    %339 = vector.extract_strided_slice %330 {offsets = [0, 128], sizes = [8, 128], strides = [1, 1]} : vector<8x512xf32> to vector<8x128xf32>
    %cst_182 = arith.constant 5.000000e-01 : f32
    %340 = vector.broadcast %cst_182 : f32 to vector<8x128xf32>
    %341 = arith.mulf %340, %339 : vector<8x128xf32>
    %342 = math.tanh %341 : vector<8x128xf32>
    %cst_183 = arith.constant 1.000000e+00 : f32
    %343 = vector.broadcast %cst_183 : f32 to vector<8x128xf32>
    %344 = arith.addf %342, %343 : vector<8x128xf32>
    %cst_184 = arith.constant 5.000000e-01 : f32
    %345 = vector.broadcast %cst_184 : f32 to vector<8x128xf32>
    %346 = arith.mulf %345, %344 : vector<8x128xf32>
    %347 = vector.extract_strided_slice %330 {offsets = [0, 256], sizes = [8, 128], strides = [1, 1]} : vector<8x512xf32> to vector<8x128xf32>
    %348 = math.tanh %347 : vector<8x128xf32>
    %349 = vector.extract_strided_slice %330 {offsets = [0, 384], sizes = [8, 128], strides = [1, 1]} : vector<8x512xf32> to vector<8x128xf32>
    %cst_185 = arith.constant 5.000000e-01 : f32
    %350 = vector.broadcast %cst_185 : f32 to vector<8x128xf32>
    %351 = arith.mulf %350, %349 : vector<8x128xf32>
    %352 = math.tanh %351 : vector<8x128xf32>
    %cst_186 = arith.constant 1.000000e+00 : f32
    %353 = vector.broadcast %cst_186 : f32 to vector<8x128xf32>
    %354 = arith.addf %352, %353 : vector<8x128xf32>
    %cst_187 = arith.constant 5.000000e-01 : f32
    %355 = vector.broadcast %cst_187 : f32 to vector<8x128xf32>
    %356 = arith.mulf %355, %354 : vector<8x128xf32>
    %c0_188 = arith.constant 0 : index
    %c0_189 = arith.constant 0 : index
    %357 = vector.load %arg7[%c0_188, %c0_189] : memref<8x128xf32, #tpu.memory_space<vmem>>, vector<8x128xf32>
    %358 = arith.mulf %346, %357 : vector<8x128xf32>
    %359 = arith.mulf %338, %348 : vector<8x128xf32>
    %360 = arith.addf %358, %359 : vector<8x128xf32>
    %361 = math.tanh %360 : vector<8x128xf32>
    %362 = arith.mulf %356, %361 : vector<8x128xf32>
    %c0_190 = arith.constant 0 : index
    %c0_191 = arith.constant 0 : index
    %363 = vector.load %arg7[%c0_190, %c0_191] : memref<8x128xf32, #tpu.memory_space<vmem>>, vector<8x128xf32>
    tpu.vector_store %arg7[%c0_190, %c0_191], %360 {strides = array<i32>} : memref<8x128xf32, #tpu.memory_space<vmem>>, vector<8x128xf32>,
    %c0_192 = arith.constant 0 : index
    %c0_193 = arith.constant 0 : index
    %364 = vector.load %arg6[%c0_192, %c0_193] : memref<8x128xf32, #tpu.memory_space<vmem>>, vector<8x128xf32>
    tpu.vector_store %arg6[%c0_192, %c0_193], %362 {strides = array<i32>} : memref<8x128xf32, #tpu.memory_space<vmem>>, vector<8x128xf32>,
    %365 = arith.index_cast %c7_i32 : i32 to index
    %c0_194 = arith.constant 0 : index
    %c0_195 = arith.constant 0 : index
    %366 = vector.load %arg4[%365, %c0_194, %c0_195] : memref<9x8x128xf32, #tpu.memory_space<vmem>>, vector<1x8x128xf32>
    %367 = vector.shape_cast %366 : vector<1x8x128xf32> to vector<8x128xf32>
    %368 = vector.shape_cast %362 : vector<8x128xf32> to vector<1x8x128xf32>
    tpu.vector_store %arg4[%365, %c0_194, %c0_195], %368 {strides = array<i32>} : memref<9x8x128xf32, #tpu.memory_space<vmem>>, vector<1x8x128xf32>,
    %c8_i32 = arith.constant 8 : i32
    %369 = arith.index_cast %c8_i32 : i32 to index
    %c0_196 = arith.constant 0 : index
    %c0_197 = arith.constant 0 : index
    %370 = vector.load %arg5[%369, %c0_196, %c0_197] : memref<9x8x512xf32, #tpu.memory_space<vmem>>, vector<1x8x512xf32>
    %371 = vector.shape_cast %370 : vector<1x8x512xf32> to vector<8x512xf32>
    %c0_198 = arith.constant 0 : index
    %c0_199 = arith.constant 0 : index
    %372 = vector.load %arg6[%c0_198, %c0_199] : memref<8x128xf32, #tpu.memory_space<vmem>>, vector<8x128xf32>
    %cst_200 = arith.constant dense<0.000000e+00> : vector<8x512xf32>
    %373 = tpu.matmul %372, %1, %cst_200 {dimension_numbers = #tpu.dot_dimension_numbers<[1], [0], [0], [1], [0, 0, 1, 1], [], []>} : vector<8x128xf32>, vector<128x512xf32>, vector<8x512xf32> -> vector<8x512xf32>
    %374 = arith.addf %371, %373 : vector<8x512xf32>
    %375 = vector.extract_strided_slice %374 {offsets = [0, 0], sizes = [8, 128], strides = [1, 1]} : vector<8x512xf32> to vector<8x128xf32>
    %cst_201 = arith.constant 5.000000e-01 : f32
    %376 = vector.broadcast %cst_201 : f32 to vector<8x128xf32>
    %377 = arith.mulf %376, %375 : vector<8x128xf32>
    %378 = math.tanh %377 : vector<8x128xf32>
    %cst_202 = arith.constant 1.000000e+00 : f32
    %379 = vector.broadcast %cst_202 : f32 to vector<8x128xf32>
    %380 = arith.addf %378, %379 : vector<8x128xf32>
    %cst_203 = arith.constant 5.000000e-01 : f32
    %381 = vector.broadcast %cst_203 : f32 to vector<8x128xf32>
    %382 = arith.mulf %381, %380 : vector<8x128xf32>
    %383 = vector.extract_strided_slice %374 {offsets = [0, 128], sizes = [8, 128], strides = [1, 1]} : vector<8x512xf32> to vector<8x128xf32>
    %cst_204 = arith.constant 5.000000e-01 : f32
    %384 = vector.broadcast %cst_204 : f32 to vector<8x128xf32>
    %385 = arith.mulf %384, %383 : vector<8x128xf32>
    %386 = math.tanh %385 : vector<8x128xf32>
    %cst_205 = arith.constant 1.000000e+00 : f32
    %387 = vector.broadcast %cst_205 : f32 to vector<8x128xf32>
    %388 = arith.addf %386, %387 : vector<8x128xf32>
    %cst_206 = arith.constant 5.000000e-01 : f32
    %389 = vector.broadcast %cst_206 : f32 to vector<8x128xf32>
    %390 = arith.mulf %389, %388 : vector<8x128xf32>
    %391 = vector.extract_strided_slice %374 {offsets = [0, 256], sizes = [8, 128], strides = [1, 1]} : vector<8x512xf32> to vector<8x128xf32>
    %392 = math.tanh %391 : vector<8x128xf32>
    %393 = vector.extract_strided_slice %374 {offsets = [0, 384], sizes = [8, 128], strides = [1, 1]} : vector<8x512xf32> to vector<8x128xf32>
    %cst_207 = arith.constant 5.000000e-01 : f32
    %394 = vector.broadcast %cst_207 : f32 to vector<8x128xf32>
    %395 = arith.mulf %394, %393 : vector<8x128xf32>
    %396 = math.tanh %395 : vector<8x128xf32>
    %cst_208 = arith.constant 1.000000e+00 : f32
    %397 = vector.broadcast %cst_208 : f32 to vector<8x128xf32>
    %398 = arith.addf %396, %397 : vector<8x128xf32>
    %cst_209 = arith.constant 5.000000e-01 : f32
    %399 = vector.broadcast %cst_209 : f32 to vector<8x128xf32>
    %400 = arith.mulf %399, %398 : vector<8x128xf32>
    %c0_210 = arith.constant 0 : index
    %c0_211 = arith.constant 0 : index
    %401 = vector.load %arg7[%c0_210, %c0_211] : memref<8x128xf32, #tpu.memory_space<vmem>>, vector<8x128xf32>
    %402 = arith.mulf %390, %401 : vector<8x128xf32>
    %403 = arith.mulf %382, %392 : vector<8x128xf32>
    %404 = arith.addf %402, %403 : vector<8x128xf32>
    %405 = math.tanh %404 : vector<8x128xf32>
    %406 = arith.mulf %400, %405 : vector<8x128xf32>
    %c0_212 = arith.constant 0 : index
    %c0_213 = arith.constant 0 : index
    %407 = vector.load %arg7[%c0_212, %c0_213] : memref<8x128xf32, #tpu.memory_space<vmem>>, vector<8x128xf32>
    tpu.vector_store %arg7[%c0_212, %c0_213], %404 {strides = array<i32>} : memref<8x128xf32, #tpu.memory_space<vmem>>, vector<8x128xf32>,
    %c0_214 = arith.constant 0 : index
    %c0_215 = arith.constant 0 : index
    %408 = vector.load %arg6[%c0_214, %c0_215] : memref<8x128xf32, #tpu.memory_space<vmem>>, vector<8x128xf32>
    tpu.vector_store %arg6[%c0_214, %c0_215], %406 {strides = array<i32>} : memref<8x128xf32, #tpu.memory_space<vmem>>, vector<8x128xf32>,
    %409 = arith.index_cast %c8_i32 : i32 to index
    %c0_216 = arith.constant 0 : index
    %c0_217 = arith.constant 0 : index
    %410 = vector.load %arg4[%409, %c0_216, %c0_217] : memref<9x8x128xf32, #tpu.memory_space<vmem>>, vector<1x8x128xf32>
    %411 = vector.shape_cast %410 : vector<1x8x128xf32> to vector<8x128xf32>
    %412 = vector.shape_cast %406 : vector<8x128xf32> to vector<1x8x128xf32>
    tpu.vector_store %arg4[%409, %c0_216, %c0_217], %412 {strides = array<i32>} : memref<9x8x128xf32, #tpu.memory_space<vmem>>, vector<1x8x128xf32>,
    %c9_i32 = arith.constant 9 : i32
    %c1 = arith.constant 1 : index
    %c0_218 = arith.constant 0 : index
    %c0_219 = arith.constant 0 : index
    %413 = vector.load %arg2[%c1, %c0_218, %c0_219] : memref<2x128x512xf32, #tpu.memory_space<vmem>>, vector<1x128x512xf32>
    %414 = vector.shape_cast %413 : vector<1x128x512xf32> to vector<128x512xf32>
    %c0_220 = arith.constant 0 : index
    %c0_221 = arith.constant 0 : index
    %c0_222 = arith.constant 0 : index
    %415 = vector.load %arg4[%c0_220, %c0_221, %c0_222] : memref<9x8x128xf32, #tpu.memory_space<vmem>>, vector<9x8x128xf32>
    %416 = vector.shape_cast %415 : vector<9x8x128xf32> to vector<72x128xf32>
    %c1_223 = arith.constant 1 : index
    %c0_224 = arith.constant 0 : index
    %c0_225 = arith.constant 0 : index
    %417 = vector.load %arg1[%c1_223, %c0_224, %c0_225] : memref<2x128x512xf32, #tpu.memory_space<vmem>>, vector<1x128x512xf32>
    %418 = vector.shape_cast %417 : vector<1x128x512xf32> to vector<128x512xf32>
    %cst_226 = arith.constant dense<0.000000e+00> : vector<72x512xf32>
    %419 = tpu.matmul %416, %418, %cst_226 {dimension_numbers = #tpu.dot_dimension_numbers<[1], [0], [0], [1], [0, 0, 1, 1], [], []>} : vector<72x128xf32>, vector<128x512xf32>, vector<72x512xf32> -> vector<72x512xf32>
    %c1_227 = arith.constant 1 : index
    %c0_228 = arith.constant 0 : index
    %c0_229 = arith.constant 0 : index
    %420 = vector.load %arg3[%c1_227, %c0_228, %c0_229] : memref<2x1x512xf32, #tpu.memory_space<vmem>>, vector<1x1x512xf32>
    %421 = vector.shape_cast %420 : vector<1x1x512xf32> to vector<1x512xf32>
    %422 = vector.broadcast %421 : vector<1x512xf32> to vector<72x512xf32>
    %423 = arith.addf %419, %422 : vector<72x512xf32>
    %424 = vector.shape_cast %423 : vector<72x512xf32> to vector<9x8x512xf32>
    %c0_230 = arith.constant 0 : index
    %c0_231 = arith.constant 0 : index
    %c0_232 = arith.constant 0 : index
    %425 = vector.load %arg5[%c0_230, %c0_231, %c0_232] : memref<9x8x512xf32, #tpu.memory_space<vmem>>, vector<9x8x512xf32>
    tpu.vector_store %arg5[%c0_230, %c0_231, %c0_232], %424 {strides = array<i32>} : memref<9x8x512xf32, #tpu.memory_space<vmem>>, vector<9x8x512xf32>,
    %cst_233 = arith.constant 0.000000e+00 : f32
    %426 = vector.broadcast %cst_233 : f32 to vector<8x128xf32>
    %c0_234 = arith.constant 0 : index
    %c0_235 = arith.constant 0 : index
    %427 = vector.load %arg6[%c0_234, %c0_235] : memref<8x128xf32, #tpu.memory_space<vmem>>, vector<8x128xf32>
    tpu.vector_store %arg6[%c0_234, %c0_235], %426 {strides = array<i32>} : memref<8x128xf32, #tpu.memory_space<vmem>>, vector<8x128xf32>,
    %cst_236 = arith.constant 0.000000e+00 : f32
    %428 = vector.broadcast %cst_236 : f32 to vector<8x128xf32>
    %c0_237 = arith.constant 0 : index
    %c0_238 = arith.constant 0 : index
    %429 = vector.load %arg7[%c0_237, %c0_238] : memref<8x128xf32, #tpu.memory_space<vmem>>, vector<8x128xf32>
    tpu.vector_store %arg7[%c0_237, %c0_238], %428 {strides = array<i32>} : memref<8x128xf32, #tpu.memory_space<vmem>>, vector<8x128xf32>,
    %c0_i32_239 = arith.constant 0 : i32
    %430 = arith.index_cast %c0_i32_239 : i32 to index
    %c0_240 = arith.constant 0 : index
    %c0_241 = arith.constant 0 : index
    %431 = vector.load %arg5[%430, %c0_240, %c0_241] : memref<9x8x512xf32, #tpu.memory_space<vmem>>, vector<1x8x512xf32>
    %432 = vector.shape_cast %431 : vector<1x8x512xf32> to vector<8x512xf32>
    %c0_242 = arith.constant 0 : index
    %c0_243 = arith.constant 0 : index
    %433 = vector.load %arg6[%c0_242, %c0_243] : memref<8x128xf32, #tpu.memory_space<vmem>>, vector<8x128xf32>
    %cst_244 = arith.constant dense<0.000000e+00> : vector<8x512xf32>
    %434 = tpu.matmul %433, %414, %cst_244 {dimension_numbers = #tpu.dot_dimension_numbers<[1], [0], [0], [1], [0, 0, 1, 1], [], []>} : vector<8x128xf32>, vector<128x512xf32>, vector<8x512xf32> -> vector<8x512xf32>
    %435 = arith.addf %432, %434 : vector<8x512xf32>
    %436 = vector.extract_strided_slice %435 {offsets = [0, 0], sizes = [8, 128], strides = [1, 1]} : vector<8x512xf32> to vector<8x128xf32>
    %cst_245 = arith.constant 5.000000e-01 : f32
    %437 = vector.broadcast %cst_245 : f32 to vector<8x128xf32>
    %438 = arith.mulf %437, %436 : vector<8x128xf32>
    %439 = math.tanh %438 : vector<8x128xf32>
    %cst_246 = arith.constant 1.000000e+00 : f32
    %440 = vector.broadcast %cst_246 : f32 to vector<8x128xf32>
    %441 = arith.addf %439, %440 : vector<8x128xf32>
    %cst_247 = arith.constant 5.000000e-01 : f32
    %442 = vector.broadcast %cst_247 : f32 to vector<8x128xf32>
    %443 = arith.mulf %442, %441 : vector<8x128xf32>
    %444 = vector.extract_strided_slice %435 {offsets = [0, 128], sizes = [8, 128], strides = [1, 1]} : vector<8x512xf32> to vector<8x128xf32>
    %cst_248 = arith.constant 5.000000e-01 : f32
    %445 = vector.broadcast %cst_248 : f32 to vector<8x128xf32>
    %446 = arith.mulf %445, %444 : vector<8x128xf32>
    %447 = math.tanh %446 : vector<8x128xf32>
    %cst_249 = arith.constant 1.000000e+00 : f32
    %448 = vector.broadcast %cst_249 : f32 to vector<8x128xf32>
    %449 = arith.addf %447, %448 : vector<8x128xf32>
    %cst_250 = arith.constant 5.000000e-01 : f32
    %450 = vector.broadcast %cst_250 : f32 to vector<8x128xf32>
    %451 = arith.mulf %450, %449 : vector<8x128xf32>
    %452 = vector.extract_strided_slice %435 {offsets = [0, 256], sizes = [8, 128], strides = [1, 1]} : vector<8x512xf32> to vector<8x128xf32>
    %453 = math.tanh %452 : vector<8x128xf32>
    %454 = vector.extract_strided_slice %435 {offsets = [0, 384], sizes = [8, 128], strides = [1, 1]} : vector<8x512xf32> to vector<8x128xf32>
    %cst_251 = arith.constant 5.000000e-01 : f32
    %455 = vector.broadcast %cst_251 : f32 to vector<8x128xf32>
    %456 = arith.mulf %455, %454 : vector<8x128xf32>
    %457 = math.tanh %456 : vector<8x128xf32>
    %cst_252 = arith.constant 1.000000e+00 : f32
    %458 = vector.broadcast %cst_252 : f32 to vector<8x128xf32>
    %459 = arith.addf %457, %458 : vector<8x128xf32>
    %cst_253 = arith.constant 5.000000e-01 : f32
    %460 = vector.broadcast %cst_253 : f32 to vector<8x128xf32>
    %461 = arith.mulf %460, %459 : vector<8x128xf32>
    %c0_254 = arith.constant 0 : index
    %c0_255 = arith.constant 0 : index
    %462 = vector.load %arg7[%c0_254, %c0_255] : memref<8x128xf32, #tpu.memory_space<vmem>>, vector<8x128xf32>
    %463 = arith.mulf %451, %462 : vector<8x128xf32>
    %464 = arith.mulf %443, %453 : vector<8x128xf32>
    %465 = arith.addf %463, %464 : vector<8x128xf32>
    %466 = math.tanh %465 : vector<8x128xf32>
    %467 = arith.mulf %461, %466 : vector<8x128xf32>
    %c0_256 = arith.constant 0 : index
    %c0_257 = arith.constant 0 : index
    %468 = vector.load %arg7[%c0_256, %c0_257] : memref<8x128xf32, #tpu.memory_space<vmem>>, vector<8x128xf32>
    tpu.vector_store %arg7[%c0_256, %c0_257], %465 {strides = array<i32>} : memref<8x128xf32, #tpu.memory_space<vmem>>, vector<8x128xf32>,
    %c0_258 = arith.constant 0 : index
    %c0_259 = arith.constant 0 : index
    %469 = vector.load %arg6[%c0_258, %c0_259] : memref<8x128xf32, #tpu.memory_space<vmem>>, vector<8x128xf32>
    tpu.vector_store %arg6[%c0_258, %c0_259], %467 {strides = array<i32>} : memref<8x128xf32, #tpu.memory_space<vmem>>, vector<8x128xf32>,
    %470 = arith.index_cast %c0_i32_239 : i32 to index
    %c0_260 = arith.constant 0 : index
    %c0_261 = arith.constant 0 : index
    %471 = vector.load %arg4[%470, %c0_260, %c0_261] : memref<9x8x128xf32, #tpu.memory_space<vmem>>, vector<1x8x128xf32>
    %472 = vector.shape_cast %471 : vector<1x8x128xf32> to vector<8x128xf32>
    %473 = vector.shape_cast %467 : vector<8x128xf32> to vector<1x8x128xf32>
    tpu.vector_store %arg4[%470, %c0_260, %c0_261], %473 {strides = array<i32>} : memref<9x8x128xf32, #tpu.memory_space<vmem>>, vector<1x8x128xf32>,
    %c1_i32_262 = arith.constant 1 : i32
    %474 = arith.index_cast %c1_i32_262 : i32 to index
    %c0_263 = arith.constant 0 : index
    %c0_264 = arith.constant 0 : index
    %475 = vector.load %arg5[%474, %c0_263, %c0_264] : memref<9x8x512xf32, #tpu.memory_space<vmem>>, vector<1x8x512xf32>
    %476 = vector.shape_cast %475 : vector<1x8x512xf32> to vector<8x512xf32>
    %c0_265 = arith.constant 0 : index
    %c0_266 = arith.constant 0 : index
    %477 = vector.load %arg6[%c0_265, %c0_266] : memref<8x128xf32, #tpu.memory_space<vmem>>, vector<8x128xf32>
    %cst_267 = arith.constant dense<0.000000e+00> : vector<8x512xf32>
    %478 = tpu.matmul %477, %414, %cst_267 {dimension_numbers = #tpu.dot_dimension_numbers<[1], [0], [0], [1], [0, 0, 1, 1], [], []>} : vector<8x128xf32>, vector<128x512xf32>, vector<8x512xf32> -> vector<8x512xf32>
    %479 = arith.addf %476, %478 : vector<8x512xf32>
    %480 = vector.extract_strided_slice %479 {offsets = [0, 0], sizes = [8, 128], strides = [1, 1]} : vector<8x512xf32> to vector<8x128xf32>
    %cst_268 = arith.constant 5.000000e-01 : f32
    %481 = vector.broadcast %cst_268 : f32 to vector<8x128xf32>
    %482 = arith.mulf %481, %480 : vector<8x128xf32>
    %483 = math.tanh %482 : vector<8x128xf32>
    %cst_269 = arith.constant 1.000000e+00 : f32
    %484 = vector.broadcast %cst_269 : f32 to vector<8x128xf32>
    %485 = arith.addf %483, %484 : vector<8x128xf32>
    %cst_270 = arith.constant 5.000000e-01 : f32
    %486 = vector.broadcast %cst_270 : f32 to vector<8x128xf32>
    %487 = arith.mulf %486, %485 : vector<8x128xf32>
    %488 = vector.extract_strided_slice %479 {offsets = [0, 128], sizes = [8, 128], strides = [1, 1]} : vector<8x512xf32> to vector<8x128xf32>
    %cst_271 = arith.constant 5.000000e-01 : f32
    %489 = vector.broadcast %cst_271 : f32 to vector<8x128xf32>
    %490 = arith.mulf %489, %488 : vector<8x128xf32>
    %491 = math.tanh %490 : vector<8x128xf32>
    %cst_272 = arith.constant 1.000000e+00 : f32
    %492 = vector.broadcast %cst_272 : f32 to vector<8x128xf32>
    %493 = arith.addf %491, %492 : vector<8x128xf32>
    %cst_273 = arith.constant 5.000000e-01 : f32
    %494 = vector.broadcast %cst_273 : f32 to vector<8x128xf32>
    %495 = arith.mulf %494, %493 : vector<8x128xf32>
    %496 = vector.extract_strided_slice %479 {offsets = [0, 256], sizes = [8, 128], strides = [1, 1]} : vector<8x512xf32> to vector<8x128xf32>
    %497 = math.tanh %496 : vector<8x128xf32>
    %498 = vector.extract_strided_slice %479 {offsets = [0, 384], sizes = [8, 128], strides = [1, 1]} : vector<8x512xf32> to vector<8x128xf32>
    %cst_274 = arith.constant 5.000000e-01 : f32
    %499 = vector.broadcast %cst_274 : f32 to vector<8x128xf32>
    %500 = arith.mulf %499, %498 : vector<8x128xf32>
    %501 = math.tanh %500 : vector<8x128xf32>
    %cst_275 = arith.constant 1.000000e+00 : f32
    %502 = vector.broadcast %cst_275 : f32 to vector<8x128xf32>
    %503 = arith.addf %501, %502 : vector<8x128xf32>
    %cst_276 = arith.constant 5.000000e-01 : f32
    %504 = vector.broadcast %cst_276 : f32 to vector<8x128xf32>
    %505 = arith.mulf %504, %503 : vector<8x128xf32>
    %c0_277 = arith.constant 0 : index
    %c0_278 = arith.constant 0 : index
    %506 = vector.load %arg7[%c0_277, %c0_278] : memref<8x128xf32, #tpu.memory_space<vmem>>, vector<8x128xf32>
    %507 = arith.mulf %495, %506 : vector<8x128xf32>
    %508 = arith.mulf %487, %497 : vector<8x128xf32>
    %509 = arith.addf %507, %508 : vector<8x128xf32>
    %510 = math.tanh %509 : vector<8x128xf32>
    %511 = arith.mulf %505, %510 : vector<8x128xf32>
    %c0_279 = arith.constant 0 : index
    %c0_280 = arith.constant 0 : index
    %512 = vector.load %arg7[%c0_279, %c0_280] : memref<8x128xf32, #tpu.memory_space<vmem>>, vector<8x128xf32>
    tpu.vector_store %arg7[%c0_279, %c0_280], %509 {strides = array<i32>} : memref<8x128xf32, #tpu.memory_space<vmem>>, vector<8x128xf32>,
    %c0_281 = arith.constant 0 : index
    %c0_282 = arith.constant 0 : index
    %513 = vector.load %arg6[%c0_281, %c0_282] : memref<8x128xf32, #tpu.memory_space<vmem>>, vector<8x128xf32>
    tpu.vector_store %arg6[%c0_281, %c0_282], %511 {strides = array<i32>} : memref<8x128xf32, #tpu.memory_space<vmem>>, vector<8x128xf32>,
    %514 = arith.index_cast %c1_i32_262 : i32 to index
    %c0_283 = arith.constant 0 : index
    %c0_284 = arith.constant 0 : index
    %515 = vector.load %arg4[%514, %c0_283, %c0_284] : memref<9x8x128xf32, #tpu.memory_space<vmem>>, vector<1x8x128xf32>
    %516 = vector.shape_cast %515 : vector<1x8x128xf32> to vector<8x128xf32>
    %517 = vector.shape_cast %511 : vector<8x128xf32> to vector<1x8x128xf32>
    tpu.vector_store %arg4[%514, %c0_283, %c0_284], %517 {strides = array<i32>} : memref<9x8x128xf32, #tpu.memory_space<vmem>>, vector<1x8x128xf32>,
    %c2_i32_285 = arith.constant 2 : i32
    %518 = arith.index_cast %c2_i32_285 : i32 to index
    %c0_286 = arith.constant 0 : index
    %c0_287 = arith.constant 0 : index
    %519 = vector.load %arg5[%518, %c0_286, %c0_287] : memref<9x8x512xf32, #tpu.memory_space<vmem>>, vector<1x8x512xf32>
    %520 = vector.shape_cast %519 : vector<1x8x512xf32> to vector<8x512xf32>
    %c0_288 = arith.constant 0 : index
    %c0_289 = arith.constant 0 : index
    %521 = vector.load %arg6[%c0_288, %c0_289] : memref<8x128xf32, #tpu.memory_space<vmem>>, vector<8x128xf32>
    %cst_290 = arith.constant dense<0.000000e+00> : vector<8x512xf32>
    %522 = tpu.matmul %521, %414, %cst_290 {dimension_numbers = #tpu.dot_dimension_numbers<[1], [0], [0], [1], [0, 0, 1, 1], [], []>} : vector<8x128xf32>, vector<128x512xf32>, vector<8x512xf32> -> vector<8x512xf32>
    %523 = arith.addf %520, %522 : vector<8x512xf32>
    %524 = vector.extract_strided_slice %523 {offsets = [0, 0], sizes = [8, 128], strides = [1, 1]} : vector<8x512xf32> to vector<8x128xf32>
    %cst_291 = arith.constant 5.000000e-01 : f32
    %525 = vector.broadcast %cst_291 : f32 to vector<8x128xf32>
    %526 = arith.mulf %525, %524 : vector<8x128xf32>
    %527 = math.tanh %526 : vector<8x128xf32>
    %cst_292 = arith.constant 1.000000e+00 : f32
    %528 = vector.broadcast %cst_292 : f32 to vector<8x128xf32>
    %529 = arith.addf %527, %528 : vector<8x128xf32>
    %cst_293 = arith.constant 5.000000e-01 : f32
    %530 = vector.broadcast %cst_293 : f32 to vector<8x128xf32>
    %531 = arith.mulf %530, %529 : vector<8x128xf32>
    %532 = vector.extract_strided_slice %523 {offsets = [0, 128], sizes = [8, 128], strides = [1, 1]} : vector<8x512xf32> to vector<8x128xf32>
    %cst_294 = arith.constant 5.000000e-01 : f32
    %533 = vector.broadcast %cst_294 : f32 to vector<8x128xf32>
    %534 = arith.mulf %533, %532 : vector<8x128xf32>
    %535 = math.tanh %534 : vector<8x128xf32>
    %cst_295 = arith.constant 1.000000e+00 : f32
    %536 = vector.broadcast %cst_295 : f32 to vector<8x128xf32>
    %537 = arith.addf %535, %536 : vector<8x128xf32>
    %cst_296 = arith.constant 5.000000e-01 : f32
    %538 = vector.broadcast %cst_296 : f32 to vector<8x128xf32>
    %539 = arith.mulf %538, %537 : vector<8x128xf32>
    %540 = vector.extract_strided_slice %523 {offsets = [0, 256], sizes = [8, 128], strides = [1, 1]} : vector<8x512xf32> to vector<8x128xf32>
    %541 = math.tanh %540 : vector<8x128xf32>
    %542 = vector.extract_strided_slice %523 {offsets = [0, 384], sizes = [8, 128], strides = [1, 1]} : vector<8x512xf32> to vector<8x128xf32>
    %cst_297 = arith.constant 5.000000e-01 : f32
    %543 = vector.broadcast %cst_297 : f32 to vector<8x128xf32>
    %544 = arith.mulf %543, %542 : vector<8x128xf32>
    %545 = math.tanh %544 : vector<8x128xf32>
    %cst_298 = arith.constant 1.000000e+00 : f32
    %546 = vector.broadcast %cst_298 : f32 to vector<8x128xf32>
    %547 = arith.addf %545, %546 : vector<8x128xf32>
    %cst_299 = arith.constant 5.000000e-01 : f32
    %548 = vector.broadcast %cst_299 : f32 to vector<8x128xf32>
    %549 = arith.mulf %548, %547 : vector<8x128xf32>
    %c0_300 = arith.constant 0 : index
    %c0_301 = arith.constant 0 : index
    %550 = vector.load %arg7[%c0_300, %c0_301] : memref<8x128xf32, #tpu.memory_space<vmem>>, vector<8x128xf32>
    %551 = arith.mulf %539, %550 : vector<8x128xf32>
    %552 = arith.mulf %531, %541 : vector<8x128xf32>
    %553 = arith.addf %551, %552 : vector<8x128xf32>
    %554 = math.tanh %553 : vector<8x128xf32>
    %555 = arith.mulf %549, %554 : vector<8x128xf32>
    %c0_302 = arith.constant 0 : index
    %c0_303 = arith.constant 0 : index
    %556 = vector.load %arg7[%c0_302, %c0_303] : memref<8x128xf32, #tpu.memory_space<vmem>>, vector<8x128xf32>
    tpu.vector_store %arg7[%c0_302, %c0_303], %553 {strides = array<i32>} : memref<8x128xf32, #tpu.memory_space<vmem>>, vector<8x128xf32>,
    %c0_304 = arith.constant 0 : index
    %c0_305 = arith.constant 0 : index
    %557 = vector.load %arg6[%c0_304, %c0_305] : memref<8x128xf32, #tpu.memory_space<vmem>>, vector<8x128xf32>
    tpu.vector_store %arg6[%c0_304, %c0_305], %555 {strides = array<i32>} : memref<8x128xf32, #tpu.memory_space<vmem>>, vector<8x128xf32>,
    %558 = arith.index_cast %c2_i32_285 : i32 to index
    %c0_306 = arith.constant 0 : index
    %c0_307 = arith.constant 0 : index
    %559 = vector.load %arg4[%558, %c0_306, %c0_307] : memref<9x8x128xf32, #tpu.memory_space<vmem>>, vector<1x8x128xf32>
    %560 = vector.shape_cast %559 : vector<1x8x128xf32> to vector<8x128xf32>
    %561 = vector.shape_cast %555 : vector<8x128xf32> to vector<1x8x128xf32>
    tpu.vector_store %arg4[%558, %c0_306, %c0_307], %561 {strides = array<i32>} : memref<9x8x128xf32, #tpu.memory_space<vmem>>, vector<1x8x128xf32>,
    %c3_i32_308 = arith.constant 3 : i32
    %562 = arith.index_cast %c3_i32_308 : i32 to index
    %c0_309 = arith.constant 0 : index
    %c0_310 = arith.constant 0 : index
    %563 = vector.load %arg5[%562, %c0_309, %c0_310] : memref<9x8x512xf32, #tpu.memory_space<vmem>>, vector<1x8x512xf32>
    %564 = vector.shape_cast %563 : vector<1x8x512xf32> to vector<8x512xf32>
    %c0_311 = arith.constant 0 : index
    %c0_312 = arith.constant 0 : index
    %565 = vector.load %arg6[%c0_311, %c0_312] : memref<8x128xf32, #tpu.memory_space<vmem>>, vector<8x128xf32>
    %cst_313 = arith.constant dense<0.000000e+00> : vector<8x512xf32>
    %566 = tpu.matmul %565, %414, %cst_313 {dimension_numbers = #tpu.dot_dimension_numbers<[1], [0], [0], [1], [0, 0, 1, 1], [], []>} : vector<8x128xf32>, vector<128x512xf32>, vector<8x512xf32> -> vector<8x512xf32>
    %567 = arith.addf %564, %566 : vector<8x512xf32>
    %568 = vector.extract_strided_slice %567 {offsets = [0, 0], sizes = [8, 128], strides = [1, 1]} : vector<8x512xf32> to vector<8x128xf32>
    %cst_314 = arith.constant 5.000000e-01 : f32
    %569 = vector.broadcast %cst_314 : f32 to vector<8x128xf32>
    %570 = arith.mulf %569, %568 : vector<8x128xf32>
    %571 = math.tanh %570 : vector<8x128xf32>
    %cst_315 = arith.constant 1.000000e+00 : f32
    %572 = vector.broadcast %cst_315 : f32 to vector<8x128xf32>
    %573 = arith.addf %571, %572 : vector<8x128xf32>
    %cst_316 = arith.constant 5.000000e-01 : f32
    %574 = vector.broadcast %cst_316 : f32 to vector<8x128xf32>
    %575 = arith.mulf %574, %573 : vector<8x128xf32>
    %576 = vector.extract_strided_slice %567 {offsets = [0, 128], sizes = [8, 128], strides = [1, 1]} : vector<8x512xf32> to vector<8x128xf32>
    %cst_317 = arith.constant 5.000000e-01 : f32
    %577 = vector.broadcast %cst_317 : f32 to vector<8x128xf32>
    %578 = arith.mulf %577, %576 : vector<8x128xf32>
    %579 = math.tanh %578 : vector<8x128xf32>
    %cst_318 = arith.constant 1.000000e+00 : f32
    %580 = vector.broadcast %cst_318 : f32 to vector<8x128xf32>
    %581 = arith.addf %579, %580 : vector<8x128xf32>
    %cst_319 = arith.constant 5.000000e-01 : f32
    %582 = vector.broadcast %cst_319 : f32 to vector<8x128xf32>
    %583 = arith.mulf %582, %581 : vector<8x128xf32>
    %584 = vector.extract_strided_slice %567 {offsets = [0, 256], sizes = [8, 128], strides = [1, 1]} : vector<8x512xf32> to vector<8x128xf32>
    %585 = math.tanh %584 : vector<8x128xf32>
    %586 = vector.extract_strided_slice %567 {offsets = [0, 384], sizes = [8, 128], strides = [1, 1]} : vector<8x512xf32> to vector<8x128xf32>
    %cst_320 = arith.constant 5.000000e-01 : f32
    %587 = vector.broadcast %cst_320 : f32 to vector<8x128xf32>
    %588 = arith.mulf %587, %586 : vector<8x128xf32>
    %589 = math.tanh %588 : vector<8x128xf32>
    %cst_321 = arith.constant 1.000000e+00 : f32
    %590 = vector.broadcast %cst_321 : f32 to vector<8x128xf32>
    %591 = arith.addf %589, %590 : vector<8x128xf32>
    %cst_322 = arith.constant 5.000000e-01 : f32
    %592 = vector.broadcast %cst_322 : f32 to vector<8x128xf32>
    %593 = arith.mulf %592, %591 : vector<8x128xf32>
    %c0_323 = arith.constant 0 : index
    %c0_324 = arith.constant 0 : index
    %594 = vector.load %arg7[%c0_323, %c0_324] : memref<8x128xf32, #tpu.memory_space<vmem>>, vector<8x128xf32>
    %595 = arith.mulf %583, %594 : vector<8x128xf32>
    %596 = arith.mulf %575, %585 : vector<8x128xf32>
    %597 = arith.addf %595, %596 : vector<8x128xf32>
    %598 = math.tanh %597 : vector<8x128xf32>
    %599 = arith.mulf %593, %598 : vector<8x128xf32>
    %c0_325 = arith.constant 0 : index
    %c0_326 = arith.constant 0 : index
    %600 = vector.load %arg7[%c0_325, %c0_326] : memref<8x128xf32, #tpu.memory_space<vmem>>, vector<8x128xf32>
    tpu.vector_store %arg7[%c0_325, %c0_326], %597 {strides = array<i32>} : memref<8x128xf32, #tpu.memory_space<vmem>>, vector<8x128xf32>,
    %c0_327 = arith.constant 0 : index
    %c0_328 = arith.constant 0 : index
    %601 = vector.load %arg6[%c0_327, %c0_328] : memref<8x128xf32, #tpu.memory_space<vmem>>, vector<8x128xf32>
    tpu.vector_store %arg6[%c0_327, %c0_328], %599 {strides = array<i32>} : memref<8x128xf32, #tpu.memory_space<vmem>>, vector<8x128xf32>,
    %602 = arith.index_cast %c3_i32_308 : i32 to index
    %c0_329 = arith.constant 0 : index
    %c0_330 = arith.constant 0 : index
    %603 = vector.load %arg4[%602, %c0_329, %c0_330] : memref<9x8x128xf32, #tpu.memory_space<vmem>>, vector<1x8x128xf32>
    %604 = vector.shape_cast %603 : vector<1x8x128xf32> to vector<8x128xf32>
    %605 = vector.shape_cast %599 : vector<8x128xf32> to vector<1x8x128xf32>
    tpu.vector_store %arg4[%602, %c0_329, %c0_330], %605 {strides = array<i32>} : memref<9x8x128xf32, #tpu.memory_space<vmem>>, vector<1x8x128xf32>,
    %c4_i32_331 = arith.constant 4 : i32
    %606 = arith.index_cast %c4_i32_331 : i32 to index
    %c0_332 = arith.constant 0 : index
    %c0_333 = arith.constant 0 : index
    %607 = vector.load %arg5[%606, %c0_332, %c0_333] : memref<9x8x512xf32, #tpu.memory_space<vmem>>, vector<1x8x512xf32>
    %608 = vector.shape_cast %607 : vector<1x8x512xf32> to vector<8x512xf32>
    %c0_334 = arith.constant 0 : index
    %c0_335 = arith.constant 0 : index
    %609 = vector.load %arg6[%c0_334, %c0_335] : memref<8x128xf32, #tpu.memory_space<vmem>>, vector<8x128xf32>
    %cst_336 = arith.constant dense<0.000000e+00> : vector<8x512xf32>
    %610 = tpu.matmul %609, %414, %cst_336 {dimension_numbers = #tpu.dot_dimension_numbers<[1], [0], [0], [1], [0, 0, 1, 1], [], []>} : vector<8x128xf32>, vector<128x512xf32>, vector<8x512xf32> -> vector<8x512xf32>
    %611 = arith.addf %608, %610 : vector<8x512xf32>
    %612 = vector.extract_strided_slice %611 {offsets = [0, 0], sizes = [8, 128], strides = [1, 1]} : vector<8x512xf32> to vector<8x128xf32>
    %cst_337 = arith.constant 5.000000e-01 : f32
    %613 = vector.broadcast %cst_337 : f32 to vector<8x128xf32>
    %614 = arith.mulf %613, %612 : vector<8x128xf32>
    %615 = math.tanh %614 : vector<8x128xf32>
    %cst_338 = arith.constant 1.000000e+00 : f32
    %616 = vector.broadcast %cst_338 : f32 to vector<8x128xf32>
    %617 = arith.addf %615, %616 : vector<8x128xf32>
    %cst_339 = arith.constant 5.000000e-01 : f32
    %618 = vector.broadcast %cst_339 : f32 to vector<8x128xf32>
    %619 = arith.mulf %618, %617 : vector<8x128xf32>
    %620 = vector.extract_strided_slice %611 {offsets = [0, 128], sizes = [8, 128], strides = [1, 1]} : vector<8x512xf32> to vector<8x128xf32>
    %cst_340 = arith.constant 5.000000e-01 : f32
    %621 = vector.broadcast %cst_340 : f32 to vector<8x128xf32>
    %622 = arith.mulf %621, %620 : vector<8x128xf32>
    %623 = math.tanh %622 : vector<8x128xf32>
    %cst_341 = arith.constant 1.000000e+00 : f32
    %624 = vector.broadcast %cst_341 : f32 to vector<8x128xf32>
    %625 = arith.addf %623, %624 : vector<8x128xf32>
    %cst_342 = arith.constant 5.000000e-01 : f32
    %626 = vector.broadcast %cst_342 : f32 to vector<8x128xf32>
    %627 = arith.mulf %626, %625 : vector<8x128xf32>
    %628 = vector.extract_strided_slice %611 {offsets = [0, 256], sizes = [8, 128], strides = [1, 1]} : vector<8x512xf32> to vector<8x128xf32>
    %629 = math.tanh %628 : vector<8x128xf32>
    %630 = vector.extract_strided_slice %611 {offsets = [0, 384], sizes = [8, 128], strides = [1, 1]} : vector<8x512xf32> to vector<8x128xf32>
    %cst_343 = arith.constant 5.000000e-01 : f32
    %631 = vector.broadcast %cst_343 : f32 to vector<8x128xf32>
    %632 = arith.mulf %631, %630 : vector<8x128xf32>
    %633 = math.tanh %632 : vector<8x128xf32>
    %cst_344 = arith.constant 1.000000e+00 : f32
    %634 = vector.broadcast %cst_344 : f32 to vector<8x128xf32>
    %635 = arith.addf %633, %634 : vector<8x128xf32>
    %cst_345 = arith.constant 5.000000e-01 : f32
    %636 = vector.broadcast %cst_345 : f32 to vector<8x128xf32>
    %637 = arith.mulf %636, %635 : vector<8x128xf32>
    %c0_346 = arith.constant 0 : index
    %c0_347 = arith.constant 0 : index
    %638 = vector.load %arg7[%c0_346, %c0_347] : memref<8x128xf32, #tpu.memory_space<vmem>>, vector<8x128xf32>
    %639 = arith.mulf %627, %638 : vector<8x128xf32>
    %640 = arith.mulf %619, %629 : vector<8x128xf32>
    %641 = arith.addf %639, %640 : vector<8x128xf32>
    %642 = math.tanh %641 : vector<8x128xf32>
    %643 = arith.mulf %637, %642 : vector<8x128xf32>
    %c0_348 = arith.constant 0 : index
    %c0_349 = arith.constant 0 : index
    %644 = vector.load %arg7[%c0_348, %c0_349] : memref<8x128xf32, #tpu.memory_space<vmem>>, vector<8x128xf32>
    tpu.vector_store %arg7[%c0_348, %c0_349], %641 {strides = array<i32>} : memref<8x128xf32, #tpu.memory_space<vmem>>, vector<8x128xf32>,
    %c0_350 = arith.constant 0 : index
    %c0_351 = arith.constant 0 : index
    %645 = vector.load %arg6[%c0_350, %c0_351] : memref<8x128xf32, #tpu.memory_space<vmem>>, vector<8x128xf32>
    tpu.vector_store %arg6[%c0_350, %c0_351], %643 {strides = array<i32>} : memref<8x128xf32, #tpu.memory_space<vmem>>, vector<8x128xf32>,
    %646 = arith.index_cast %c4_i32_331 : i32 to index
    %c0_352 = arith.constant 0 : index
    %c0_353 = arith.constant 0 : index
    %647 = vector.load %arg4[%646, %c0_352, %c0_353] : memref<9x8x128xf32, #tpu.memory_space<vmem>>, vector<1x8x128xf32>
    %648 = vector.shape_cast %647 : vector<1x8x128xf32> to vector<8x128xf32>
    %649 = vector.shape_cast %643 : vector<8x128xf32> to vector<1x8x128xf32>
    tpu.vector_store %arg4[%646, %c0_352, %c0_353], %649 {strides = array<i32>} : memref<9x8x128xf32, #tpu.memory_space<vmem>>, vector<1x8x128xf32>,
    %c5_i32_354 = arith.constant 5 : i32
    %650 = arith.index_cast %c5_i32_354 : i32 to index
    %c0_355 = arith.constant 0 : index
    %c0_356 = arith.constant 0 : index
    %651 = vector.load %arg5[%650, %c0_355, %c0_356] : memref<9x8x512xf32, #tpu.memory_space<vmem>>, vector<1x8x512xf32>
    %652 = vector.shape_cast %651 : vector<1x8x512xf32> to vector<8x512xf32>
    %c0_357 = arith.constant 0 : index
    %c0_358 = arith.constant 0 : index
    %653 = vector.load %arg6[%c0_357, %c0_358] : memref<8x128xf32, #tpu.memory_space<vmem>>, vector<8x128xf32>
    %cst_359 = arith.constant dense<0.000000e+00> : vector<8x512xf32>
    %654 = tpu.matmul %653, %414, %cst_359 {dimension_numbers = #tpu.dot_dimension_numbers<[1], [0], [0], [1], [0, 0, 1, 1], [], []>} : vector<8x128xf32>, vector<128x512xf32>, vector<8x512xf32> -> vector<8x512xf32>
    %655 = arith.addf %652, %654 : vector<8x512xf32>
    %656 = vector.extract_strided_slice %655 {offsets = [0, 0], sizes = [8, 128], strides = [1, 1]} : vector<8x512xf32> to vector<8x128xf32>
    %cst_360 = arith.constant 5.000000e-01 : f32
    %657 = vector.broadcast %cst_360 : f32 to vector<8x128xf32>
    %658 = arith.mulf %657, %656 : vector<8x128xf32>
    %659 = math.tanh %658 : vector<8x128xf32>
    %cst_361 = arith.constant 1.000000e+00 : f32
    %660 = vector.broadcast %cst_361 : f32 to vector<8x128xf32>
    %661 = arith.addf %659, %660 : vector<8x128xf32>
    %cst_362 = arith.constant 5.000000e-01 : f32
    %662 = vector.broadcast %cst_362 : f32 to vector<8x128xf32>
    %663 = arith.mulf %662, %661 : vector<8x128xf32>
    %664 = vector.extract_strided_slice %655 {offsets = [0, 128], sizes = [8, 128], strides = [1, 1]} : vector<8x512xf32> to vector<8x128xf32>
    %cst_363 = arith.constant 5.000000e-01 : f32
    %665 = vector.broadcast %cst_363 : f32 to vector<8x128xf32>
    %666 = arith.mulf %665, %664 : vector<8x128xf32>
    %667 = math.tanh %666 : vector<8x128xf32>
    %cst_364 = arith.constant 1.000000e+00 : f32
    %668 = vector.broadcast %cst_364 : f32 to vector<8x128xf32>
    %669 = arith.addf %667, %668 : vector<8x128xf32>
    %cst_365 = arith.constant 5.000000e-01 : f32
    %670 = vector.broadcast %cst_365 : f32 to vector<8x128xf32>
    %671 = arith.mulf %670, %669 : vector<8x128xf32>
    %672 = vector.extract_strided_slice %655 {offsets = [0, 256], sizes = [8, 128], strides = [1, 1]} : vector<8x512xf32> to vector<8x128xf32>
    %673 = math.tanh %672 : vector<8x128xf32>
    %674 = vector.extract_strided_slice %655 {offsets = [0, 384], sizes = [8, 128], strides = [1, 1]} : vector<8x512xf32> to vector<8x128xf32>
    %cst_366 = arith.constant 5.000000e-01 : f32
    %675 = vector.broadcast %cst_366 : f32 to vector<8x128xf32>
    %676 = arith.mulf %675, %674 : vector<8x128xf32>
    %677 = math.tanh %676 : vector<8x128xf32>
    %cst_367 = arith.constant 1.000000e+00 : f32
    %678 = vector.broadcast %cst_367 : f32 to vector<8x128xf32>
    %679 = arith.addf %677, %678 : vector<8x128xf32>
    %cst_368 = arith.constant 5.000000e-01 : f32
    %680 = vector.broadcast %cst_368 : f32 to vector<8x128xf32>
    %681 = arith.mulf %680, %679 : vector<8x128xf32>
    %c0_369 = arith.constant 0 : index
    %c0_370 = arith.constant 0 : index
    %682 = vector.load %arg7[%c0_369, %c0_370] : memref<8x128xf32, #tpu.memory_space<vmem>>, vector<8x128xf32>
    %683 = arith.mulf %671, %682 : vector<8x128xf32>
    %684 = arith.mulf %663, %673 : vector<8x128xf32>
    %685 = arith.addf %683, %684 : vector<8x128xf32>
    %686 = math.tanh %685 : vector<8x128xf32>
    %687 = arith.mulf %681, %686 : vector<8x128xf32>
    %c0_371 = arith.constant 0 : index
    %c0_372 = arith.constant 0 : index
    %688 = vector.load %arg7[%c0_371, %c0_372] : memref<8x128xf32, #tpu.memory_space<vmem>>, vector<8x128xf32>
    tpu.vector_store %arg7[%c0_371, %c0_372], %685 {strides = array<i32>} : memref<8x128xf32, #tpu.memory_space<vmem>>, vector<8x128xf32>,
    %c0_373 = arith.constant 0 : index
    %c0_374 = arith.constant 0 : index
    %689 = vector.load %arg6[%c0_373, %c0_374] : memref<8x128xf32, #tpu.memory_space<vmem>>, vector<8x128xf32>
    tpu.vector_store %arg6[%c0_373, %c0_374], %687 {strides = array<i32>} : memref<8x128xf32, #tpu.memory_space<vmem>>, vector<8x128xf32>,
    %690 = arith.index_cast %c5_i32_354 : i32 to index
    %c0_375 = arith.constant 0 : index
    %c0_376 = arith.constant 0 : index
    %691 = vector.load %arg4[%690, %c0_375, %c0_376] : memref<9x8x128xf32, #tpu.memory_space<vmem>>, vector<1x8x128xf32>
    %692 = vector.shape_cast %691 : vector<1x8x128xf32> to vector<8x128xf32>
    %693 = vector.shape_cast %687 : vector<8x128xf32> to vector<1x8x128xf32>
    tpu.vector_store %arg4[%690, %c0_375, %c0_376], %693 {strides = array<i32>} : memref<9x8x128xf32, #tpu.memory_space<vmem>>, vector<1x8x128xf32>,
    %c6_i32_377 = arith.constant 6 : i32
    %694 = arith.index_cast %c6_i32_377 : i32 to index
    %c0_378 = arith.constant 0 : index
    %c0_379 = arith.constant 0 : index
    %695 = vector.load %arg5[%694, %c0_378, %c0_379] : memref<9x8x512xf32, #tpu.memory_space<vmem>>, vector<1x8x512xf32>
    %696 = vector.shape_cast %695 : vector<1x8x512xf32> to vector<8x512xf32>
    %c0_380 = arith.constant 0 : index
    %c0_381 = arith.constant 0 : index
    %697 = vector.load %arg6[%c0_380, %c0_381] : memref<8x128xf32, #tpu.memory_space<vmem>>, vector<8x128xf32>
    %cst_382 = arith.constant dense<0.000000e+00> : vector<8x512xf32>
    %698 = tpu.matmul %697, %414, %cst_382 {dimension_numbers = #tpu.dot_dimension_numbers<[1], [0], [0], [1], [0, 0, 1, 1], [], []>} : vector<8x128xf32>, vector<128x512xf32>, vector<8x512xf32> -> vector<8x512xf32>
    %699 = arith.addf %696, %698 : vector<8x512xf32>
    %700 = vector.extract_strided_slice %699 {offsets = [0, 0], sizes = [8, 128], strides = [1, 1]} : vector<8x512xf32> to vector<8x128xf32>
    %cst_383 = arith.constant 5.000000e-01 : f32
    %701 = vector.broadcast %cst_383 : f32 to vector<8x128xf32>
    %702 = arith.mulf %701, %700 : vector<8x128xf32>
    %703 = math.tanh %702 : vector<8x128xf32>
    %cst_384 = arith.constant 1.000000e+00 : f32
    %704 = vector.broadcast %cst_384 : f32 to vector<8x128xf32>
    %705 = arith.addf %703, %704 : vector<8x128xf32>
    %cst_385 = arith.constant 5.000000e-01 : f32
    %706 = vector.broadcast %cst_385 : f32 to vector<8x128xf32>
    %707 = arith.mulf %706, %705 : vector<8x128xf32>
    %708 = vector.extract_strided_slice %699 {offsets = [0, 128], sizes = [8, 128], strides = [1, 1]} : vector<8x512xf32> to vector<8x128xf32>
    %cst_386 = arith.constant 5.000000e-01 : f32
    %709 = vector.broadcast %cst_386 : f32 to vector<8x128xf32>
    %710 = arith.mulf %709, %708 : vector<8x128xf32>
    %711 = math.tanh %710 : vector<8x128xf32>
    %cst_387 = arith.constant 1.000000e+00 : f32
    %712 = vector.broadcast %cst_387 : f32 to vector<8x128xf32>
    %713 = arith.addf %711, %712 : vector<8x128xf32>
    %cst_388 = arith.constant 5.000000e-01 : f32
    %714 = vector.broadcast %cst_388 : f32 to vector<8x128xf32>
    %715 = arith.mulf %714, %713 : vector<8x128xf32>
    %716 = vector.extract_strided_slice %699 {offsets = [0, 256], sizes = [8, 128], strides = [1, 1]} : vector<8x512xf32> to vector<8x128xf32>
    %717 = math.tanh %716 : vector<8x128xf32>
    %718 = vector.extract_strided_slice %699 {offsets = [0, 384], sizes = [8, 128], strides = [1, 1]} : vector<8x512xf32> to vector<8x128xf32>
    %cst_389 = arith.constant 5.000000e-01 : f32
    %719 = vector.broadcast %cst_389 : f32 to vector<8x128xf32>
    %720 = arith.mulf %719, %718 : vector<8x128xf32>
    %721 = math.tanh %720 : vector<8x128xf32>
    %cst_390 = arith.constant 1.000000e+00 : f32
    %722 = vector.broadcast %cst_390 : f32 to vector<8x128xf32>
    %723 = arith.addf %721, %722 : vector<8x128xf32>
    %cst_391 = arith.constant 5.000000e-01 : f32
    %724 = vector.broadcast %cst_391 : f32 to vector<8x128xf32>
    %725 = arith.mulf %724, %723 : vector<8x128xf32>
    %c0_392 = arith.constant 0 : index
    %c0_393 = arith.constant 0 : index
    %726 = vector.load %arg7[%c0_392, %c0_393] : memref<8x128xf32, #tpu.memory_space<vmem>>, vector<8x128xf32>
    %727 = arith.mulf %715, %726 : vector<8x128xf32>
    %728 = arith.mulf %707, %717 : vector<8x128xf32>
    %729 = arith.addf %727, %728 : vector<8x128xf32>
    %730 = math.tanh %729 : vector<8x128xf32>
    %731 = arith.mulf %725, %730 : vector<8x128xf32>
    %c0_394 = arith.constant 0 : index
    %c0_395 = arith.constant 0 : index
    %732 = vector.load %arg7[%c0_394, %c0_395] : memref<8x128xf32, #tpu.memory_space<vmem>>, vector<8x128xf32>
    tpu.vector_store %arg7[%c0_394, %c0_395], %729 {strides = array<i32>} : memref<8x128xf32, #tpu.memory_space<vmem>>, vector<8x128xf32>,
    %c0_396 = arith.constant 0 : index
    %c0_397 = arith.constant 0 : index
    %733 = vector.load %arg6[%c0_396, %c0_397] : memref<8x128xf32, #tpu.memory_space<vmem>>, vector<8x128xf32>
    tpu.vector_store %arg6[%c0_396, %c0_397], %731 {strides = array<i32>} : memref<8x128xf32, #tpu.memory_space<vmem>>, vector<8x128xf32>,
    %734 = arith.index_cast %c6_i32_377 : i32 to index
    %c0_398 = arith.constant 0 : index
    %c0_399 = arith.constant 0 : index
    %735 = vector.load %arg4[%734, %c0_398, %c0_399] : memref<9x8x128xf32, #tpu.memory_space<vmem>>, vector<1x8x128xf32>
    %736 = vector.shape_cast %735 : vector<1x8x128xf32> to vector<8x128xf32>
    %737 = vector.shape_cast %731 : vector<8x128xf32> to vector<1x8x128xf32>
    tpu.vector_store %arg4[%734, %c0_398, %c0_399], %737 {strides = array<i32>} : memref<9x8x128xf32, #tpu.memory_space<vmem>>, vector<1x8x128xf32>,
    %c7_i32_400 = arith.constant 7 : i32
    %738 = arith.index_cast %c7_i32_400 : i32 to index
    %c0_401 = arith.constant 0 : index
    %c0_402 = arith.constant 0 : index
    %739 = vector.load %arg5[%738, %c0_401, %c0_402] : memref<9x8x512xf32, #tpu.memory_space<vmem>>, vector<1x8x512xf32>
    %740 = vector.shape_cast %739 : vector<1x8x512xf32> to vector<8x512xf32>
    %c0_403 = arith.constant 0 : index
    %c0_404 = arith.constant 0 : index
    %741 = vector.load %arg6[%c0_403, %c0_404] : memref<8x128xf32, #tpu.memory_space<vmem>>, vector<8x128xf32>
    %cst_405 = arith.constant dense<0.000000e+00> : vector<8x512xf32>
    %742 = tpu.matmul %741, %414, %cst_405 {dimension_numbers = #tpu.dot_dimension_numbers<[1], [0], [0], [1], [0, 0, 1, 1], [], []>} : vector<8x128xf32>, vector<128x512xf32>, vector<8x512xf32> -> vector<8x512xf32>
    %743 = arith.addf %740, %742 : vector<8x512xf32>
    %744 = vector.extract_strided_slice %743 {offsets = [0, 0], sizes = [8, 128], strides = [1, 1]} : vector<8x512xf32> to vector<8x128xf32>
    %cst_406 = arith.constant 5.000000e-01 : f32
    %745 = vector.broadcast %cst_406 : f32 to vector<8x128xf32>
    %746 = arith.mulf %745, %744 : vector<8x128xf32>
    %747 = math.tanh %746 : vector<8x128xf32>
    %cst_407 = arith.constant 1.000000e+00 : f32
    %748 = vector.broadcast %cst_407 : f32 to vector<8x128xf32>
    %749 = arith.addf %747, %748 : vector<8x128xf32>
    %cst_408 = arith.constant 5.000000e-01 : f32
    %750 = vector.broadcast %cst_408 : f32 to vector<8x128xf32>
    %751 = arith.mulf %750, %749 : vector<8x128xf32>
    %752 = vector.extract_strided_slice %743 {offsets = [0, 128], sizes = [8, 128], strides = [1, 1]} : vector<8x512xf32> to vector<8x128xf32>
    %cst_409 = arith.constant 5.000000e-01 : f32
    %753 = vector.broadcast %cst_409 : f32 to vector<8x128xf32>
    %754 = arith.mulf %753, %752 : vector<8x128xf32>
    %755 = math.tanh %754 : vector<8x128xf32>
    %cst_410 = arith.constant 1.000000e+00 : f32
    %756 = vector.broadcast %cst_410 : f32 to vector<8x128xf32>
    %757 = arith.addf %755, %756 : vector<8x128xf32>
    %cst_411 = arith.constant 5.000000e-01 : f32
    %758 = vector.broadcast %cst_411 : f32 to vector<8x128xf32>
    %759 = arith.mulf %758, %757 : vector<8x128xf32>
    %760 = vector.extract_strided_slice %743 {offsets = [0, 256], sizes = [8, 128], strides = [1, 1]} : vector<8x512xf32> to vector<8x128xf32>
    %761 = math.tanh %760 : vector<8x128xf32>
    %762 = vector.extract_strided_slice %743 {offsets = [0, 384], sizes = [8, 128], strides = [1, 1]} : vector<8x512xf32> to vector<8x128xf32>
    %cst_412 = arith.constant 5.000000e-01 : f32
    %763 = vector.broadcast %cst_412 : f32 to vector<8x128xf32>
    %764 = arith.mulf %763, %762 : vector<8x128xf32>
    %765 = math.tanh %764 : vector<8x128xf32>
    %cst_413 = arith.constant 1.000000e+00 : f32
    %766 = vector.broadcast %cst_413 : f32 to vector<8x128xf32>
    %767 = arith.addf %765, %766 : vector<8x128xf32>
    %cst_414 = arith.constant 5.000000e-01 : f32
    %768 = vector.broadcast %cst_414 : f32 to vector<8x128xf32>
    %769 = arith.mulf %768, %767 : vector<8x128xf32>
    %c0_415 = arith.constant 0 : index
    %c0_416 = arith.constant 0 : index
    %770 = vector.load %arg7[%c0_415, %c0_416] : memref<8x128xf32, #tpu.memory_space<vmem>>, vector<8x128xf32>
    %771 = arith.mulf %759, %770 : vector<8x128xf32>
    %772 = arith.mulf %751, %761 : vector<8x128xf32>
    %773 = arith.addf %771, %772 : vector<8x128xf32>
    %774 = math.tanh %773 : vector<8x128xf32>
    %775 = arith.mulf %769, %774 : vector<8x128xf32>
    %c0_417 = arith.constant 0 : index
    %c0_418 = arith.constant 0 : index
    %776 = vector.load %arg7[%c0_417, %c0_418] : memref<8x128xf32, #tpu.memory_space<vmem>>, vector<8x128xf32>
    tpu.vector_store %arg7[%c0_417, %c0_418], %773 {strides = array<i32>} : memref<8x128xf32, #tpu.memory_space<vmem>>, vector<8x128xf32>,
    %c0_419 = arith.constant 0 : index
    %c0_420 = arith.constant 0 : index
    %777 = vector.load %arg6[%c0_419, %c0_420] : memref<8x128xf32, #tpu.memory_space<vmem>>, vector<8x128xf32>
    tpu.vector_store %arg6[%c0_419, %c0_420], %775 {strides = array<i32>} : memref<8x128xf32, #tpu.memory_space<vmem>>, vector<8x128xf32>,
    %778 = arith.index_cast %c7_i32_400 : i32 to index
    %c0_421 = arith.constant 0 : index
    %c0_422 = arith.constant 0 : index
    %779 = vector.load %arg4[%778, %c0_421, %c0_422] : memref<9x8x128xf32, #tpu.memory_space<vmem>>, vector<1x8x128xf32>
    %780 = vector.shape_cast %779 : vector<1x8x128xf32> to vector<8x128xf32>
    %781 = vector.shape_cast %775 : vector<8x128xf32> to vector<1x8x128xf32>
    tpu.vector_store %arg4[%778, %c0_421, %c0_422], %781 {strides = array<i32>} : memref<9x8x128xf32, #tpu.memory_space<vmem>>, vector<1x8x128xf32>,
    %c8_i32_423 = arith.constant 8 : i32
    %782 = arith.index_cast %c8_i32_423 : i32 to index
    %c0_424 = arith.constant 0 : index
    %c0_425 = arith.constant 0 : index
    %783 = vector.load %arg5[%782, %c0_424, %c0_425] : memref<9x8x512xf32, #tpu.memory_space<vmem>>, vector<1x8x512xf32>
    %784 = vector.shape_cast %783 : vector<1x8x512xf32> to vector<8x512xf32>
    %c0_426 = arith.constant 0 : index
    %c0_427 = arith.constant 0 : index
    %785 = vector.load %arg6[%c0_426, %c0_427] : memref<8x128xf32, #tpu.memory_space<vmem>>, vector<8x128xf32>
    %cst_428 = arith.constant dense<0.000000e+00> : vector<8x512xf32>
    %786 = tpu.matmul %785, %414, %cst_428 {dimension_numbers = #tpu.dot_dimension_numbers<[1], [0], [0], [1], [0, 0, 1, 1], [], []>} : vector<8x128xf32>, vector<128x512xf32>, vector<8x512xf32> -> vector<8x512xf32>
    %787 = arith.addf %784, %786 : vector<8x512xf32>
    %788 = vector.extract_strided_slice %787 {offsets = [0, 0], sizes = [8, 128], strides = [1, 1]} : vector<8x512xf32> to vector<8x128xf32>
    %cst_429 = arith.constant 5.000000e-01 : f32
    %789 = vector.broadcast %cst_429 : f32 to vector<8x128xf32>
    %790 = arith.mulf %789, %788 : vector<8x128xf32>
    %791 = math.tanh %790 : vector<8x128xf32>
    %cst_430 = arith.constant 1.000000e+00 : f32
    %792 = vector.broadcast %cst_430 : f32 to vector<8x128xf32>
    %793 = arith.addf %791, %792 : vector<8x128xf32>
    %cst_431 = arith.constant 5.000000e-01 : f32
    %794 = vector.broadcast %cst_431 : f32 to vector<8x128xf32>
    %795 = arith.mulf %794, %793 : vector<8x128xf32>
    %796 = vector.extract_strided_slice %787 {offsets = [0, 128], sizes = [8, 128], strides = [1, 1]} : vector<8x512xf32> to vector<8x128xf32>
    %cst_432 = arith.constant 5.000000e-01 : f32
    %797 = vector.broadcast %cst_432 : f32 to vector<8x128xf32>
    %798 = arith.mulf %797, %796 : vector<8x128xf32>
    %799 = math.tanh %798 : vector<8x128xf32>
    %cst_433 = arith.constant 1.000000e+00 : f32
    %800 = vector.broadcast %cst_433 : f32 to vector<8x128xf32>
    %801 = arith.addf %799, %800 : vector<8x128xf32>
    %cst_434 = arith.constant 5.000000e-01 : f32
    %802 = vector.broadcast %cst_434 : f32 to vector<8x128xf32>
    %803 = arith.mulf %802, %801 : vector<8x128xf32>
    %804 = vector.extract_strided_slice %787 {offsets = [0, 256], sizes = [8, 128], strides = [1, 1]} : vector<8x512xf32> to vector<8x128xf32>
    %805 = math.tanh %804 : vector<8x128xf32>
    %806 = vector.extract_strided_slice %787 {offsets = [0, 384], sizes = [8, 128], strides = [1, 1]} : vector<8x512xf32> to vector<8x128xf32>
    %cst_435 = arith.constant 5.000000e-01 : f32
    %807 = vector.broadcast %cst_435 : f32 to vector<8x128xf32>
    %808 = arith.mulf %807, %806 : vector<8x128xf32>
    %809 = math.tanh %808 : vector<8x128xf32>
    %cst_436 = arith.constant 1.000000e+00 : f32
    %810 = vector.broadcast %cst_436 : f32 to vector<8x128xf32>
    %811 = arith.addf %809, %810 : vector<8x128xf32>
    %cst_437 = arith.constant 5.000000e-01 : f32
    %812 = vector.broadcast %cst_437 : f32 to vector<8x128xf32>
    %813 = arith.mulf %812, %811 : vector<8x128xf32>
    %c0_438 = arith.constant 0 : index
    %c0_439 = arith.constant 0 : index
    %814 = vector.load %arg7[%c0_438, %c0_439] : memref<8x128xf32, #tpu.memory_space<vmem>>, vector<8x128xf32>
    %815 = arith.mulf %803, %814 : vector<8x128xf32>
    %816 = arith.mulf %795, %805 : vector<8x128xf32>
    %817 = arith.addf %815, %816 : vector<8x128xf32>
    %818 = math.tanh %817 : vector<8x128xf32>
    %819 = arith.mulf %813, %818 : vector<8x128xf32>
    %c0_440 = arith.constant 0 : index
    %c0_441 = arith.constant 0 : index
    %820 = vector.load %arg7[%c0_440, %c0_441] : memref<8x128xf32, #tpu.memory_space<vmem>>, vector<8x128xf32>
    tpu.vector_store %arg7[%c0_440, %c0_441], %817 {strides = array<i32>} : memref<8x128xf32, #tpu.memory_space<vmem>>, vector<8x128xf32>,
    %c0_442 = arith.constant 0 : index
    %c0_443 = arith.constant 0 : index
    %821 = vector.load %arg6[%c0_442, %c0_443] : memref<8x128xf32, #tpu.memory_space<vmem>>, vector<8x128xf32>
    tpu.vector_store %arg6[%c0_442, %c0_443], %819 {strides = array<i32>} : memref<8x128xf32, #tpu.memory_space<vmem>>, vector<8x128xf32>,
    %822 = arith.index_cast %c8_i32_423 : i32 to index
    %c0_444 = arith.constant 0 : index
    %c0_445 = arith.constant 0 : index
    %823 = vector.load %arg4[%822, %c0_444, %c0_445] : memref<9x8x128xf32, #tpu.memory_space<vmem>>, vector<1x8x128xf32>
    %824 = vector.shape_cast %823 : vector<1x8x128xf32> to vector<8x128xf32>
    %825 = vector.shape_cast %819 : vector<8x128xf32> to vector<1x8x128xf32>
    tpu.vector_store %arg4[%822, %c0_444, %c0_445], %825 {strides = array<i32>} : memref<9x8x128xf32, #tpu.memory_space<vmem>>, vector<1x8x128xf32>,
    %c9_i32_446 = arith.constant 9 : i32
    return
  }
}

</mosaic_0001>

<llo_original>
// kernel: tpu_custom_call.1
$region0: #{tpu_custom_call.1}
  #allocation0 [shape = 'u32[]', space=smem, size = 0x4, offset = 0x4, fixed_abs, tag = 'smem constant byte address 0x4 - core index']
  #allocation1 [shape = 'u32[72,128]{1,0:T(1,128)}', space=vmem, size = 0x9000, scoped, tag = 'internal scratch']
  #allocation2 [shape = 'f32[9,8,512]{2,1,0:T(8,128)}', space=vmem, size = 0x24000, scoped, tag = 'scratch operand']
  #allocation3 [shape = 'f32[8,128]{1,0:T(8,128)}', space=vmem, size = 0x1000, scoped, tag = 'scratch operand']
  #allocation4 [shape = 'f32[8,128]{1,0:T(8,128)}', space=vmem, size = 0x1000, scoped, tag = 'scratch operand']
  %s0 = inlined_call_operand.hbm [shape: f32[9,8,128], index: 0, kind: input, shape index: {}]
  %s1 = inlined_call_operand.hbm [shape: f32[2,128,512], index: 1, kind: input, shape index: {}]
  %s2 = inlined_call_operand.hbm [shape: f32[2,128,512], index: 2, kind: input, shape index: {}]
  %s3 = inlined_call_operand.hbm [shape: f32[2,1,512], index: 3, kind: input, shape index: {}]
  %s4 = inlined_call_operand.hbm [shape: f32[9,8,128], index: 4, kind: output, shape index: {}]
  %s5 = sld [smem:[#allocation0]]
  $region42: #{tpu_custom_call.1} parent=0
    _
  %s7 = ssub.s32 1, %s5
  %s8 = scalar_select 0, %s7, %s5
  $region1: #{tpu_custom_call.1} parent=0
    #allocation5 [shape = 'u8[36864]{0}', space=vmem, size = 0x9000, scoped, tag = 'input window, operand 0, single buffered']
    #allocation6 [shape = 's32[1]{0}', space=sflag, size = 0x4, scoped, tag = 'scoped memory for tpu_custom_call.1']
    #allocation7 [shape = 's32[1]{0}', space=sflag, size = 0x4, scoped, tag = 'scoped memory for tpu_custom_call.1']
    #allocation8 [shape = 'u8[524288]{0}', space=vmem, size = 0x80000, scoped, tag = 'input window, operand 1, single buffered']
    #allocation9 [shape = 's32[1]{0}', space=sflag, size = 0x4, scoped, tag = 'scoped memory for tpu_custom_call.1']
    #allocation10 [shape = 'u8[524288]{0}', space=vmem, size = 0x80000, scoped, tag = 'input window, operand 2, single buffered']
    #allocation11 [shape = 'u8[4096]{0}', space=vmem, size = 0x1000, scoped, tag = 'input window, operand 3, single buffered']
    #allocation12 [shape = 's32[1]{0}', space=sflag, size = 0x4, scoped, tag = 'scoped memory for tpu_custom_call.1']
    #allocation13 [shape = 'u8[36864]{0}', space=vmem, size = 0x9000, scoped, tag = 'output window, operand 0, single buffered']
    %9 = vsyncpa [#allocation6], 0
    %10 = vsyncpa [#allocation9], 0
    %11 = vsyncpa [#allocation12], 0
    %12 = vsyncpa [#allocation7], 0
    // Predicated region
    $region2: #{tpu_custom_call.1} parent=1 // pred_check
      _
    $region3: #{tpu_custom_call.1} parent=1 // pred_check_branch
      %14 = sbr.rel (0) target = $region5
    $region4: #{tpu_custom_call.1} parent=1 // pred_region
      %16 = vsyncadd [#allocation6], 0
      %s17 = sshll.u32 %s0, 4
      %s18 = int_to_ptr.hbm [resolvable:$true] %s17
      %s19 = sshll.u32 [#allocation5], 4
      %s20 = int_to_ptr.vmem [resolvable:$true] %s19
      %25 = dma.hbm_to_vmem [thread:$0]  %s18, 1152, %s20, [#allocation6], 128, 128, 8
    $region5: #{tpu_custom_call.1} parent=1 // pred_fallthru
      _
    // Predicated region
    $region6: #{tpu_custom_call.1} parent=1 // pred_check
      _
    $region7: #{tpu_custom_call.1} parent=1 // pred_check_branch
      %27 = sbr.rel (0) target = $region9
    $region8: #{tpu_custom_call.1} parent=1 // pred_region
      %29 = vsyncadd [#allocation9], 0
      %s30 = sshll.u32 %s1, 4
      %s31 = int_to_ptr.hbm [resolvable:$true] %s30
      %s32 = sshll.u32 [#allocation8], 4
      %s33 = int_to_ptr.vmem [resolvable:$true] %s32
      %38 = dma.hbm_to_vmem [thread:$0]  %s31, 16384, %s33, [#allocation9], 512, 512, 32
    $region9: #{tpu_custom_call.1} parent=1 // pred_fallthru
      _
    // Predicated region
    $region10: #{tpu_custom_call.1} parent=1 // pred_check
      _
    $region11: #{tpu_custom_call.1} parent=1 // pred_check_branch
      %40 = sbr.rel (0) target = $region13
    $region12: #{tpu_custom_call.1} parent=1 // pred_region
      %42 = vsyncadd [#allocation9], 0
      %s43 = sshll.u32 %s2, 4
      %s44 = int_to_ptr.hbm [resolvable:$true] %s43
      %s45 = sshll.u32 [#allocation10], 4
      %s46 = int_to_ptr.vmem [resolvable:$true] %s45
      %51 = dma.hbm_to_vmem [thread:$0]  %s44, 16384, %s46, [#allocation9], 512, 512, 32
    $region13: #{tpu_custom_call.1} parent=1 // pred_fallthru
      _
    // Predicated region
    $region14: #{tpu_custom_call.1} parent=1 // pred_check
      _
    $region15: #{tpu_custom_call.1} parent=1 // pred_check_branch
      %53 = sbr.rel (0) target = $region17
    $region16: #{tpu_custom_call.1} parent=1 // pred_region
      %55 = vsyncadd [#allocation12], 0
      %s56 = sshll.u32 %s3, 4
      %s57 = int_to_ptr.hbm [resolvable:$true] %s56
      %s58 = sshll.u32 [#allocation11], 4
      %s59 = int_to_ptr.vmem [resolvable:$true] %s58
      %64 = dma.hbm_to_vmem [thread:$0]  %s57, 128, %s59, [#allocation12], 64, 64, 4
    $region17: #{tpu_custom_call.1} parent=1 // pred_fallthru
      _
    // Predicated region
    $region18: #{tpu_custom_call.1} parent=1 // pred_check
      _
    $region19: #{tpu_custom_call.1} parent=1 // pred_check_branch
      %66 = sbr.rel (0) target = $region21
    $region20: #{tpu_custom_call.1} parent=1 // pred_region
      %68 = dma.done [#allocation6], 1152
    $region21: #{tpu_custom_call.1} parent=1 // pred_fallthru
      _
    // Predicated region
    $region22: #{tpu_custom_call.1} parent=1 // pred_check
      _
    $region23: #{tpu_custom_call.1} parent=1 // pred_check_branch
      %70 = sbr.rel (0) target = $region25
    $region24: #{tpu_custom_call.1} parent=1 // pred_region
      %72 = dma.done [#allocation9], 16384
    $region25: #{tpu_custom_call.1} parent=1 // pred_fallthru
      _
    // Predicated region
    $region26: #{tpu_custom_call.1} parent=1 // pred_check
      _
    $region27: #{tpu_custom_call.1} parent=1 // pred_check_branch
      %74 = sbr.rel (0) target = $region29
    $region28: #{tpu_custom_call.1} parent=1 // pred_region
      %76 = dma.done [#allocation9], 16384
    $region29: #{tpu_custom_call.1} parent=1 // pred_fallthru
      _
    // Predicated region
    $region30: #{tpu_custom_call.1} parent=1 // pred_check
      _
    $region31: #{tpu_custom_call.1} parent=1 // pred_check_branch
      %78 = sbr.rel (0) target = $region33
    $region32: #{tpu_custom_call.1} parent=1 // pred_region
      %80 = dma.done [#allocation12], 128
    $region33: #{tpu_custom_call.1} parent=1 // pred_fallthru
      _
    %v81 = vld [vmem:[#allocation10] sm:$0xff]
    %v82 = vld [vmem:[#allocation10 + $0x8] sm:$0xff]
    %v83 = vld [vmem:[#allocation10 + $0x10] sm:$0xff]
    %v84 = vld [vmem:[#allocation10 + $0x18] sm:$0xff]
    %v85 = vld [vmem:[#allocation10 + $0x20] sm:$0xff]
    %v86 = vld [vmem:[#allocation10 + $0x28] sm:$0xff]
    %v87 = vld [vmem:[#allocation10 + $0x30] sm:$0xff]
    %v88 = vld [vmem:[#allocation10 + $0x38] sm:$0xff]
    %v89 = vld [vmem:[#allocation10 + $0x40] sm:$0xff]
    %v90 = vld [vmem:[#allocation10 + $0x48] sm:$0xff]
    %v91 = vld [vmem:[#allocation10 + $0x50] sm:$0xff]
    %v92 = vld [vmem:[#allocation10 + $0x58] sm:$0xff]
    %v93 = vld [vmem:[#allocation10 + $0x60] sm:$0xff]
    %v94 = vld [vmem:[#allocation10 + $0x68] sm:$0xff]
    %v95 = vld [vmem:[#allocation10 + $0x70] sm:$0xff]
    %v96 = vld [vmem:[#allocation10 + $0x78] sm:$0xff]
    %v97 = vld [vmem:[#allocation10 + $0x80] sm:$0xff]
    %v98 = vld [vmem:[#allocation10 + $0x88] sm:$0xff]
    %v99 = vld [vmem:[#allocation10 + $0x90] sm:$0xff]
    %v100 = vld [vmem:[#allocation10 + $0x98] sm:$0xff]
    %v101 = vld [vmem:[#allocation10 + $0xa0] sm:$0xff]
    %v102 = vld [vmem:[#allocation10 + $0xa8] sm:$0xff]
    %v103 = vld [vmem:[#allocation10 + $0xb0] sm:$0xff]
    %v104 = vld [vmem:[#allocation10 + $0xb8] sm:$0xff]
    %v105 = vld [vmem:[#allocation10 + $0xc0] sm:$0xff]
    %v106 = vld [vmem:[#allocation10 + $0xc8] sm:$0xff]
    %v107 = vld [vmem:[#allocation10 + $0xd0] sm:$0xff]
    %v108 = vld [vmem:[#allocation10 + $0xd8] sm:$0xff]
    %v109 = vld [vmem:[#allocation10 + $0xe0] sm:$0xff]
    %v110 = vld [vmem:[#allocation10 + $0xe8] sm:$0xff]
    %v111 = vld [vmem:[#allocation10 + $0xf0] sm:$0xff]
    %v112 = vld [vmem:[#allocation10 + $0xf8] sm:$0xff]
    %v113 = vld [vmem:[#allocation10 + $0x100] sm:$0xff]
    %v114 = vld [vmem:[#allocation10 + $0x108] sm:$0xff]
    %v115 = vld [vmem:[#allocation10 + $0x110] sm:$0xff]
    %v116 = vld [vmem:[#allocation10 + $0x118] sm:$0xff]
    %v117 = vld [vmem:[#allocation10 + $0x120] sm:$0xff]
    %v118 = vld [vmem:[#allocation10 + $0x128] sm:$0xff]
    %v119 = vld [vmem:[#allocation10 + $0x130] sm:$0xff]
    %v120 = vld [vmem:[#allocation10 + $0x138] sm:$0xff]
    %v121 = vld [vmem:[#allocation10 + $0x140] sm:$0xff]
    %v122 = vld [vmem:[#allocation10 + $0x148] sm:$0xff]
    %v123 = vld [vmem:[#allocation10 + $0x150] sm:$0xff]
    %v124 = vld [vmem:[#allocation10 + $0x158] sm:$0xff]
    %v125 = vld [vmem:[#allocation10 + $0x160] sm:$0xff]
    %v126 = vld [vmem:[#allocation10 + $0x168] sm:$0xff]
    %v127 = vld [vmem:[#allocation10 + $0x170] sm:$0xff]
    %v128 = vld [vmem:[#allocation10 + $0x178] sm:$0xff]
    %v129 = vld [vmem:[#allocation10 + $0x180] sm:$0xff]
    %v130 = vld [vmem:[#allocation10 + $0x188] sm:$0xff]
    %v131 = vld [vmem:[#allocation10 + $0x190] sm:$0xff]
    %v132 = vld [vmem:[#allocation10 + $0x198] sm:$0xff]
    %v133 = vld [vmem:[#allocation10 + $0x1a0] sm:$0xff]
    %v134 = vld [vmem:[#allocation10 + $0x1a8] sm:$0xff]
    %v135 = vld [vmem:[#allocation10 + $0x1b0] sm:$0xff]
    %v136 = vld [vmem:[#allocation10 + $0x1b8] sm:$0xff]
    %v137 = vld [vmem:[#allocation10 + $0x1c0] sm:$0xff]
    %v138 = vld [vmem:[#allocation10 + $0x1c8] sm:$0xff]
    %v139 = vld [vmem:[#allocation10 + $0x1d0] sm:$0xff]
    %v140 = vld [vmem:[#allocation10 + $0x1d8] sm:$0xff]
    %v141 = vld [vmem:[#allocation10 + $0x1e0] sm:$0xff]
    %v142 = vld [vmem:[#allocation10 + $0x1e8] sm:$0xff]
    %v143 = vld [vmem:[#allocation10 + $0x1f0] sm:$0xff]
    %v144 = vld [vmem:[#allocation10 + $0x1f8] sm:$0xff]
    %v145 = vld [vmem:[#allocation5] sm:$0xff]
    %v146 = vld [vmem:[#allocation5 + $0x8] sm:$0xff]
    %v147 = vld [vmem:[#allocation5 + $0x10] sm:$0xff]
    %v148 = vld [vmem:[#allocation5 + $0x18] sm:$0xff]
    %v149 = vld [vmem:[#allocation5 + $0x20] sm:$0xff]
    %v150 = vld [vmem:[#allocation5 + $0x28] sm:$0xff]
    %v151 = vld [vmem:[#allocation5 + $0x30] sm:$0xff]
    %v152 = vld [vmem:[#allocation5 + $0x38] sm:$0xff]
    %v153 = vld [vmem:[#allocation5 + $0x40] sm:$0xff]
    %v154 = vld [vmem:[#allocation8] sm:$0xff]
    %v155 = vld [vmem:[#allocation8 + $0x8] sm:$0xff]
    %v156 = vld [vmem:[#allocation8 + $0x10] sm:$0xff]
    %v157 = vld [vmem:[#allocation8 + $0x18] sm:$0xff]
    %v158 = vld [vmem:[#allocation8 + $0x20] sm:$0xff]
    %v159 = vld [vmem:[#allocation8 + $0x28] sm:$0xff]
    %v160 = vld [vmem:[#allocation8 + $0x30] sm:$0xff]
    %v161 = vld [vmem:[#allocation8 + $0x38] sm:$0xff]
    %v162 = vld [vmem:[#allocation8 + $0x40] sm:$0xff]
    %v163 = vld [vmem:[#allocation8 + $0x48] sm:$0xff]
    %v164 = vld [vmem:[#allocation8 + $0x50] sm:$0xff]
    %v165 = vld [vmem:[#allocation8 + $0x58] sm:$0xff]
    %v166 = vld [vmem:[#allocation8 + $0x60] sm:$0xff]
    %v167 = vld [vmem:[#allocation8 + $0x68] sm:$0xff]
    %v168 = vld [vmem:[#allocation8 + $0x70] sm:$0xff]
    %v169 = vld [vmem:[#allocation8 + $0x78] sm:$0xff]
    %v170 = vld [vmem:[#allocation8 + $0x80] sm:$0xff]
    %v171 = vld [vmem:[#allocation8 + $0x88] sm:$0xff]
    %v172 = vld [vmem:[#allocation8 + $0x90] sm:$0xff]
    %v173 = vld [vmem:[#allocation8 + $0x98] sm:$0xff]
    %v174 = vld [vmem:[#allocation8 + $0xa0] sm:$0xff]
    %v175 = vld [vmem:[#allocation8 + $0xa8] sm:$0xff]
    %v176 = vld [vmem:[#allocation8 + $0xb0] sm:$0xff]
    %v177 = vld [vmem:[#allocation8 + $0xb8] sm:$0xff]
    %v178 = vld [vmem:[#allocation8 + $0xc0] sm:$0xff]
    %v179 = vld [vmem:[#allocation8 + $0xc8] sm:$0xff]
    %v180 = vld [vmem:[#allocation8 + $0xd0] sm:$0xff]
    %v181 = vld [vmem:[#allocation8 + $0xd8] sm:$0xff]
    %v182 = vld [vmem:[#allocation8 + $0xe0] sm:$0xff]
    %v183 = vld [vmem:[#allocation8 + $0xe8] sm:$0xff]
    %v184 = vld [vmem:[#allocation8 + $0xf0] sm:$0xff]
    %v185 = vld [vmem:[#allocation8 + $0xf8] sm:$0xff]
    %v186 = vld [vmem:[#allocation8 + $0x100] sm:$0xff]
    %v187 = vld [vmem:[#allocation8 + $0x108] sm:$0xff]
    %v188 = vld [vmem:[#allocation8 + $0x110] sm:$0xff]
    %v189 = vld [vmem:[#allocation8 + $0x118] sm:$0xff]
    %v190 = vld [vmem:[#allocation8 + $0x120] sm:$0xff]
    %v191 = vld [vmem:[#allocation8 + $0x128] sm:$0xff]
    %v192 = vld [vmem:[#allocation8 + $0x130] sm:$0xff]
    %v193 = vld [vmem:[#allocation8 + $0x138] sm:$0xff]
    %v194 = vld [vmem:[#allocation8 + $0x140] sm:$0xff]
    %v195 = vld [vmem:[#allocation8 + $0x148] sm:$0xff]
    %v196 = vld [vmem:[#allocation8 + $0x150] sm:$0xff]
    %v197 = vld [vmem:[#allocation8 + $0x158] sm:$0xff]
    %v198 = vld [vmem:[#allocation8 + $0x160] sm:$0xff]
    %v199 = vld [vmem:[#allocation8 + $0x168] sm:$0xff]
    %v200 = vld [vmem:[#allocation8 + $0x170] sm:$0xff]
    %v201 = vld [vmem:[#allocation8 + $0x178] sm:$0xff]
    %v202 = vld [vmem:[#allocation8 + $0x180] sm:$0xff]
    %v203 = vld [vmem:[#allocation8 + $0x188] sm:$0xff]
    %v204 = vld [vmem:[#allocation8 + $0x190] sm:$0xff]
    %v205 = vld [vmem:[#allocation8 + $0x198] sm:$0xff]
    %v206 = vld [vmem:[#allocation8 + $0x1a0] sm:$0xff]
    %v207 = vld [vmem:[#allocation8 + $0x1a8] sm:$0xff]
    %v208 = vld [vmem:[#allocation8 + $0x1b0] sm:$0xff]
    %v209 = vld [vmem:[#allocation8 + $0x1b8] sm:$0xff]
    %v210 = vld [vmem:[#allocation8 + $0x1c0] sm:$0xff]
    %v211 = vld [vmem:[#allocation8 + $0x1c8] sm:$0xff]
    %v212 = vld [vmem:[#allocation8 + $0x1d0] sm:$0xff]
    %v213 = vld [vmem:[#allocation8 + $0x1d8] sm:$0xff]
    %v214 = vld [vmem:[#allocation8 + $0x1e0] sm:$0xff]
    %v215 = vld [vmem:[#allocation8 + $0x1e8] sm:$0xff]
    %v216 = vld [vmem:[#allocation8 + $0x1f0] sm:$0xff]
    %v217 = vld [vmem:[#allocation8 + $0x1f8] sm:$0xff]
    %v218 = vld [vmem:[#allocation11] sm:$0xf]
    %v220 = vperm.slane %v218, 0
    %v221 = vperm.slane %v218, 1
    %v222 = vperm.slane %v218, 2
    %v223 = vperm.slane %v218, 3
    %228 = vmatpush.msra.mxu0 %v214
    %229 = vmatpush.msra.mxu0 %v210
    %230 = vmatpush.msra.mxu0 %v206
    %231 = vmatpush.msra.mxu0 %v202
    %232 = vmatpush.msra.mxu0 %v198
    %233 = vmatpush.msra.mxu0 %v194
    %234 = vmatpush.msra.mxu0 %v190
    %235 = vmatpush.msra.mxu0 %v186
    %236 = vmatpush.msra.mxu0 %v182
    %237 = vmatpush.msra.mxu0 %v178
    %238 = vmatpush.msra.mxu0 %v174
    %239 = vmatpush.msra.mxu0 %v170
    %240 = vmatpush.msra.mxu0 %v166
    %241 = vmatpush.msra.mxu0 %v162
    %242 = vmatpush.msra.mxu0 %v158
    %243 = vmatpush.msra.mxu0 %v154
    %244 = vmatmul.f32.gmra.mxu0 %v145
    %v245 = vpop.f32.mrf.mxu0
    %v246 = vadd.f32 %v220, %v245
    %247 = vmatmul.f32.gmra.mxu0 %v146
    %v248 = vpop.f32.mrf.mxu0
    %v249 = vadd.f32 %v220, %v248
    %250 = vmatmul.f32.gmra.mxu0 %v147
    %v251 = vpop.f32.mrf.mxu0
    %v252 = vadd.f32 %v220, %v251
    %253 = vmatmul.f32.gmra.mxu0 %v148
    %v254 = vpop.f32.mrf.mxu0
    %v255 = vadd.f32 %v220, %v254
    %256 = vmatmul.f32.gmra.mxu0 %v149
    %v257 = vpop.f32.mrf.mxu0
    %v258 = vadd.f32 %v220, %v257
    %259 = vmatmul.f32.gmra.mxu0 %v150
    %v260 = vpop.f32.mrf.mxu0
    %v261 = vadd.f32 %v220, %v260
    %262 = vmatmul.f32.gmra.mxu0 %v151
    %v263 = vpop.f32.mrf.mxu0
    %v264 = vadd.f32 %v220, %v263
    %265 = vmatmul.f32.gmra.mxu0 %v152
    %v266 = vpop.f32.mrf.mxu0
    %v267 = vadd.f32 %v220, %v266
    %268 = vmatmul.f32.gmra.mxu0 %v153
    %v269 = vpop.f32.mrf.mxu0
    %v270 = vadd.f32 %v220, %v269
    %271 = vdwg.mxu0
    %272 = vmatpush.msra.mxu0 %v215
    %273 = vmatpush.msra.mxu0 %v211
    %274 = vmatpush.msra.mxu0 %v207
    %275 = vmatpush.msra.mxu0 %v203
    %276 = vmatpush.msra.mxu0 %v199
    %277 = vmatpush.msra.mxu0 %v195
    %278 = vmatpush.msra.mxu0 %v191
    %279 = vmatpush.msra.mxu0 %v187
    %280 = vmatpush.msra.mxu0 %v183
    %281 = vmatpush.msra.mxu0 %v179
    %282 = vmatpush.msra.mxu0 %v175
    %283 = vmatpush.msra.mxu0 %v171
    %284 = vmatpush.msra.mxu0 %v167
    %285 = vmatpush.msra.mxu0 %v163
    %286 = vmatpush.msra.mxu0 %v159
    %287 = vmatpush.msra.mxu0 %v155
    %288 = vmatmul.f32.gmra.mxu0 %v145
    %v289 = vpop.f32.mrf.mxu0
    %v290 = vadd.f32 %v221, %v289
    %291 = vmatmul.f32.gmra.mxu0 %v146
    %v292 = vpop.f32.mrf.mxu0
    %v293 = vadd.f32 %v221, %v292
    %294 = vmatmul.f32.gmra.mxu0 %v147
    %v295 = vpop.f32.mrf.mxu0
    %v296 = vadd.f32 %v221, %v295
    %297 = vmatmul.f32.gmra.mxu0 %v148
    %v298 = vpop.f32.mrf.mxu0
    %v299 = vadd.f32 %v221, %v298
    %300 = vmatmul.f32.gmra.mxu0 %v149
    %v301 = vpop.f32.mrf.mxu0
    %v302 = vadd.f32 %v221, %v301
    %303 = vmatmul.f32.gmra.mxu0 %v150
    %v304 = vpop.f32.mrf.mxu0
    %v305 = vadd.f32 %v221, %v304
    %306 = vmatmul.f32.gmra.mxu0 %v151
    %v307 = vpop.f32.mrf.mxu0
    %v308 = vadd.f32 %v221, %v307
    %309 = vmatmul.f32.gmra.mxu0 %v152
    %v310 = vpop.f32.mrf.mxu0
    %v311 = vadd.f32 %v221, %v310
    %312 = vmatmul.f32.gmra.mxu0 %v153
    %v313 = vpop.f32.mrf.mxu0
    %v314 = vadd.f32 %v221, %v313
    %315 = vdwg.mxu0
    %316 = vmatpush.msra.mxu0 %v216
    %317 = vmatpush.msra.mxu0 %v212
    %318 = vmatpush.msra.mxu0 %v208
    %319 = vmatpush.msra.mxu0 %v204
    %320 = vmatpush.msra.mxu0 %v200
    %321 = vmatpush.msra.mxu0 %v196
    %322 = vmatpush.msra.mxu0 %v192
    %323 = vmatpush.msra.mxu0 %v188
    %324 = vmatpush.msra.mxu0 %v184
    %325 = vmatpush.msra.mxu0 %v180
    %326 = vmatpush.msra.mxu0 %v176
    %327 = vmatpush.msra.mxu0 %v172
    %328 = vmatpush.msra.mxu0 %v168
    %329 = vmatpush.msra.mxu0 %v164
    %330 = vmatpush.msra.mxu0 %v160
    %331 = vmatpush.msra.mxu0 %v156
    %332 = vmatmul.f32.gmra.mxu0 %v145
    %v333 = vpop.f32.mrf.mxu0
    %v334 = vadd.f32 %v222, %v333
    %335 = vmatmul.f32.gmra.mxu0 %v146
    %v336 = vpop.f32.mrf.mxu0
    %v337 = vadd.f32 %v222, %v336
    %338 = vmatmul.f32.gmra.mxu0 %v147
    %v339 = vpop.f32.mrf.mxu0
    %v340 = vadd.f32 %v222, %v339
    %341 = vmatmul.f32.gmra.mxu0 %v148
    %v342 = vpop.f32.mrf.mxu0
    %v343 = vadd.f32 %v222, %v342
    %344 = vmatmul.f32.gmra.mxu0 %v149
    %v345 = vpop.f32.mrf.mxu0
    %v346 = vadd.f32 %v222, %v345
    %347 = vmatmul.f32.gmra.mxu0 %v150
    %v348 = vpop.f32.mrf.mxu0
    %v349 = vadd.f32 %v222, %v348
    %350 = vmatmul.f32.gmra.mxu0 %v151
    %v351 = vpop.f32.mrf.mxu0
    %v352 = vadd.f32 %v222, %v351
    %353 = vmatmul.f32.gmra.mxu0 %v152
    %v354 = vpop.f32.mrf.mxu0
    %v355 = vadd.f32 %v222, %v354
    %356 = vmatmul.f32.gmra.mxu0 %v153
    %v357 = vpop.f32.mrf.mxu0
    %v358 = vadd.f32 %v222, %v357
    %359 = vdwg.mxu0
    %360 = vmatpush.msra.mxu0 %v217
    %361 = vmatpush.msra.mxu0 %v213
    %362 = vmatpush.msra.mxu0 %v209
    %363 = vmatpush.msra.mxu0 %v205
    %364 = vmatpush.msra.mxu0 %v201
    %365 = vmatpush.msra.mxu0 %v197
    %366 = vmatpush.msra.mxu0 %v193
    %367 = vmatpush.msra.mxu0 %v189
    %368 = vmatpush.msra.mxu0 %v185
    %369 = vmatpush.msra.mxu0 %v181
    %370 = vmatpush.msra.mxu0 %v177
    %371 = vmatpush.msra.mxu0 %v173
    %372 = vmatpush.msra.mxu0 %v169
    %373 = vmatpush.msra.mxu0 %v165
    %374 = vmatpush.msra.mxu0 %v161
    %375 = vmatpush.msra.mxu0 %v157
    %376 = vmatmul.f32.gmra.mxu0 %v145
    %v377 = vpop.f32.mrf.mxu0
    %v378 = vadd.f32 %v223, %v377
    %379 = vmatmul.f32.gmra.mxu0 %v146
    %v380 = vpop.f32.mrf.mxu0
    %v381 = vadd.f32 %v223, %v380
    %382 = vmatmul.f32.gmra.mxu0 %v147
    %v383 = vpop.f32.mrf.mxu0
    %v384 = vadd.f32 %v223, %v383
    %385 = vmatmul.f32.gmra.mxu0 %v148
    %v386 = vpop.f32.mrf.mxu0
    %v387 = vadd.f32 %v223, %v386
    %388 = vmatmul.f32.gmra.mxu0 %v149
    %v389 = vpop.f32.mrf.mxu0
    %v390 = vadd.f32 %v223, %v389
    %391 = vmatmul.f32.gmra.mxu0 %v150
    %v392 = vpop.f32.mrf.mxu0
    %v393 = vadd.f32 %v223, %v392
    %394 = vmatmul.f32.gmra.mxu0 %v151
    %v395 = vpop.f32.mrf.mxu0
    %v396 = vadd.f32 %v223, %v395
    %397 = vmatmul.f32.gmra.mxu0 %v152
    %v398 = vpop.f32.mrf.mxu0
    %v399 = vadd.f32 %v223, %v398
    %400 = vmatmul.f32.gmra.mxu0 %v153
    %v401 = vpop.f32.mrf.mxu0
    %v402 = vadd.f32 %v223, %v401
    %403 = vdwg.mxu0
    %404 = vst [vmem:[#allocation2] sm:$0xff] %v246
    %405 = vst [vmem:[#allocation2 + $0x8] sm:$0xff] %v290
    %406 = vst [vmem:[#allocation2 + $0x10] sm:$0xff] %v334
    %407 = vst [vmem:[#allocation2 + $0x18] sm:$0xff] %v378
    %408 = vst [vmem:[#allocation2 + $0x20] sm:$0xff] %v249
    %409 = vst [vmem:[#allocation2 + $0x28] sm:$0xff] %v293
    %410 = vst [vmem:[#allocation2 + $0x30] sm:$0xff] %v337
    %411 = vst [vmem:[#allocation2 + $0x38] sm:$0xff] %v381
    %412 = vst [vmem:[#allocation2 + $0x40] sm:$0xff] %v252
    %413 = vst [vmem:[#allocation2 + $0x48] sm:$0xff] %v296
    %414 = vst [vmem:[#allocation2 + $0x50] sm:$0xff] %v340
    %415 = vst [vmem:[#allocation2 + $0x58] sm:$0xff] %v384
    %416 = vst [vmem:[#allocation2 + $0x60] sm:$0xff] %v255
    %417 = vst [vmem:[#allocation2 + $0x68] sm:$0xff] %v299
    %418 = vst [vmem:[#allocation2 + $0x70] sm:$0xff] %v343
    %419 = vst [vmem:[#allocation2 + $0x78] sm:$0xff] %v387
    %420 = vst [vmem:[#allocation2 + $0x80] sm:$0xff] %v258
    %421 = vst [vmem:[#allocation2 + $0x88] sm:$0xff] %v302
    %422 = vst [vmem:[#allocation2 + $0x90] sm:$0xff] %v346
    %423 = vst [vmem:[#allocation2 + $0x98] sm:$0xff] %v390
    %424 = vst [vmem:[#allocation2 + $0xa0] sm:$0xff] %v261
    %425 = vst [vmem:[#allocation2 + $0xa8] sm:$0xff] %v305
    %426 = vst [vmem:[#allocation2 + $0xb0] sm:$0xff] %v349
    %427 = vst [vmem:[#allocation2 + $0xb8] sm:$0xff] %v393
    %428 = vst [vmem:[#allocation2 + $0xc0] sm:$0xff] %v264
    %429 = vst [vmem:[#allocation2 + $0xc8] sm:$0xff] %v308
    %430 = vst [vmem:[#allocation2 + $0xd0] sm:$0xff] %v352
    %431 = vst [vmem:[#allocation2 + $0xd8] sm:$0xff] %v396
    %432 = vst [vmem:[#allocation2 + $0xe0] sm:$0xff] %v267
    %433 = vst [vmem:[#allocation2 + $0xe8] sm:$0xff] %v311
    %434 = vst [vmem:[#allocation2 + $0xf0] sm:$0xff] %v355
    %435 = vst [vmem:[#allocation2 + $0xf8] sm:$0xff] %v399
    %436 = vst [vmem:[#allocation2 + $0x100] sm:$0xff] %v270
    %437 = vst [vmem:[#allocation2 + $0x108] sm:$0xff] %v314
    %438 = vst [vmem:[#allocation2 + $0x110] sm:$0xff] %v358
    %439 = vst [vmem:[#allocation2 + $0x118] sm:$0xff] %v402
    %440 = vst [vmem:[#allocation3] sm:$0xff] 0.0
    %441 = vst [vmem:[#allocation4] sm:$0xff] 0.0
    %v442 = vld [vmem:[#allocation2] sm:$0xff]
    %v443 = vld [vmem:[#allocation2 + $0x8] sm:$0xff]
    %v444 = vld [vmem:[#allocation2 + $0x10] sm:$0xff]
    %v445 = vld [vmem:[#allocation2 + $0x18] sm:$0xff]
    %v446 = vld [vmem:[#allocation3] sm:$0xff]
    %447 = vmatpush.msra.mxu0 %v141
    %448 = vmatpush.msra.mxu0 %v137
    %449 = vmatpush.msra.mxu0 %v133
    %450 = vmatpush.msra.mxu0 %v129
    %451 = vmatpush.msra.mxu0 %v125
    %452 = vmatpush.msra.mxu0 %v121
    %453 = vmatpush.msra.mxu0 %v117
    %454 = vmatpush.msra.mxu0 %v113
    %455 = vmatpush.msra.mxu0 %v109
    %456 = vmatpush.msra.mxu0 %v105
    %457 = vmatpush.msra.mxu0 %v101
    %458 = vmatpush.msra.mxu0 %v97
    %459 = vmatpush.msra.mxu0 %v93
    %460 = vmatpush.msra.mxu0 %v89
    %461 = vmatpush.msra.mxu0 %v85
    %462 = vmatpush.msra.mxu0 %v81
    %463 = vmatmul.f32.gmra.mxu0 %v446
    %v464 = vpop.f32.mrf.mxu0
    %v465 = vadd.f32 0.0, %v464
    %466 = vdwg.mxu0
    %467 = vmatpush.msra.mxu0 %v142
    %468 = vmatpush.msra.mxu0 %v138
    %469 = vmatpush.msra.mxu0 %v134
    %470 = vmatpush.msra.mxu0 %v130
    %471 = vmatpush.msra.mxu0 %v126
    %472 = vmatpush.msra.mxu0 %v122
    %473 = vmatpush.msra.mxu0 %v118
    %474 = vmatpush.msra.mxu0 %v114
    %475 = vmatpush.msra.mxu0 %v110
    %476 = vmatpush.msra.mxu0 %v106
    %477 = vmatpush.msra.mxu0 %v102
    %478 = vmatpush.msra.mxu0 %v98
    %479 = vmatpush.msra.mxu0 %v94
    %480 = vmatpush.msra.mxu0 %v90
    %481 = vmatpush.msra.mxu0 %v86
    %482 = vmatpush.msra.mxu0 %v82
    %483 = vmatmul.f32.gmra.mxu0 %v446
    %v484 = vpop.f32.mrf.mxu0
    %v485 = vadd.f32 0.0, %v484
    %486 = vdwg.mxu0
    %487 = vmatpush.msra.mxu0 %v143
    %488 = vmatpush.msra.mxu0 %v139
    %489 = vmatpush.msra.mxu0 %v135
    %490 = vmatpush.msra.mxu0 %v131
    %491 = vmatpush.msra.mxu0 %v127
    %492 = vmatpush.msra.mxu0 %v123
    %493 = vmatpush.msra.mxu0 %v119
    %494 = vmatpush.msra.mxu0 %v115
    %495 = vmatpush.msra.mxu0 %v111
    %496 = vmatpush.msra.mxu0 %v107
    %497 = vmatpush.msra.mxu0 %v103
    %498 = vmatpush.msra.mxu0 %v99
    %499 = vmatpush.msra.mxu0 %v95
    %500 = vmatpush.msra.mxu0 %v91
    %501 = vmatpush.msra.mxu0 %v87
    %502 = vmatpush.msra.mxu0 %v83
    %503 = vmatmul.f32.gmra.mxu0 %v446
    %v504 = vpop.f32.mrf.mxu0
    %v505 = vadd.f32 0.0, %v504
    %506 = vdwg.mxu0
    %507 = vmatpush.msra.mxu0 %v144
    %508 = vmatpush.msra.mxu0 %v140
    %509 = vmatpush.msra.mxu0 %v136
    %510 = vmatpush.msra.mxu0 %v132
    %511 = vmatpush.msra.mxu0 %v128
    %512 = vmatpush.msra.mxu0 %v124
    %513 = vmatpush.msra.mxu0 %v120
    %514 = vmatpush.msra.mxu0 %v116
    %515 = vmatpush.msra.mxu0 %v112
    %516 = vmatpush.msra.mxu0 %v108
    %517 = vmatpush.msra.mxu0 %v104
    %518 = vmatpush.msra.mxu0 %v100
    %519 = vmatpush.msra.mxu0 %v96
    %520 = vmatpush.msra.mxu0 %v92
    %521 = vmatpush.msra.mxu0 %v88
    %522 = vmatpush.msra.mxu0 %v84
    %523 = vmatmul.f32.gmra.mxu0 %v446
    %v524 = vpop.f32.mrf.mxu0
    %v525 = vadd.f32 0.0, %v524
    %526 = vdwg.mxu0
    %v527 = vadd.f32 %v442, %v465
    %v528 = vadd.f32 %v443, %v485
    %v529 = vadd.f32 %v444, %v505
    %v530 = vadd.f32 %v445, %v525
    %v531 = vmul.f32 %v527, 0.5
    %v532 = vtanh.pop %v531
    %v533 = vadd.f32 %v532, 1.0
    %v534 = vmul.f32 %v533, 0.5
    %v535 = vmul.f32 %v528, 0.5
    %v536 = vtanh.pop %v535
    %v537 = vadd.f32 %v536, 1.0
    %v538 = vmul.f32 %v537, 0.5
    %v539 = vtanh.pop %v529
    %v540 = vmul.f32 %v530, 0.5
    %v541 = vtanh.pop %v540
    %v542 = vadd.f32 %v541, 1.0
    %v543 = vmul.f32 %v542, 0.5
    %v544 = vld [vmem:[#allocation4] sm:$0xff]
    %v545 = vmul.f32 %v538, %v544
    %v546 = vmul.f32 %v534, %v539
    %v547 = vadd.f32 %v545, %v546
    %v548 = vtanh.pop %v547
    %v549 = vmul.f32 %v543, %v548
    %550 = vst [vmem:[#allocation4] sm:$0xff] %v547
    %551 = vst [vmem:[#allocation3] sm:$0xff] %v549
    %552 = vst [vmem:[#allocation13] sm:$0xff] %v549
    %s553 = scalar_lea.vmem [#allocation2], 32
    %v554 = vld [vmem:[%s553] sm:$0xff]
    %v555 = vld [vmem:[%s553 + $0x8] sm:$0xff]
    %v556 = vld [vmem:[%s553 + $0x10] sm:$0xff]
    %v557 = vld [vmem:[%s553 + $0x18] sm:$0xff]
    %v558 = vld [vmem:[#allocation3] sm:$0xff]
    %559 = vmatpush.msra.mxu0 %v141
    %560 = vmatpush.msra.mxu0 %v137
    %561 = vmatpush.msra.mxu0 %v133
    %562 = vmatpush.msra.mxu0 %v129
    %563 = vmatpush.msra.mxu0 %v125
    %564 = vmatpush.msra.mxu0 %v121
    %565 = vmatpush.msra.mxu0 %v117
    %566 = vmatpush.msra.mxu0 %v113
    %567 = vmatpush.msra.mxu0 %v109
    %568 = vmatpush.msra.mxu0 %v105
    %569 = vmatpush.msra.mxu0 %v101
    %570 = vmatpush.msra.mxu0 %v97
    %571 = vmatpush.msra.mxu0 %v93
    %572 = vmatpush.msra.mxu0 %v89
    %573 = vmatpush.msra.mxu0 %v85
    %574 = vmatpush.msra.mxu0 %v81
    %575 = vmatmul.f32.gmra.mxu0 %v558
    %v576 = vpop.f32.mrf.mxu0
    %v577 = vadd.f32 0.0, %v576
    %578 = vdwg.mxu0
    %579 = vmatpush.msra.mxu0 %v142
    %580 = vmatpush.msra.mxu0 %v138
    %581 = vmatpush.msra.mxu0 %v134
    %582 = vmatpush.msra.mxu0 %v130
    %583 = vmatpush.msra.mxu0 %v126
    %584 = vmatpush.msra.mxu0 %v122
    %585 = vmatpush.msra.mxu0 %v118
    %586 = vmatpush.msra.mxu0 %v114
    %587 = vmatpush.msra.mxu0 %v110
    %588 = vmatpush.msra.mxu0 %v106
    %589 = vmatpush.msra.mxu0 %v102
    %590 = vmatpush.msra.mxu0 %v98
    %591 = vmatpush.msra.mxu0 %v94
    %592 = vmatpush.msra.mxu0 %v90
    %593 = vmatpush.msra.mxu0 %v86
    %594 = vmatpush.msra.mxu0 %v82
    %595 = vmatmul.f32.gmra.mxu0 %v558
    %v596 = vpop.f32.mrf.mxu0
    %v597 = vadd.f32 0.0, %v596
    %598 = vdwg.mxu0
    %599 = vmatpush.msra.mxu0 %v143
    %600 = vmatpush.msra.mxu0 %v139
    %601 = vmatpush.msra.mxu0 %v135
    %602 = vmatpush.msra.mxu0 %v131
    %603 = vmatpush.msra.mxu0 %v127
    %604 = vmatpush.msra.mxu0 %v123
    %605 = vmatpush.msra.mxu0 %v119
    %606 = vmatpush.msra.mxu0 %v115
    %607 = vmatpush.msra.mxu0 %v111
    %608 = vmatpush.msra.mxu0 %v107
    %609 = vmatpush.msra.mxu0 %v103
    %610 = vmatpush.msra.mxu0 %v99
    %611 = vmatpush.msra.mxu0 %v95
    %612 = vmatpush.msra.mxu0 %v91
    %613 = vmatpush.msra.mxu0 %v87
    %614 = vmatpush.msra.mxu0 %v83
    %615 = vmatmul.f32.gmra.mxu0 %v558
    %v616 = vpop.f32.mrf.mxu0
    %v617 = vadd.f32 0.0, %v616
    %618 = vdwg.mxu0
    %619 = vmatpush.msra.mxu0 %v144
    %620 = vmatpush.msra.mxu0 %v140
    %621 = vmatpush.msra.mxu0 %v136
    %622 = vmatpush.msra.mxu0 %v132
    %623 = vmatpush.msra.mxu0 %v128
    %624 = vmatpush.msra.mxu0 %v124
    %625 = vmatpush.msra.mxu0 %v120
    %626 = vmatpush.msra.mxu0 %v116
    %627 = vmatpush.msra.mxu0 %v112
    %628 = vmatpush.msra.mxu0 %v108
    %629 = vmatpush.msra.mxu0 %v104
    %630 = vmatpush.msra.mxu0 %v100
    %631 = vmatpush.msra.mxu0 %v96
    %632 = vmatpush.msra.mxu0 %v92
    %633 = vmatpush.msra.mxu0 %v88
    %634 = vmatpush.msra.mxu0 %v84
    %635 = vmatmul.f32.gmra.mxu0 %v558
    %v636 = vpop.f32.mrf.mxu0
    %v637 = vadd.f32 0.0, %v636
    %638 = vdwg.mxu0
    %v639 = vadd.f32 %v554, %v577
    %v640 = vadd.f32 %v555, %v597
    %v641 = vadd.f32 %v556, %v617
    %v642 = vadd.f32 %v557, %v637
    %v643 = vmul.f32 %v639, 0.5
    %v644 = vtanh.pop %v643
    %v645 = vadd.f32 %v644, 1.0
    %v646 = vmul.f32 %v645, 0.5
    %v647 = vmul.f32 %v640, 0.5
    %v648 = vtanh.pop %v647
    %v649 = vadd.f32 %v648, 1.0
    %v650 = vmul.f32 %v649, 0.5
    %v651 = vtanh.pop %v641
    %v652 = vmul.f32 %v642, 0.5
    %v653 = vtanh.pop %v652
    %v654 = vadd.f32 %v653, 1.0
    %v655 = vmul.f32 %v654, 0.5
    %v656 = vld [vmem:[#allocation4] sm:$0xff]
    %v657 = vmul.f32 %v650, %v656
    %v658 = vmul.f32 %v646, %v651
    %v659 = vadd.f32 %v657, %v658
    %v660 = vtanh.pop %v659
    %v661 = vmul.f32 %v655, %v660
    %662 = vst [vmem:[#allocation4] sm:$0xff] %v659
    %663 = vst [vmem:[#allocation3] sm:$0xff] %v661
    %s664 = scalar_lea.vmem [#allocation13], 8
    %665 = vst [vmem:[%s664] sm:$0xff] %v661
    %s666 = scalar_lea.vmem [#allocation2], 64
    %v667 = vld [vmem:[%s666] sm:$0xff]
    %v668 = vld [vmem:[%s666 + $0x8] sm:$0xff]
    %v669 = vld [vmem:[%s666 + $0x10] sm:$0xff]
    %v670 = vld [vmem:[%s666 + $0x18] sm:$0xff]
    %v671 = vld [vmem:[#allocation3] sm:$0xff]
    %672 = vmatpush.msra.mxu0 %v141
    %673 = vmatpush.msra.mxu0 %v137
    %674 = vmatpush.msra.mxu0 %v133
    %675 = vmatpush.msra.mxu0 %v129
    %676 = vmatpush.msra.mxu0 %v125
    %677 = vmatpush.msra.mxu0 %v121
    %678 = vmatpush.msra.mxu0 %v117
    %679 = vmatpush.msra.mxu0 %v113
    %680 = vmatpush.msra.mxu0 %v109
    %681 = vmatpush.msra.mxu0 %v105
    %682 = vmatpush.msra.mxu0 %v101
    %683 = vmatpush.msra.mxu0 %v97
    %684 = vmatpush.msra.mxu0 %v93
    %685 = vmatpush.msra.mxu0 %v89
    %686 = vmatpush.msra.mxu0 %v85
    %687 = vmatpush.msra.mxu0 %v81
    %688 = vmatmul.f32.gmra.mxu0 %v671
    %v689 = vpop.f32.mrf.mxu0
    %v690 = vadd.f32 0.0, %v689
    %691 = vdwg.mxu0
    %692 = vmatpush.msra.mxu0 %v142
    %693 = vmatpush.msra.mxu0 %v138
    %694 = vmatpush.msra.mxu0 %v134
    %695 = vmatpush.msra.mxu0 %v130
    %696 = vmatpush.msra.mxu0 %v126
    %697 = vmatpush.msra.mxu0 %v122
    %698 = vmatpush.msra.mxu0 %v118
    %699 = vmatpush.msra.mxu0 %v114
    %700 = vmatpush.msra.mxu0 %v110
    %701 = vmatpush.msra.mxu0 %v106
    %702 = vmatpush.msra.mxu0 %v102
    %703 = vmatpush.msra.mxu0 %v98
    %704 = vmatpush.msra.mxu0 %v94
    %705 = vmatpush.msra.mxu0 %v90
    %706 = vmatpush.msra.mxu0 %v86
    %707 = vmatpush.msra.mxu0 %v82
    %708 = vmatmul.f32.gmra.mxu0 %v671
    %v709 = vpop.f32.mrf.mxu0
    %v710 = vadd.f32 0.0, %v709
    %711 = vdwg.mxu0
    %712 = vmatpush.msra.mxu0 %v143
    %713 = vmatpush.msra.mxu0 %v139
    %714 = vmatpush.msra.mxu0 %v135
    %715 = vmatpush.msra.mxu0 %v131
    %716 = vmatpush.msra.mxu0 %v127
    %717 = vmatpush.msra.mxu0 %v123
    %718 = vmatpush.msra.mxu0 %v119
    %719 = vmatpush.msra.mxu0 %v115
    %720 = vmatpush.msra.mxu0 %v111
    %721 = vmatpush.msra.mxu0 %v107
    %722 = vmatpush.msra.mxu0 %v103
    %723 = vmatpush.msra.mxu0 %v99
    %724 = vmatpush.msra.mxu0 %v95
    %725 = vmatpush.msra.mxu0 %v91
    %726 = vmatpush.msra.mxu0 %v87
    %727 = vmatpush.msra.mxu0 %v83
    %728 = vmatmul.f32.gmra.mxu0 %v671
    %v729 = vpop.f32.mrf.mxu0
    %v730 = vadd.f32 0.0, %v729
    %731 = vdwg.mxu0
    %732 = vmatpush.msra.mxu0 %v144
    %733 = vmatpush.msra.mxu0 %v140
    %734 = vmatpush.msra.mxu0 %v136
    %735 = vmatpush.msra.mxu0 %v132
    %736 = vmatpush.msra.mxu0 %v128
    %737 = vmatpush.msra.mxu0 %v124
    %738 = vmatpush.msra.mxu0 %v120
    %739 = vmatpush.msra.mxu0 %v116
    %740 = vmatpush.msra.mxu0 %v112
    %741 = vmatpush.msra.mxu0 %v108
    %742 = vmatpush.msra.mxu0 %v104
    %743 = vmatpush.msra.mxu0 %v100
    %744 = vmatpush.msra.mxu0 %v96
    %745 = vmatpush.msra.mxu0 %v92
    %746 = vmatpush.msra.mxu0 %v88
    %747 = vmatpush.msra.mxu0 %v84
    %748 = vmatmul.f32.gmra.mxu0 %v671
    %v749 = vpop.f32.mrf.mxu0
    %v750 = vadd.f32 0.0, %v749
    %751 = vdwg.mxu0
    %v752 = vadd.f32 %v667, %v690
    %v753 = vadd.f32 %v668, %v710
    %v754 = vadd.f32 %v669, %v730
    %v755 = vadd.f32 %v670, %v750
    %v756 = vmul.f32 %v752, 0.5
    %v757 = vtanh.pop %v756
    %v758 = vadd.f32 %v757, 1.0
    %v759 = vmul.f32 %v758, 0.5
    %v760 = vmul.f32 %v753, 0.5
    %v761 = vtanh.pop %v760
    %v762 = vadd.f32 %v761, 1.0
    %v763 = vmul.f32 %v762, 0.5
    %v764 = vtanh.pop %v754
    %v765 = vmul.f32 %v755, 0.5
    %v766 = vtanh.pop %v765
    %v767 = vadd.f32 %v766, 1.0
    %v768 = vmul.f32 %v767, 0.5
    %v769 = vld [vmem:[#allocation4] sm:$0xff]
    %v770 = vmul.f32 %v763, %v769
    %v771 = vmul.f32 %v759, %v764
    %v772 = vadd.f32 %v770, %v771
    %v773 = vtanh.pop %v772
    %v774 = vmul.f32 %v768, %v773
    %775 = vst [vmem:[#allocation4] sm:$0xff] %v772
    %776 = vst [vmem:[#allocation3] sm:$0xff] %v774
    %s777 = scalar_lea.vmem [#allocation13], 16
    %778 = vst [vmem:[%s777] sm:$0xff] %v774
    %s779 = scalar_lea.vmem [#allocation2], 96
    %v780 = vld [vmem:[%s779] sm:$0xff]
    %v781 = vld [vmem:[%s779 + $0x8] sm:$0xff]
    %v782 = vld [vmem:[%s779 + $0x10] sm:$0xff]
    %v783 = vld [vmem:[%s779 + $0x18] sm:$0xff]
    %v784 = vld [vmem:[#allocation3] sm:$0xff]
    %785 = vmatpush.msra.mxu0 %v141
    %786 = vmatpush.msra.mxu0 %v137
    %787 = vmatpush.msra.mxu0 %v133
    %788 = vmatpush.msra.mxu0 %v129
    %789 = vmatpush.msra.mxu0 %v125
    %790 = vmatpush.msra.mxu0 %v121
    %791 = vmatpush.msra.mxu0 %v117
    %792 = vmatpush.msra.mxu0 %v113
    %793 = vmatpush.msra.mxu0 %v109
    %794 = vmatpush.msra.mxu0 %v105
    %795 = vmatpush.msra.mxu0 %v101
    %796 = vmatpush.msra.mxu0 %v97
    %797 = vmatpush.msra.mxu0 %v93
    %798 = vmatpush.msra.mxu0 %v89
    %799 = vmatpush.msra.mxu0 %v85
    %800 = vmatpush.msra.mxu0 %v81
    %801 = vmatmul.f32.gmra.mxu0 %v784
    %v802 = vpop.f32.mrf.mxu0
    %v803 = vadd.f32 0.0, %v802
    %804 = vdwg.mxu0
    %805 = vmatpush.msra.mxu0 %v142
    %806 = vmatpush.msra.mxu0 %v138
    %807 = vmatpush.msra.mxu0 %v134
    %808 = vmatpush.msra.mxu0 %v130
    %809 = vmatpush.msra.mxu0 %v126
    %810 = vmatpush.msra.mxu0 %v122
    %811 = vmatpush.msra.mxu0 %v118
    %812 = vmatpush.msra.mxu0 %v114
    %813 = vmatpush.msra.mxu0 %v110
    %814 = vmatpush.msra.mxu0 %v106
    %815 = vmatpush.msra.mxu0 %v102
    %816 = vmatpush.msra.mxu0 %v98
    %817 = vmatpush.msra.mxu0 %v94
    %818 = vmatpush.msra.mxu0 %v90
    %819 = vmatpush.msra.mxu0 %v86
    %820 = vmatpush.msra.mxu0 %v82
    %821 = vmatmul.f32.gmra.mxu0 %v784
    %v822 = vpop.f32.mrf.mxu0
    %v823 = vadd.f32 0.0, %v822
    %824 = vdwg.mxu0
    %825 = vmatpush.msra.mxu0 %v143
    %826 = vmatpush.msra.mxu0 %v139
    %827 = vmatpush.msra.mxu0 %v135
    %828 = vmatpush.msra.mxu0 %v131
    %829 = vmatpush.msra.mxu0 %v127
    %830 = vmatpush.msra.mxu0 %v123
    %831 = vmatpush.msra.mxu0 %v119
    %832 = vmatpush.msra.mxu0 %v115
    %833 = vmatpush.msra.mxu0 %v111
    %834 = vmatpush.msra.mxu0 %v107
    %835 = vmatpush.msra.mxu0 %v103
    %836 = vmatpush.msra.mxu0 %v99
    %837 = vmatpush.msra.mxu0 %v95
    %838 = vmatpush.msra.mxu0 %v91
    %839 = vmatpush.msra.mxu0 %v87
    %840 = vmatpush.msra.mxu0 %v83
    %841 = vmatmul.f32.gmra.mxu0 %v784
    %v842 = vpop.f32.mrf.mxu0
    %v843 = vadd.f32 0.0, %v842
    %844 = vdwg.mxu0
    %845 = vmatpush.msra.mxu0 %v144
    %846 = vmatpush.msra.mxu0 %v140
    %847 = vmatpush.msra.mxu0 %v136
    %848 = vmatpush.msra.mxu0 %v132
    %849 = vmatpush.msra.mxu0 %v128
    %850 = vmatpush.msra.mxu0 %v124
    %851 = vmatpush.msra.mxu0 %v120
    %852 = vmatpush.msra.mxu0 %v116
    %853 = vmatpush.msra.mxu0 %v112
    %854 = vmatpush.msra.mxu0 %v108
    %855 = vmatpush.msra.mxu0 %v104
    %856 = vmatpush.msra.mxu0 %v100
    %857 = vmatpush.msra.mxu0 %v96
    %858 = vmatpush.msra.mxu0 %v92
    %859 = vmatpush.msra.mxu0 %v88
    %860 = vmatpush.msra.mxu0 %v84
    %861 = vmatmul.f32.gmra.mxu0 %v784
    %v862 = vpop.f32.mrf.mxu0
    %v863 = vadd.f32 0.0, %v862
    %864 = vdwg.mxu0
    %v865 = vadd.f32 %v780, %v803
    %v866 = vadd.f32 %v781, %v823
    %v867 = vadd.f32 %v782, %v843
    %v868 = vadd.f32 %v783, %v863
    %v869 = vmul.f32 %v865, 0.5
    %v870 = vtanh.pop %v869
    %v871 = vadd.f32 %v870, 1.0
    %v872 = vmul.f32 %v871, 0.5
    %v873 = vmul.f32 %v866, 0.5
    %v874 = vtanh.pop %v873
    %v875 = vadd.f32 %v874, 1.0
    %v876 = vmul.f32 %v875, 0.5
    %v877 = vtanh.pop %v867
    %v878 = vmul.f32 %v868, 0.5
    %v879 = vtanh.pop %v878
    %v880 = vadd.f32 %v879, 1.0
    %v881 = vmul.f32 %v880, 0.5
    %v882 = vld [vmem:[#allocation4] sm:$0xff]
    %v883 = vmul.f32 %v876, %v882
    %v884 = vmul.f32 %v872, %v877
    %v885 = vadd.f32 %v883, %v884
    %v886 = vtanh.pop %v885
    %v887 = vmul.f32 %v881, %v886
    %888 = vst [vmem:[#allocation4] sm:$0xff] %v885
    %889 = vst [vmem:[#allocation3] sm:$0xff] %v887
    %s890 = scalar_lea.vmem [#allocation13], 24
    %891 = vst [vmem:[%s890] sm:$0xff] %v887
    %s892 = scalar_lea.vmem [#allocation2], 128
    %v893 = vld [vmem:[%s892] sm:$0xff]
    %v894 = vld [vmem:[%s892 + $0x8] sm:$0xff]
    %v895 = vld [vmem:[%s892 + $0x10] sm:$0xff]
    %v896 = vld [vmem:[%s892 + $0x18] sm:$0xff]
    %v897 = vld [vmem:[#allocation3] sm:$0xff]
    %898 = vmatpush.msra.mxu0 %v141
    %899 = vmatpush.msra.mxu0 %v137
    %900 = vmatpush.msra.mxu0 %v133
    %901 = vmatpush.msra.mxu0 %v129
    %902 = vmatpush.msra.mxu0 %v125
    %903 = vmatpush.msra.mxu0 %v121
    %904 = vmatpush.msra.mxu0 %v117
    %905 = vmatpush.msra.mxu0 %v113
    %906 = vmatpush.msra.mxu0 %v109
    %907 = vmatpush.msra.mxu0 %v105
    %908 = vmatpush.msra.mxu0 %v101
    %909 = vmatpush.msra.mxu0 %v97
    %910 = vmatpush.msra.mxu0 %v93
    %911 = vmatpush.msra.mxu0 %v89
    %912 = vmatpush.msra.mxu0 %v85
    %913 = vmatpush.msra.mxu0 %v81
    %914 = vmatmul.f32.gmra.mxu0 %v897
    %v915 = vpop.f32.mrf.mxu0
    %v916 = vadd.f32 0.0, %v915
    %917 = vdwg.mxu0
    %918 = vmatpush.msra.mxu0 %v142
    %919 = vmatpush.msra.mxu0 %v138
    %920 = vmatpush.msra.mxu0 %v134
    %921 = vmatpush.msra.mxu0 %v130
    %922 = vmatpush.msra.mxu0 %v126
    %923 = vmatpush.msra.mxu0 %v122
    %924 = vmatpush.msra.mxu0 %v118
    %925 = vmatpush.msra.mxu0 %v114
    %926 = vmatpush.msra.mxu0 %v110
    %927 = vmatpush.msra.mxu0 %v106
    %928 = vmatpush.msra.mxu0 %v102
    %929 = vmatpush.msra.mxu0 %v98
    %930 = vmatpush.msra.mxu0 %v94
    %931 = vmatpush.msra.mxu0 %v90
    %932 = vmatpush.msra.mxu0 %v86
    %933 = vmatpush.msra.mxu0 %v82
    %934 = vmatmul.f32.gmra.mxu0 %v897
    %v935 = vpop.f32.mrf.mxu0
    %v936 = vadd.f32 0.0, %v935
    %937 = vdwg.mxu0
    %938 = vmatpush.msra.mxu0 %v143
    %939 = vmatpush.msra.mxu0 %v139
    %940 = vmatpush.msra.mxu0 %v135
    %941 = vmatpush.msra.mxu0 %v131
    %942 = vmatpush.msra.mxu0 %v127
    %943 = vmatpush.msra.mxu0 %v123
    %944 = vmatpush.msra.mxu0 %v119
    %945 = vmatpush.msra.mxu0 %v115
    %946 = vmatpush.msra.mxu0 %v111
    %947 = vmatpush.msra.mxu0 %v107
    %948 = vmatpush.msra.mxu0 %v103
    %949 = vmatpush.msra.mxu0 %v99
    %950 = vmatpush.msra.mxu0 %v95
    %951 = vmatpush.msra.mxu0 %v91
    %952 = vmatpush.msra.mxu0 %v87
    %953 = vmatpush.msra.mxu0 %v83
    %954 = vmatmul.f32.gmra.mxu0 %v897
    %v955 = vpop.f32.mrf.mxu0
    %v956 = vadd.f32 0.0, %v955
    %957 = vdwg.mxu0
    %958 = vmatpush.msra.mxu0 %v144
    %959 = vmatpush.msra.mxu0 %v140
    %960 = vmatpush.msra.mxu0 %v136
    %961 = vmatpush.msra.mxu0 %v132
    %962 = vmatpush.msra.mxu0 %v128
    %963 = vmatpush.msra.mxu0 %v124
    %964 = vmatpush.msra.mxu0 %v120
    %965 = vmatpush.msra.mxu0 %v116
    %966 = vmatpush.msra.mxu0 %v112
    %967 = vmatpush.msra.mxu0 %v108
    %968 = vmatpush.msra.mxu0 %v104
    %969 = vmatpush.msra.mxu0 %v100
    %970 = vmatpush.msra.mxu0 %v96
    %971 = vmatpush.msra.mxu0 %v92
    %972 = vmatpush.msra.mxu0 %v88
    %973 = vmatpush.msra.mxu0 %v84
    %974 = vmatmul.f32.gmra.mxu0 %v897
    %v975 = vpop.f32.mrf.mxu0
    %v976 = vadd.f32 0.0, %v975
    %977 = vdwg.mxu0
    %v978 = vadd.f32 %v893, %v916
    %v979 = vadd.f32 %v894, %v936
    %v980 = vadd.f32 %v895, %v956
    %v981 = vadd.f32 %v896, %v976
    %v982 = vmul.f32 %v978, 0.5
    %v983 = vtanh.pop %v982
    %v984 = vadd.f32 %v983, 1.0
    %v985 = vmul.f32 %v984, 0.5
    %v986 = vmul.f32 %v979, 0.5
    %v987 = vtanh.pop %v986
    %v988 = vadd.f32 %v987, 1.0
    %v989 = vmul.f32 %v988, 0.5
    %v990 = vtanh.pop %v980
    %v991 = vmul.f32 %v981, 0.5
    %v992 = vtanh.pop %v991
    %v993 = vadd.f32 %v992, 1.0
    %v994 = vmul.f32 %v993, 0.5
    %v995 = vld [vmem:[#allocation4] sm:$0xff]
    %v996 = vmul.f32 %v989, %v995
    %v997 = vmul.f32 %v985, %v990
    %v998 = vadd.f32 %v996, %v997
    %v999 = vtanh.pop %v998
    %v1000 = vmul.f32 %v994, %v999
    %1001 = vst [vmem:[#allocation4] sm:$0xff] %v998
    %1002 = vst [vmem:[#allocation3] sm:$0xff] %v1000
    %s1003 = scalar_lea.vmem [#allocation13], 32
    %1004 = vst [vmem:[%s1003] sm:$0xff] %v1000
    %s1005 = scalar_lea.vmem [#allocation2], 160
    %v1006 = vld [vmem:[%s1005] sm:$0xff]
    %v1007 = vld [vmem:[%s1005 + $0x8] sm:$0xff]
    %v1008 = vld [vmem:[%s1005 + $0x10] sm:$0xff]
    %v1009 = vld [vmem:[%s1005 + $0x18] sm:$0xff]
    %v1010 = vld [vmem:[#allocation3] sm:$0xff]
    %1011 = vmatpush.msra.mxu0 %v141
    %1012 = vmatpush.msra.mxu0 %v137
    %1013 = vmatpush.msra.mxu0 %v133
    %1014 = vmatpush.msra.mxu0 %v129
    %1015 = vmatpush.msra.mxu0 %v125
    %1016 = vmatpush.msra.mxu0 %v121
    %1017 = vmatpush.msra.mxu0 %v117
    %1018 = vmatpush.msra.mxu0 %v113
    %1019 = vmatpush.msra.mxu0 %v109
    %1020 = vmatpush.msra.mxu0 %v105
    %1021 = vmatpush.msra.mxu0 %v101
    %1022 = vmatpush.msra.mxu0 %v97
    %1023 = vmatpush.msra.mxu0 %v93
    %1024 = vmatpush.msra.mxu0 %v89
    %1025 = vmatpush.msra.mxu0 %v85
    %1026 = vmatpush.msra.mxu0 %v81
    %1027 = vmatmul.f32.gmra.mxu0 %v1010
    %v1028 = vpop.f32.mrf.mxu0
    %v1029 = vadd.f32 0.0, %v1028
    %1030 = vdwg.mxu0
    %1031 = vmatpush.msra.mxu0 %v142
    %1032 = vmatpush.msra.mxu0 %v138
    %1033 = vmatpush.msra.mxu0 %v134
    %1034 = vmatpush.msra.mxu0 %v130
    %1035 = vmatpush.msra.mxu0 %v126
    %1036 = vmatpush.msra.mxu0 %v122
    %1037 = vmatpush.msra.mxu0 %v118
    %1038 = vmatpush.msra.mxu0 %v114
    %1039 = vmatpush.msra.mxu0 %v110
    %1040 = vmatpush.msra.mxu0 %v106
    %1041 = vmatpush.msra.mxu0 %v102
    %1042 = vmatpush.msra.mxu0 %v98
    %1043 = vmatpush.msra.mxu0 %v94
    %1044 = vmatpush.msra.mxu0 %v90
    %1045 = vmatpush.msra.mxu0 %v86
    %1046 = vmatpush.msra.mxu0 %v82
    %1047 = vmatmul.f32.gmra.mxu0 %v1010
    %v1048 = vpop.f32.mrf.mxu0
    %v1049 = vadd.f32 0.0, %v1048
    %1050 = vdwg.mxu0
    %1051 = vmatpush.msra.mxu0 %v143
    %1052 = vmatpush.msra.mxu0 %v139
    %1053 = vmatpush.msra.mxu0 %v135
    %1054 = vmatpush.msra.mxu0 %v131
    %1055 = vmatpush.msra.mxu0 %v127
    %1056 = vmatpush.msra.mxu0 %v123
    %1057 = vmatpush.msra.mxu0 %v119
    %1058 = vmatpush.msra.mxu0 %v115
    %1059 = vmatpush.msra.mxu0 %v111
    %1060 = vmatpush.msra.mxu0 %v107
    %1061 = vmatpush.msra.mxu0 %v103
    %1062 = vmatpush.msra.mxu0 %v99
    %1063 = vmatpush.msra.mxu0 %v95
    %1064 = vmatpush.msra.mxu0 %v91
    %1065 = vmatpush.msra.mxu0 %v87
    %1066 = vmatpush.msra.mxu0 %v83
    %1067 = vmatmul.f32.gmra.mxu0 %v1010
    %v1068 = vpop.f32.mrf.mxu0
    %v1069 = vadd.f32 0.0, %v1068
    %1070 = vdwg.mxu0
    %1071 = vmatpush.msra.mxu0 %v144
    %1072 = vmatpush.msra.mxu0 %v140
    %1073 = vmatpush.msra.mxu0 %v136
    %1074 = vmatpush.msra.mxu0 %v132
    %1075 = vmatpush.msra.mxu0 %v128
    %1076 = vmatpush.msra.mxu0 %v124
    %1077 = vmatpush.msra.mxu0 %v120
    %1078 = vmatpush.msra.mxu0 %v116
    %1079 = vmatpush.msra.mxu0 %v112
    %1080 = vmatpush.msra.mxu0 %v108
    %1081 = vmatpush.msra.mxu0 %v104
    %1082 = vmatpush.msra.mxu0 %v100
    %1083 = vmatpush.msra.mxu0 %v96
    %1084 = vmatpush.msra.mxu0 %v92
    %1085 = vmatpush.msra.mxu0 %v88
    %1086 = vmatpush.msra.mxu0 %v84
    %1087 = vmatmul.f32.gmra.mxu0 %v1010
    %v1088 = vpop.f32.mrf.mxu0
    %v1089 = vadd.f32 0.0, %v1088
    %1090 = vdwg.mxu0
    %v1091 = vadd.f32 %v1006, %v1029
    %v1092 = vadd.f32 %v1007, %v1049
    %v1093 = vadd.f32 %v1008, %v1069
    %v1094 = vadd.f32 %v1009, %v1089
    %v1095 = vmul.f32 %v1091, 0.5
    %v1096 = vtanh.pop %v1095
    %v1097 = vadd.f32 %v1096, 1.0
    %v1098 = vmul.f32 %v1097, 0.5
    %v1099 = vmul.f32 %v1092, 0.5
    %v1100 = vtanh.pop %v1099
    %v1101 = vadd.f32 %v1100, 1.0
    %v1102 = vmul.f32 %v1101, 0.5
    %v1103 = vtanh.pop %v1093
    %v1104 = vmul.f32 %v1094, 0.5
    %v1105 = vtanh.pop %v1104
    %v1106 = vadd.f32 %v1105, 1.0
    %v1107 = vmul.f32 %v1106, 0.5
    %v1108 = vld [vmem:[#allocation4] sm:$0xff]
    %v1109 = vmul.f32 %v1102, %v1108
    %v1110 = vmul.f32 %v1098, %v1103
    %v1111 = vadd.f32 %v1109, %v1110
    %v1112 = vtanh.pop %v1111
    %v1113 = vmul.f32 %v1107, %v1112
    %1114 = vst [vmem:[#allocation4] sm:$0xff] %v1111
    %1115 = vst [vmem:[#allocation3] sm:$0xff] %v1113
    %s1116 = scalar_lea.vmem [#allocation13], 40
    %1117 = vst [vmem:[%s1116] sm:$0xff] %v1113
    %s1118 = scalar_lea.vmem [#allocation2], 192
    %v1119 = vld [vmem:[%s1118] sm:$0xff]
    %v1120 = vld [vmem:[%s1118 + $0x8] sm:$0xff]
    %v1121 = vld [vmem:[%s1118 + $0x10] sm:$0xff]
    %v1122 = vld [vmem:[%s1118 + $0x18] sm:$0xff]
    %v1123 = vld [vmem:[#allocation3] sm:$0xff]
    %1124 = vmatpush.msra.mxu0 %v141
    %1125 = vmatpush.msra.mxu0 %v137
    %1126 = vmatpush.msra.mxu0 %v133
    %1127 = vmatpush.msra.mxu0 %v129
    %1128 = vmatpush.msra.mxu0 %v125
    %1129 = vmatpush.msra.mxu0 %v121
    %1130 = vmatpush.msra.mxu0 %v117
    %1131 = vmatpush.msra.mxu0 %v113
    %1132 = vmatpush.msra.mxu0 %v109
    %1133 = vmatpush.msra.mxu0 %v105
    %1134 = vmatpush.msra.mxu0 %v101
    %1135 = vmatpush.msra.mxu0 %v97
    %1136 = vmatpush.msra.mxu0 %v93
    %1137 = vmatpush.msra.mxu0 %v89
    %1138 = vmatpush.msra.mxu0 %v85
    %1139 = vmatpush.msra.mxu0 %v81
    %1140 = vmatmul.f32.gmra.mxu0 %v1123
    %v1141 = vpop.f32.mrf.mxu0
    %v1142 = vadd.f32 0.0, %v1141
    %1143 = vdwg.mxu0
    %1144 = vmatpush.msra.mxu0 %v142
    %1145 = vmatpush.msra.mxu0 %v138
    %1146 = vmatpush.msra.mxu0 %v134
    %1147 = vmatpush.msra.mxu0 %v130
    %1148 = vmatpush.msra.mxu0 %v126
    %1149 = vmatpush.msra.mxu0 %v122
    %1150 = vmatpush.msra.mxu0 %v118
    %1151 = vmatpush.msra.mxu0 %v114
    %1152 = vmatpush.msra.mxu0 %v110
    %1153 = vmatpush.msra.mxu0 %v106
    %1154 = vmatpush.msra.mxu0 %v102
    %1155 = vmatpush.msra.mxu0 %v98
    %1156 = vmatpush.msra.mxu0 %v94
    %1157 = vmatpush.msra.mxu0 %v90
    %1158 = vmatpush.msra.mxu0 %v86
    %1159 = vmatpush.msra.mxu0 %v82
    %1160 = vmatmul.f32.gmra.mxu0 %v1123
    %v1161 = vpop.f32.mrf.mxu0
    %v1162 = vadd.f32 0.0, %v1161
    %1163 = vdwg.mxu0
    %1164 = vmatpush.msra.mxu0 %v143
    %1165 = vmatpush.msra.mxu0 %v139
    %1166 = vmatpush.msra.mxu0 %v135
    %1167 = vmatpush.msra.mxu0 %v131
    %1168 = vmatpush.msra.mxu0 %v127
    %1169 = vmatpush.msra.mxu0 %v123
    %1170 = vmatpush.msra.mxu0 %v119
    %1171 = vmatpush.msra.mxu0 %v115
    %1172 = vmatpush.msra.mxu0 %v111
    %1173 = vmatpush.msra.mxu0 %v107
    %1174 = vmatpush.msra.mxu0 %v103
    %1175 = vmatpush.msra.mxu0 %v99
    %1176 = vmatpush.msra.mxu0 %v95
    %1177 = vmatpush.msra.mxu0 %v91
    %1178 = vmatpush.msra.mxu0 %v87
    %1179 = vmatpush.msra.mxu0 %v83
    %1180 = vmatmul.f32.gmra.mxu0 %v1123
    %v1181 = vpop.f32.mrf.mxu0
    %v1182 = vadd.f32 0.0, %v1181
    %1183 = vdwg.mxu0
    %1184 = vmatpush.msra.mxu0 %v144
    %1185 = vmatpush.msra.mxu0 %v140
    %1186 = vmatpush.msra.mxu0 %v136
    %1187 = vmatpush.msra.mxu0 %v132
    %1188 = vmatpush.msra.mxu0 %v128
    %1189 = vmatpush.msra.mxu0 %v124
    %1190 = vmatpush.msra.mxu0 %v120
    %1191 = vmatpush.msra.mxu0 %v116
    %1192 = vmatpush.msra.mxu0 %v112
    %1193 = vmatpush.msra.mxu0 %v108
    %1194 = vmatpush.msra.mxu0 %v104
    %1195 = vmatpush.msra.mxu0 %v100
    %1196 = vmatpush.msra.mxu0 %v96
    %1197 = vmatpush.msra.mxu0 %v92
    %1198 = vmatpush.msra.mxu0 %v88
    %1199 = vmatpush.msra.mxu0 %v84
    %1200 = vmatmul.f32.gmra.mxu0 %v1123
    %v1201 = vpop.f32.mrf.mxu0
    %v1202 = vadd.f32 0.0, %v1201
    %1203 = vdwg.mxu0
    %v1204 = vadd.f32 %v1119, %v1142
    %v1205 = vadd.f32 %v1120, %v1162
    %v1206 = vadd.f32 %v1121, %v1182
    %v1207 = vadd.f32 %v1122, %v1202
    %v1208 = vmul.f32 %v1204, 0.5
    %v1209 = vtanh.pop %v1208
    %v1210 = vadd.f32 %v1209, 1.0
    %v1211 = vmul.f32 %v1210, 0.5
    %v1212 = vmul.f32 %v1205, 0.5
    %v1213 = vtanh.pop %v1212
    %v1214 = vadd.f32 %v1213, 1.0
    %v1215 = vmul.f32 %v1214, 0.5
    %v1216 = vtanh.pop %v1206
    %v1217 = vmul.f32 %v1207, 0.5
    %v1218 = vtanh.pop %v1217
    %v1219 = vadd.f32 %v1218, 1.0
    %v1220 = vmul.f32 %v1219, 0.5
    %v1221 = vld [vmem:[#allocation4] sm:$0xff]
    %v1222 = vmul.f32 %v1215, %v1221
    %v1223 = vmul.f32 %v1211, %v1216
    %v1224 = vadd.f32 %v1222, %v1223
    %v1225 = vtanh.pop %v1224
    %v1226 = vmul.f32 %v1220, %v1225
    %1227 = vst [vmem:[#allocation4] sm:$0xff] %v1224
    %1228 = vst [vmem:[#allocation3] sm:$0xff] %v1226
    %s1229 = scalar_lea.vmem [#allocation13], 48
    %1230 = vst [vmem:[%s1229] sm:$0xff] %v1226
    %s1231 = scalar_lea.vmem [#allocation2], 224
    %v1232 = vld [vmem:[%s1231] sm:$0xff]
    %v1233 = vld [vmem:[%s1231 + $0x8] sm:$0xff]
    %v1234 = vld [vmem:[%s1231 + $0x10] sm:$0xff]
    %v1235 = vld [vmem:[%s1231 + $0x18] sm:$0xff]
    %v1236 = vld [vmem:[#allocation3] sm:$0xff]
    %1237 = vmatpush.msra.mxu0 %v141
    %1238 = vmatpush.msra.mxu0 %v137
    %1239 = vmatpush.msra.mxu0 %v133
    %1240 = vmatpush.msra.mxu0 %v129
    %1241 = vmatpush.msra.mxu0 %v125
    %1242 = vmatpush.msra.mxu0 %v121
    %1243 = vmatpush.msra.mxu0 %v117
    %1244 = vmatpush.msra.mxu0 %v113
    %1245 = vmatpush.msra.mxu0 %v109
    %1246 = vmatpush.msra.mxu0 %v105
    %1247 = vmatpush.msra.mxu0 %v101
    %1248 = vmatpush.msra.mxu0 %v97
    %1249 = vmatpush.msra.mxu0 %v93
    %1250 = vmatpush.msra.mxu0 %v89
    %1251 = vmatpush.msra.mxu0 %v85
    %1252 = vmatpush.msra.mxu0 %v81
    %1253 = vmatmul.f32.gmra.mxu0 %v1236
    %v1254 = vpop.f32.mrf.mxu0
    %v1255 = vadd.f32 0.0, %v1254
    %1256 = vdwg.mxu0
    %1257 = vmatpush.msra.mxu0 %v142
    %1258 = vmatpush.msra.mxu0 %v138
    %1259 = vmatpush.msra.mxu0 %v134
    %1260 = vmatpush.msra.mxu0 %v130
    %1261 = vmatpush.msra.mxu0 %v126
    %1262 = vmatpush.msra.mxu0 %v122
    %1263 = vmatpush.msra.mxu0 %v118
    %1264 = vmatpush.msra.mxu0 %v114
    %1265 = vmatpush.msra.mxu0 %v110
    %1266 = vmatpush.msra.mxu0 %v106
    %1267 = vmatpush.msra.mxu0 %v102
    %1268 = vmatpush.msra.mxu0 %v98
    %1269 = vmatpush.msra.mxu0 %v94
    %1270 = vmatpush.msra.mxu0 %v90
    %1271 = vmatpush.msra.mxu0 %v86
    %1272 = vmatpush.msra.mxu0 %v82
    %1273 = vmatmul.f32.gmra.mxu0 %v1236
    %v1274 = vpop.f32.mrf.mxu0
    %v1275 = vadd.f32 0.0, %v1274
    %1276 = vdwg.mxu0
    %1277 = vmatpush.msra.mxu0 %v143
    %1278 = vmatpush.msra.mxu0 %v139
    %1279 = vmatpush.msra.mxu0 %v135
    %1280 = vmatpush.msra.mxu0 %v131
    %1281 = vmatpush.msra.mxu0 %v127
    %1282 = vmatpush.msra.mxu0 %v123
    %1283 = vmatpush.msra.mxu0 %v119
    %1284 = vmatpush.msra.mxu0 %v115
    %1285 = vmatpush.msra.mxu0 %v111
    %1286 = vmatpush.msra.mxu0 %v107
    %1287 = vmatpush.msra.mxu0 %v103
    %1288 = vmatpush.msra.mxu0 %v99
    %1289 = vmatpush.msra.mxu0 %v95
    %1290 = vmatpush.msra.mxu0 %v91
    %1291 = vmatpush.msra.mxu0 %v87
    %1292 = vmatpush.msra.mxu0 %v83
    %1293 = vmatmul.f32.gmra.mxu0 %v1236
    %v1294 = vpop.f32.mrf.mxu0
    %v1295 = vadd.f32 0.0, %v1294
    %1296 = vdwg.mxu0
    %1297 = vmatpush.msra.mxu0 %v144
    %1298 = vmatpush.msra.mxu0 %v140
    %1299 = vmatpush.msra.mxu0 %v136
    %1300 = vmatpush.msra.mxu0 %v132
    %1301 = vmatpush.msra.mxu0 %v128
    %1302 = vmatpush.msra.mxu0 %v124
    %1303 = vmatpush.msra.mxu0 %v120
    %1304 = vmatpush.msra.mxu0 %v116
    %1305 = vmatpush.msra.mxu0 %v112
    %1306 = vmatpush.msra.mxu0 %v108
    %1307 = vmatpush.msra.mxu0 %v104
    %1308 = vmatpush.msra.mxu0 %v100
    %1309 = vmatpush.msra.mxu0 %v96
    %1310 = vmatpush.msra.mxu0 %v92
    %1311 = vmatpush.msra.mxu0 %v88
    %1312 = vmatpush.msra.mxu0 %v84
    %1313 = vmatmul.f32.gmra.mxu0 %v1236
    %v1314 = vpop.f32.mrf.mxu0
    %v1315 = vadd.f32 0.0, %v1314
    %1316 = vdwg.mxu0
    %v1317 = vadd.f32 %v1232, %v1255
    %v1318 = vadd.f32 %v1233, %v1275
    %v1319 = vadd.f32 %v1234, %v1295
    %v1320 = vadd.f32 %v1235, %v1315
    %v1321 = vmul.f32 %v1317, 0.5
    %v1322 = vtanh.pop %v1321
    %v1323 = vadd.f32 %v1322, 1.0
    %v1324 = vmul.f32 %v1323, 0.5
    %v1325 = vmul.f32 %v1318, 0.5
    %v1326 = vtanh.pop %v1325
    %v1327 = vadd.f32 %v1326, 1.0
    %v1328 = vmul.f32 %v1327, 0.5
    %v1329 = vtanh.pop %v1319
    %v1330 = vmul.f32 %v1320, 0.5
    %v1331 = vtanh.pop %v1330
    %v1332 = vadd.f32 %v1331, 1.0
    %v1333 = vmul.f32 %v1332, 0.5
    %v1334 = vld [vmem:[#allocation4] sm:$0xff]
    %v1335 = vmul.f32 %v1328, %v1334
    %v1336 = vmul.f32 %v1324, %v1329
    %v1337 = vadd.f32 %v1335, %v1336
    %v1338 = vtanh.pop %v1337
    %v1339 = vmul.f32 %v1333, %v1338
    %1340 = vst [vmem:[#allocation4] sm:$0xff] %v1337
    %1341 = vst [vmem:[#allocation3] sm:$0xff] %v1339
    %s1342 = scalar_lea.vmem [#allocation13], 56
    %1343 = vst [vmem:[%s1342] sm:$0xff] %v1339
    %s1344 = scalar_lea.vmem [#allocation2], 256
    %v1345 = vld [vmem:[%s1344] sm:$0xff]
    %v1346 = vld [vmem:[%s1344 + $0x8] sm:$0xff]
    %v1347 = vld [vmem:[%s1344 + $0x10] sm:$0xff]
    %v1348 = vld [vmem:[%s1344 + $0x18] sm:$0xff]
    %v1349 = vld [vmem:[#allocation3] sm:$0xff]
    %1350 = vmatpush.msra.mxu0 %v141
    %1351 = vmatpush.msra.mxu0 %v137
    %1352 = vmatpush.msra.mxu0 %v133
    %1353 = vmatpush.msra.mxu0 %v129
    %1354 = vmatpush.msra.mxu0 %v125
    %1355 = vmatpush.msra.mxu0 %v121
    %1356 = vmatpush.msra.mxu0 %v117
    %1357 = vmatpush.msra.mxu0 %v113
    %1358 = vmatpush.msra.mxu0 %v109
    %1359 = vmatpush.msra.mxu0 %v105
    %1360 = vmatpush.msra.mxu0 %v101
    %1361 = vmatpush.msra.mxu0 %v97
    %1362 = vmatpush.msra.mxu0 %v93
    %1363 = vmatpush.msra.mxu0 %v89
    %1364 = vmatpush.msra.mxu0 %v85
    %1365 = vmatpush.msra.mxu0 %v81
    %1366 = vmatmul.f32.gmra.mxu0 %v1349
    %v1367 = vpop.f32.mrf.mxu0
    %v1368 = vadd.f32 0.0, %v1367
    %1369 = vdwg.mxu0
    %1370 = vmatpush.msra.mxu0 %v142
    %1371 = vmatpush.msra.mxu0 %v138
    %1372 = vmatpush.msra.mxu0 %v134
    %1373 = vmatpush.msra.mxu0 %v130
    %1374 = vmatpush.msra.mxu0 %v126
    %1375 = vmatpush.msra.mxu0 %v122
    %1376 = vmatpush.msra.mxu0 %v118
    %1377 = vmatpush.msra.mxu0 %v114
    %1378 = vmatpush.msra.mxu0 %v110
    %1379 = vmatpush.msra.mxu0 %v106
    %1380 = vmatpush.msra.mxu0 %v102
    %1381 = vmatpush.msra.mxu0 %v98
    %1382 = vmatpush.msra.mxu0 %v94
    %1383 = vmatpush.msra.mxu0 %v90
    %1384 = vmatpush.msra.mxu0 %v86
    %1385 = vmatpush.msra.mxu0 %v82
    %1386 = vmatmul.f32.gmra.mxu0 %v1349
    %v1387 = vpop.f32.mrf.mxu0
    %v1388 = vadd.f32 0.0, %v1387
    %1389 = vdwg.mxu0
    %1390 = vmatpush.msra.mxu0 %v143
    %1391 = vmatpush.msra.mxu0 %v139
    %1392 = vmatpush.msra.mxu0 %v135
    %1393 = vmatpush.msra.mxu0 %v131
    %1394 = vmatpush.msra.mxu0 %v127
    %1395 = vmatpush.msra.mxu0 %v123
    %1396 = vmatpush.msra.mxu0 %v119
    %1397 = vmatpush.msra.mxu0 %v115
    %1398 = vmatpush.msra.mxu0 %v111
    %1399 = vmatpush.msra.mxu0 %v107
    %1400 = vmatpush.msra.mxu0 %v103
    %1401 = vmatpush.msra.mxu0 %v99
    %1402 = vmatpush.msra.mxu0 %v95
    %1403 = vmatpush.msra.mxu0 %v91
    %1404 = vmatpush.msra.mxu0 %v87
    %1405 = vmatpush.msra.mxu0 %v83
    %1406 = vmatmul.f32.gmra.mxu0 %v1349
    %v1407 = vpop.f32.mrf.mxu0
    %v1408 = vadd.f32 0.0, %v1407
    %1409 = vdwg.mxu0
    %1410 = vmatpush.msra.mxu0 %v144
    %1411 = vmatpush.msra.mxu0 %v140
    %1412 = vmatpush.msra.mxu0 %v136
    %1413 = vmatpush.msra.mxu0 %v132
    %1414 = vmatpush.msra.mxu0 %v128
    %1415 = vmatpush.msra.mxu0 %v124
    %1416 = vmatpush.msra.mxu0 %v120
    %1417 = vmatpush.msra.mxu0 %v116
    %1418 = vmatpush.msra.mxu0 %v112
    %1419 = vmatpush.msra.mxu0 %v108
    %1420 = vmatpush.msra.mxu0 %v104
    %1421 = vmatpush.msra.mxu0 %v100
    %1422 = vmatpush.msra.mxu0 %v96
    %1423 = vmatpush.msra.mxu0 %v92
    %1424 = vmatpush.msra.mxu0 %v88
    %1425 = vmatpush.msra.mxu0 %v84
    %1426 = vmatmul.f32.gmra.mxu0 %v1349
    %v1427 = vpop.f32.mrf.mxu0
    %v1428 = vadd.f32 0.0, %v1427
    %1429 = vdwg.mxu0
    %v1430 = vadd.f32 %v1345, %v1368
    %v1431 = vadd.f32 %v1346, %v1388
    %v1432 = vadd.f32 %v1347, %v1408
    %v1433 = vadd.f32 %v1348, %v1428
    %v1434 = vmul.f32 %v1430, 0.5
    %v1435 = vtanh.pop %v1434
    %v1436 = vadd.f32 %v1435, 1.0
    %v1437 = vmul.f32 %v1436, 0.5
    %v1438 = vmul.f32 %v1431, 0.5
    %v1439 = vtanh.pop %v1438
    %v1440 = vadd.f32 %v1439, 1.0
    %v1441 = vmul.f32 %v1440, 0.5
    %v1442 = vtanh.pop %v1432
    %v1443 = vmul.f32 %v1433, 0.5
    %v1444 = vtanh.pop %v1443
    %v1445 = vadd.f32 %v1444, 1.0
    %v1446 = vmul.f32 %v1445, 0.5
    %v1447 = vld [vmem:[#allocation4] sm:$0xff]
    %v1448 = vmul.f32 %v1441, %v1447
    %v1449 = vmul.f32 %v1437, %v1442
    %v1450 = vadd.f32 %v1448, %v1449
    %v1451 = vtanh.pop %v1450
    %v1452 = vmul.f32 %v1446, %v1451
    %1453 = vst [vmem:[#allocation4] sm:$0xff] %v1450
    %1454 = vst [vmem:[#allocation3] sm:$0xff] %v1452
    %s1455 = scalar_lea.vmem [#allocation13], 64
    %1456 = vst [vmem:[%s1455] sm:$0xff] %v1452
    %s1457 = scalar_lea.vmem [#allocation10], 512
    %v1458 = vld [vmem:[%s1457] sm:$0xff]
    %v1459 = vld [vmem:[%s1457 + $0x8] sm:$0xff]
    %v1460 = vld [vmem:[%s1457 + $0x10] sm:$0xff]
    %v1461 = vld [vmem:[%s1457 + $0x18] sm:$0xff]
    %v1462 = vld [vmem:[%s1457 + $0x20] sm:$0xff]
    %v1463 = vld [vmem:[%s1457 + $0x28] sm:$0xff]
    %v1464 = vld [vmem:[%s1457 + $0x30] sm:$0xff]
    %v1465 = vld [vmem:[%s1457 + $0x38] sm:$0xff]
    %v1466 = vld [vmem:[%s1457 + $0x40] sm:$0xff]
    %v1467 = vld [vmem:[%s1457 + $0x48] sm:$0xff]
    %v1468 = vld [vmem:[%s1457 + $0x50] sm:$0xff]
    %v1469 = vld [vmem:[%s1457 + $0x58] sm:$0xff]
    %v1470 = vld [vmem:[%s1457 + $0x60] sm:$0xff]
    %v1471 = vld [vmem:[%s1457 + $0x68] sm:$0xff]
    %v1472 = vld [vmem:[%s1457 + $0x70] sm:$0xff]
    %v1473 = vld [vmem:[%s1457 + $0x78] sm:$0xff]
    %v1474 = vld [vmem:[%s1457 + $0x80] sm:$0xff]
    %v1475 = vld [vmem:[%s1457 + $0x88] sm:$0xff]
    %v1476 = vld [vmem:[%s1457 + $0x90] sm:$0xff]
    %v1477 = vld [vmem:[%s1457 + $0x98] sm:$0xff]
    %v1478 = vld [vmem:[%s1457 + $0xa0] sm:$0xff]
    %v1479 = vld [vmem:[%s1457 + $0xa8] sm:$0xff]
    %v1480 = vld [vmem:[%s1457 + $0xb0] sm:$0xff]
    %v1481 = vld [vmem:[%s1457 + $0xb8] sm:$0xff]
    %v1482 = vld [vmem:[%s1457 + $0xc0] sm:$0xff]
    %v1483 = vld [vmem:[%s1457 + $0xc8] sm:$0xff]
    %v1484 = vld [vmem:[%s1457 + $0xd0] sm:$0xff]
    %v1485 = vld [vmem:[%s1457 + $0xd8] sm:$0xff]
    %v1486 = vld [vmem:[%s1457 + $0xe0] sm:$0xff]
    %v1487 = vld [vmem:[%s1457 + $0xe8] sm:$0xff]
    %v1488 = vld [vmem:[%s1457 + $0xf0] sm:$0xff]
    %v1489 = vld [vmem:[%s1457 + $0xf8] sm:$0xff]
    %v1490 = vld [vmem:[%s1457 + $0x100] sm:$0xff]
    %v1491 = vld [vmem:[%s1457 + $0x108] sm:$0xff]
    %v1492 = vld [vmem:[%s1457 + $0x110] sm:$0xff]
    %v1493 = vld [vmem:[%s1457 + $0x118] sm:$0xff]
    %v1494 = vld [vmem:[%s1457 + $0x120] sm:$0xff]
    %v1495 = vld [vmem:[%s1457 + $0x128] sm:$0xff]
    %v1496 = vld [vmem:[%s1457 + $0x130] sm:$0xff]
    %v1497 = vld [vmem:[%s1457 + $0x138] sm:$0xff]
    %v1498 = vld [vmem:[%s1457 + $0x140] sm:$0xff]
    %v1499 = vld [vmem:[%s1457 + $0x148] sm:$0xff]
    %v1500 = vld [vmem:[%s1457 + $0x150] sm:$0xff]
    %v1501 = vld [vmem:[%s1457 + $0x158] sm:$0xff]
    %v1502 = vld [vmem:[%s1457 + $0x160] sm:$0xff]
    %v1503 = vld [vmem:[%s1457 + $0x168] sm:$0xff]
    %v1504 = vld [vmem:[%s1457 + $0x170] sm:$0xff]
    %v1505 = vld [vmem:[%s1457 + $0x178] sm:$0xff]
    %v1506 = vld [vmem:[%s1457 + $0x180] sm:$0xff]
    %v1507 = vld [vmem:[%s1457 + $0x188] sm:$0xff]
    %v1508 = vld [vmem:[%s1457 + $0x190] sm:$0xff]
    %v1509 = vld [vmem:[%s1457 + $0x198] sm:$0xff]
    %v1510 = vld [vmem:[%s1457 + $0x1a0] sm:$0xff]
    %v1511 = vld [vmem:[%s1457 + $0x1a8] sm:$0xff]
    %v1512 = vld [vmem:[%s1457 + $0x1b0] sm:$0xff]
    %v1513 = vld [vmem:[%s1457 + $0x1b8] sm:$0xff]
    %v1514 = vld [vmem:[%s1457 + $0x1c0] sm:$0xff]
    %v1515 = vld [vmem:[%s1457 + $0x1c8] sm:$0xff]
    %v1516 = vld [vmem:[%s1457 + $0x1d0] sm:$0xff]
    %v1517 = vld [vmem:[%s1457 + $0x1d8] sm:$0xff]
    %v1518 = vld [vmem:[%s1457 + $0x1e0] sm:$0xff]
    %v1519 = vld [vmem:[%s1457 + $0x1e8] sm:$0xff]
    %v1520 = vld [vmem:[%s1457 + $0x1f0] sm:$0xff]
    %v1521 = vld [vmem:[%s1457 + $0x1f8] sm:$0xff]
    %v1522 = vld [vmem:[#allocation13] sm:$0xff]
    %v1523 = vld [vmem:[#allocation13 + $0x8] sm:$0xff]
    %v1524 = vld [vmem:[#allocation13 + $0x10] sm:$0xff]
    %v1525 = vld [vmem:[#allocation13 + $0x18] sm:$0xff]
    %v1526 = vld [vmem:[#allocation13 + $0x20] sm:$0xff]
    %v1527 = vld [vmem:[#allocation13 + $0x28] sm:$0xff]
    %v1528 = vld [vmem:[#allocation13 + $0x30] sm:$0xff]
    %v1529 = vld [vmem:[#allocation13 + $0x38] sm:$0xff]
    %v1530 = vld [vmem:[#allocation13 + $0x40] sm:$0xff]
    %s1531 = scalar_lea.vmem [#allocation8], 512
    %v1532 = vld [vmem:[%s1531] sm:$0xff]
    %v1533 = vld [vmem:[%s1531 + $0x8] sm:$0xff]
    %v1534 = vld [vmem:[%s1531 + $0x10] sm:$0xff]
    %v1535 = vld [vmem:[%s1531 + $0x18] sm:$0xff]
    %v1536 = vld [vmem:[%s1531 + $0x20] sm:$0xff]
    %v1537 = vld [vmem:[%s1531 + $0x28] sm:$0xff]
    %v1538 = vld [vmem:[%s1531 + $0x30] sm:$0xff]
    %v1539 = vld [vmem:[%s1531 + $0x38] sm:$0xff]
    %v1540 = vld [vmem:[%s1531 + $0x40] sm:$0xff]
    %v1541 = vld [vmem:[%s1531 + $0x48] sm:$0xff]
    %v1542 = vld [vmem:[%s1531 + $0x50] sm:$0xff]
    %v1543 = vld [vmem:[%s1531 + $0x58] sm:$0xff]
    %v1544 = vld [vmem:[%s1531 + $0x60] sm:$0xff]
    %v1545 = vld [vmem:[%s1531 + $0x68] sm:$0xff]
    %v1546 = vld [vmem:[%s1531 + $0x70] sm:$0xff]
    %v1547 = vld [vmem:[%s1531 + $0x78] sm:$0xff]
    %v1548 = vld [vmem:[%s1531 + $0x80] sm:$0xff]
    %v1549 = vld [vmem:[%s1531 + $0x88] sm:$0xff]
    %v1550 = vld [vmem:[%s1531 + $0x90] sm:$0xff]
    %v1551 = vld [vmem:[%s1531 + $0x98] sm:$0xff]
    %v1552 = vld [vmem:[%s1531 + $0xa0] sm:$0xff]
    %v1553 = vld [vmem:[%s1531 + $0xa8] sm:$0xff]
    %v1554 = vld [vmem:[%s1531 + $0xb0] sm:$0xff]
    %v1555 = vld [vmem:[%s1531 + $0xb8] sm:$0xff]
    %v1556 = vld [vmem:[%s1531 + $0xc0] sm:$0xff]
    %v1557 = vld [vmem:[%s1531 + $0xc8] sm:$0xff]
    %v1558 = vld [vmem:[%s1531 + $0xd0] sm:$0xff]
    %v1559 = vld [vmem:[%s1531 + $0xd8] sm:$0xff]
    %v1560 = vld [vmem:[%s1531 + $0xe0] sm:$0xff]
    %v1561 = vld [vmem:[%s1531 + $0xe8] sm:$0xff]
    %v1562 = vld [vmem:[%s1531 + $0xf0] sm:$0xff]
    %v1563 = vld [vmem:[%s1531 + $0xf8] sm:$0xff]
    %v1564 = vld [vmem:[%s1531 + $0x100] sm:$0xff]
    %v1565 = vld [vmem:[%s1531 + $0x108] sm:$0xff]
    %v1566 = vld [vmem:[%s1531 + $0x110] sm:$0xff]
    %v1567 = vld [vmem:[%s1531 + $0x118] sm:$0xff]
    %v1568 = vld [vmem:[%s1531 + $0x120] sm:$0xff]
    %v1569 = vld [vmem:[%s1531 + $0x128] sm:$0xff]
    %v1570 = vld [vmem:[%s1531 + $0x130] sm:$0xff]
    %v1571 = vld [vmem:[%s1531 + $0x138] sm:$0xff]
    %v1572 = vld [vmem:[%s1531 + $0x140] sm:$0xff]
    %v1573 = vld [vmem:[%s1531 + $0x148] sm:$0xff]
    %v1574 = vld [vmem:[%s1531 + $0x150] sm:$0xff]
    %v1575 = vld [vmem:[%s1531 + $0x158] sm:$0xff]
    %v1576 = vld [vmem:[%s1531 + $0x160] sm:$0xff]
    %v1577 = vld [vmem:[%s1531 + $0x168] sm:$0xff]
    %v1578 = vld [vmem:[%s1531 + $0x170] sm:$0xff]
    %v1579 = vld [vmem:[%s1531 + $0x178] sm:$0xff]
    %v1580 = vld [vmem:[%s1531 + $0x180] sm:$0xff]
    %v1581 = vld [vmem:[%s1531 + $0x188] sm:$0xff]
    %v1582 = vld [vmem:[%s1531 + $0x190] sm:$0xff]
    %v1583 = vld [vmem:[%s1531 + $0x198] sm:$0xff]
    %v1584 = vld [vmem:[%s1531 + $0x1a0] sm:$0xff]
    %v1585 = vld [vmem:[%s1531 + $0x1a8] sm:$0xff]
    %v1586 = vld [vmem:[%s1531 + $0x1b0] sm:$0xff]
    %v1587 = vld [vmem:[%s1531 + $0x1b8] sm:$0xff]
    %v1588 = vld [vmem:[%s1531 + $0x1c0] sm:$0xff]
    %v1589 = vld [vmem:[%s1531 + $0x1c8] sm:$0xff]
    %v1590 = vld [vmem:[%s1531 + $0x1d0] sm:$0xff]
    %v1591 = vld [vmem:[%s1531 + $0x1d8] sm:$0xff]
    %v1592 = vld [vmem:[%s1531 + $0x1e0] sm:$0xff]
    %v1593 = vld [vmem:[%s1531 + $0x1e8] sm:$0xff]
    %v1594 = vld [vmem:[%s1531 + $0x1f0] sm:$0xff]
    %v1595 = vld [vmem:[%s1531 + $0x1f8] sm:$0xff]
    %s1596 = scalar_lea.vmem [#allocation11], 4
    %v1597 = vld [vmem:[%s1596] sm:$0xf]
    %v1599 = vperm.slane %v1597, 0
    %v1600 = vperm.slane %v1597, 1
    %v1601 = vperm.slane %v1597, 2
    %v1602 = vperm.slane %v1597, 3
    %1607 = vmatpush.msra.mxu0 %v1592
    %1608 = vmatpush.msra.mxu0 %v1588
    %1609 = vmatpush.msra.mxu0 %v1584
    %1610 = vmatpush.msra.mxu0 %v1580
    %1611 = vmatpush.msra.mxu0 %v1576
    %1612 = vmatpush.msra.mxu0 %v1572
    %1613 = vmatpush.msra.mxu0 %v1568
    %1614 = vmatpush.msra.mxu0 %v1564
    %1615 = vmatpush.msra.mxu0 %v1560
    %1616 = vmatpush.msra.mxu0 %v1556
    %1617 = vmatpush.msra.mxu0 %v1552
    %1618 = vmatpush.msra.mxu0 %v1548
    %1619 = vmatpush.msra.mxu0 %v1544
    %1620 = vmatpush.msra.mxu0 %v1540
    %1621 = vmatpush.msra.mxu0 %v1536
    %1622 = vmatpush.msra.mxu0 %v1532
    %1623 = vmatmul.f32.gmra.mxu0 %v1522
    %v1624 = vpop.f32.mrf.mxu0
    %v1625 = vadd.f32 %v1599, %v1624
    %1626 = vmatmul.f32.gmra.mxu0 %v1523
    %v1627 = vpop.f32.mrf.mxu0
    %v1628 = vadd.f32 %v1599, %v1627
    %1629 = vmatmul.f32.gmra.mxu0 %v1524
    %v1630 = vpop.f32.mrf.mxu0
    %v1631 = vadd.f32 %v1599, %v1630
    %1632 = vmatmul.f32.gmra.mxu0 %v1525
    %v1633 = vpop.f32.mrf.mxu0
    %v1634 = vadd.f32 %v1599, %v1633
    %1635 = vmatmul.f32.gmra.mxu0 %v1526
    %v1636 = vpop.f32.mrf.mxu0
    %v1637 = vadd.f32 %v1599, %v1636
    %1638 = vmatmul.f32.gmra.mxu0 %v1527
    %v1639 = vpop.f32.mrf.mxu0
    %v1640 = vadd.f32 %v1599, %v1639
    %1641 = vmatmul.f32.gmra.mxu0 %v1528
    %v1642 = vpop.f32.mrf.mxu0
    %v1643 = vadd.f32 %v1599, %v1642
    %1644 = vmatmul.f32.gmra.mxu0 %v1529
    %v1645 = vpop.f32.mrf.mxu0
    %v1646 = vadd.f32 %v1599, %v1645
    %1647 = vmatmul.f32.gmra.mxu0 %v1530
    %v1648 = vpop.f32.mrf.mxu0
    %v1649 = vadd.f32 %v1599, %v1648
    %1650 = vdwg.mxu0
    %1651 = vmatpush.msra.mxu0 %v1593
    %1652 = vmatpush.msra.mxu0 %v1589
    %1653 = vmatpush.msra.mxu0 %v1585
    %1654 = vmatpush.msra.mxu0 %v1581
    %1655 = vmatpush.msra.mxu0 %v1577
    %1656 = vmatpush.msra.mxu0 %v1573
    %1657 = vmatpush.msra.mxu0 %v1569
    %1658 = vmatpush.msra.mxu0 %v1565
    %1659 = vmatpush.msra.mxu0 %v1561
    %1660 = vmatpush.msra.mxu0 %v1557
    %1661 = vmatpush.msra.mxu0 %v1553
    %1662 = vmatpush.msra.mxu0 %v1549
    %1663 = vmatpush.msra.mxu0 %v1545
    %1664 = vmatpush.msra.mxu0 %v1541
    %1665 = vmatpush.msra.mxu0 %v1537
    %1666 = vmatpush.msra.mxu0 %v1533
    %1667 = vmatmul.f32.gmra.mxu0 %v1522
    %v1668 = vpop.f32.mrf.mxu0
    %v1669 = vadd.f32 %v1600, %v1668
    %1670 = vmatmul.f32.gmra.mxu0 %v1523
    %v1671 = vpop.f32.mrf.mxu0
    %v1672 = vadd.f32 %v1600, %v1671
    %1673 = vmatmul.f32.gmra.mxu0 %v1524
    %v1674 = vpop.f32.mrf.mxu0
    %v1675 = vadd.f32 %v1600, %v1674
    %1676 = vmatmul.f32.gmra.mxu0 %v1525
    %v1677 = vpop.f32.mrf.mxu0
    %v1678 = vadd.f32 %v1600, %v1677
    %1679 = vmatmul.f32.gmra.mxu0 %v1526
    %v1680 = vpop.f32.mrf.mxu0
    %v1681 = vadd.f32 %v1600, %v1680
    %1682 = vmatmul.f32.gmra.mxu0 %v1527
    %v1683 = vpop.f32.mrf.mxu0
    %v1684 = vadd.f32 %v1600, %v1683
    %1685 = vmatmul.f32.gmra.mxu0 %v1528
    %v1686 = vpop.f32.mrf.mxu0
    %v1687 = vadd.f32 %v1600, %v1686
    %1688 = vmatmul.f32.gmra.mxu0 %v1529
    %v1689 = vpop.f32.mrf.mxu0
    %v1690 = vadd.f32 %v1600, %v1689
    %1691 = vmatmul.f32.gmra.mxu0 %v1530
    %v1692 = vpop.f32.mrf.mxu0
    %v1693 = vadd.f32 %v1600, %v1692
    %1694 = vdwg.mxu0
    %1695 = vmatpush.msra.mxu0 %v1594
    %1696 = vmatpush.msra.mxu0 %v1590
    %1697 = vmatpush.msra.mxu0 %v1586
    %1698 = vmatpush.msra.mxu0 %v1582
    %1699 = vmatpush.msra.mxu0 %v1578
    %1700 = vmatpush.msra.mxu0 %v1574
    %1701 = vmatpush.msra.mxu0 %v1570
    %1702 = vmatpush.msra.mxu0 %v1566
    %1703 = vmatpush.msra.mxu0 %v1562
    %1704 = vmatpush.msra.mxu0 %v1558
    %1705 = vmatpush.msra.mxu0 %v1554
    %1706 = vmatpush.msra.mxu0 %v1550
    %1707 = vmatpush.msra.mxu0 %v1546
    %1708 = vmatpush.msra.mxu0 %v1542
    %1709 = vmatpush.msra.mxu0 %v1538
    %1710 = vmatpush.msra.mxu0 %v1534
    %1711 = vmatmul.f32.gmra.mxu0 %v1522
    %v1712 = vpop.f32.mrf.mxu0
    %v1713 = vadd.f32 %v1601, %v1712
    %1714 = vmatmul.f32.gmra.mxu0 %v1523
    %v1715 = vpop.f32.mrf.mxu0
    %v1716 = vadd.f32 %v1601, %v1715
    %1717 = vmatmul.f32.gmra.mxu0 %v1524
    %v1718 = vpop.f32.mrf.mxu0
    %v1719 = vadd.f32 %v1601, %v1718
    %1720 = vmatmul.f32.gmra.mxu0 %v1525
    %v1721 = vpop.f32.mrf.mxu0
    %v1722 = vadd.f32 %v1601, %v1721
    %1723 = vmatmul.f32.gmra.mxu0 %v1526
    %v1724 = vpop.f32.mrf.mxu0
    %v1725 = vadd.f32 %v1601, %v1724
    %1726 = vmatmul.f32.gmra.mxu0 %v1527
    %v1727 = vpop.f32.mrf.mxu0
    %v1728 = vadd.f32 %v1601, %v1727
    %1729 = vmatmul.f32.gmra.mxu0 %v1528
    %v1730 = vpop.f32.mrf.mxu0
    %v1731 = vadd.f32 %v1601, %v1730
    %1732 = vmatmul.f32.gmra.mxu0 %v1529
    %v1733 = vpop.f32.mrf.mxu0
    %v1734 = vadd.f32 %v1601, %v1733
    %1735 = vmatmul.f32.gmra.mxu0 %v1530
    %v1736 = vpop.f32.mrf.mxu0
    %v1737 = vadd.f32 %v1601, %v1736
    %1738 = vdwg.mxu0
    %1739 = vmatpush.msra.mxu0 %v1595
    %1740 = vmatpush.msra.mxu0 %v1591
    %1741 = vmatpush.msra.mxu0 %v1587
    %1742 = vmatpush.msra.mxu0 %v1583
    %1743 = vmatpush.msra.mxu0 %v1579
    %1744 = vmatpush.msra.mxu0 %v1575
    %1745 = vmatpush.msra.mxu0 %v1571
    %1746 = vmatpush.msra.mxu0 %v1567
    %1747 = vmatpush.msra.mxu0 %v1563
    %1748 = vmatpush.msra.mxu0 %v1559
    %1749 = vmatpush.msra.mxu0 %v1555
    %1750 = vmatpush.msra.mxu0 %v1551
    %1751 = vmatpush.msra.mxu0 %v1547
    %1752 = vmatpush.msra.mxu0 %v1543
    %1753 = vmatpush.msra.mxu0 %v1539
    %1754 = vmatpush.msra.mxu0 %v1535
    %1755 = vmatmul.f32.gmra.mxu0 %v1522
    %v1756 = vpop.f32.mrf.mxu0
    %v1757 = vadd.f32 %v1602, %v1756
    %1758 = vmatmul.f32.gmra.mxu0 %v1523
    %v1759 = vpop.f32.mrf.mxu0
    %v1760 = vadd.f32 %v1602, %v1759
    %1761 = vmatmul.f32.gmra.mxu0 %v1524
    %v1762 = vpop.f32.mrf.mxu0
    %v1763 = vadd.f32 %v1602, %v1762
    %1764 = vmatmul.f32.gmra.mxu0 %v1525
    %v1765 = vpop.f32.mrf.mxu0
    %v1766 = vadd.f32 %v1602, %v1765
    %1767 = vmatmul.f32.gmra.mxu0 %v1526
    %v1768 = vpop.f32.mrf.mxu0
    %v1769 = vadd.f32 %v1602, %v1768
    %1770 = vmatmul.f32.gmra.mxu0 %v1527
    %v1771 = vpop.f32.mrf.mxu0
    %v1772 = vadd.f32 %v1602, %v1771
    %1773 = vmatmul.f32.gmra.mxu0 %v1528
    %v1774 = vpop.f32.mrf.mxu0
    %v1775 = vadd.f32 %v1602, %v1774
    %1776 = vmatmul.f32.gmra.mxu0 %v1529
    %v1777 = vpop.f32.mrf.mxu0
    %v1778 = vadd.f32 %v1602, %v1777
    %1779 = vmatmul.f32.gmra.mxu0 %v1530
    %v1780 = vpop.f32.mrf.mxu0
    %v1781 = vadd.f32 %v1602, %v1780
    %1782 = vdwg.mxu0
    %1783 = vst [vmem:[#allocation2] sm:$0xff] %v1625
    %1784 = vst [vmem:[#allocation2 + $0x8] sm:$0xff] %v1669
    %1785 = vst [vmem:[#allocation2 + $0x10] sm:$0xff] %v1713
    %1786 = vst [vmem:[#allocation2 + $0x18] sm:$0xff] %v1757
    %1787 = vst [vmem:[#allocation2 + $0x20] sm:$0xff] %v1628
    %1788 = vst [vmem:[#allocation2 + $0x28] sm:$0xff] %v1672
    %1789 = vst [vmem:[#allocation2 + $0x30] sm:$0xff] %v1716
    %1790 = vst [vmem:[#allocation2 + $0x38] sm:$0xff] %v1760
    %1791 = vst [vmem:[#allocation2 + $0x40] sm:$0xff] %v1631
    %1792 = vst [vmem:[#allocation2 + $0x48] sm:$0xff] %v1675
    %1793 = vst [vmem:[#allocation2 + $0x50] sm:$0xff] %v1719
    %1794 = vst [vmem:[#allocation2 + $0x58] sm:$0xff] %v1763
    %1795 = vst [vmem:[#allocation2 + $0x60] sm:$0xff] %v1634
    %1796 = vst [vmem:[#allocation2 + $0x68] sm:$0xff] %v1678
    %1797 = vst [vmem:[#allocation2 + $0x70] sm:$0xff] %v1722
    %1798 = vst [vmem:[#allocation2 + $0x78] sm:$0xff] %v1766
    %1799 = vst [vmem:[#allocation2 + $0x80] sm:$0xff] %v1637
    %1800 = vst [vmem:[#allocation2 + $0x88] sm:$0xff] %v1681
    %1801 = vst [vmem:[#allocation2 + $0x90] sm:$0xff] %v1725
    %1802 = vst [vmem:[#allocation2 + $0x98] sm:$0xff] %v1769
    %1803 = vst [vmem:[#allocation2 + $0xa0] sm:$0xff] %v1640
    %1804 = vst [vmem:[#allocation2 + $0xa8] sm:$0xff] %v1684
    %1805 = vst [vmem:[#allocation2 + $0xb0] sm:$0xff] %v1728
    %1806 = vst [vmem:[#allocation2 + $0xb8] sm:$0xff] %v1772
    %1807 = vst [vmem:[#allocation2 + $0xc0] sm:$0xff] %v1643
    %1808 = vst [vmem:[#allocation2 + $0xc8] sm:$0xff] %v1687
    %1809 = vst [vmem:[#allocation2 + $0xd0] sm:$0xff] %v1731
    %1810 = vst [vmem:[#allocation2 + $0xd8] sm:$0xff] %v1775
    %1811 = vst [vmem:[#allocation2 + $0xe0] sm:$0xff] %v1646
    %1812 = vst [vmem:[#allocation2 + $0xe8] sm:$0xff] %v1690
    %1813 = vst [vmem:[#allocation2 + $0xf0] sm:$0xff] %v1734
    %1814 = vst [vmem:[#allocation2 + $0xf8] sm:$0xff] %v1778
    %1815 = vst [vmem:[#allocation2 + $0x100] sm:$0xff] %v1649
    %1816 = vst [vmem:[#allocation2 + $0x108] sm:$0xff] %v1693
    %1817 = vst [vmem:[#allocation2 + $0x110] sm:$0xff] %v1737
    %1818 = vst [vmem:[#allocation2 + $0x118] sm:$0xff] %v1781
    %1819 = vst [vmem:[#allocation3] sm:$0xff] 0.0
    %1820 = vst [vmem:[#allocation4] sm:$0xff] 0.0
    %v1821 = vld [vmem:[#allocation2] sm:$0xff]
    %v1822 = vld [vmem:[#allocation2 + $0x8] sm:$0xff]
    %v1823 = vld [vmem:[#allocation2 + $0x10] sm:$0xff]
    %v1824 = vld [vmem:[#allocation2 + $0x18] sm:$0xff]
    %v1825 = vld [vmem:[#allocation3] sm:$0xff]
    %1826 = vmatpush.msra.mxu0 %v1518
    %1827 = vmatpush.msra.mxu0 %v1514
    %1828 = vmatpush.msra.mxu0 %v1510
    %1829 = vmatpush.msra.mxu0 %v1506
    %1830 = vmatpush.msra.mxu0 %v1502
    %1831 = vmatpush.msra.mxu0 %v1498
    %1832 = vmatpush.msra.mxu0 %v1494
    %1833 = vmatpush.msra.mxu0 %v1490
    %1834 = vmatpush.msra.mxu0 %v1486
    %1835 = vmatpush.msra.mxu0 %v1482
    %1836 = vmatpush.msra.mxu0 %v1478
    %1837 = vmatpush.msra.mxu0 %v1474
    %1838 = vmatpush.msra.mxu0 %v1470
    %1839 = vmatpush.msra.mxu0 %v1466
    %1840 = vmatpush.msra.mxu0 %v1462
    %1841 = vmatpush.msra.mxu0 %v1458
    %1842 = vmatmul.f32.gmra.mxu0 %v1825
    %v1843 = vpop.f32.mrf.mxu0
    %v1844 = vadd.f32 0.0, %v1843
    %1845 = vdwg.mxu0
    %1846 = vmatpush.msra.mxu0 %v1519
    %1847 = vmatpush.msra.mxu0 %v1515
    %1848 = vmatpush.msra.mxu0 %v1511
    %1849 = vmatpush.msra.mxu0 %v1507
    %1850 = vmatpush.msra.mxu0 %v1503
    %1851 = vmatpush.msra.mxu0 %v1499
    %1852 = vmatpush.msra.mxu0 %v1495
    %1853 = vmatpush.msra.mxu0 %v1491
    %1854 = vmatpush.msra.mxu0 %v1487
    %1855 = vmatpush.msra.mxu0 %v1483
    %1856 = vmatpush.msra.mxu0 %v1479
    %1857 = vmatpush.msra.mxu0 %v1475
    %1858 = vmatpush.msra.mxu0 %v1471
    %1859 = vmatpush.msra.mxu0 %v1467
    %1860 = vmatpush.msra.mxu0 %v1463
    %1861 = vmatpush.msra.mxu0 %v1459
    %1862 = vmatmul.f32.gmra.mxu0 %v1825
    %v1863 = vpop.f32.mrf.mxu0
    %v1864 = vadd.f32 0.0, %v1863
    %1865 = vdwg.mxu0
    %1866 = vmatpush.msra.mxu0 %v1520
    %1867 = vmatpush.msra.mxu0 %v1516
    %1868 = vmatpush.msra.mxu0 %v1512
    %1869 = vmatpush.msra.mxu0 %v1508
    %1870 = vmatpush.msra.mxu0 %v1504
    %1871 = vmatpush.msra.mxu0 %v1500
    %1872 = vmatpush.msra.mxu0 %v1496
    %1873 = vmatpush.msra.mxu0 %v1492
    %1874 = vmatpush.msra.mxu0 %v1488
    %1875 = vmatpush.msra.mxu0 %v1484
    %1876 = vmatpush.msra.mxu0 %v1480
    %1877 = vmatpush.msra.mxu0 %v1476
    %1878 = vmatpush.msra.mxu0 %v1472
    %1879 = vmatpush.msra.mxu0 %v1468
    %1880 = vmatpush.msra.mxu0 %v1464
    %1881 = vmatpush.msra.mxu0 %v1460
    %1882 = vmatmul.f32.gmra.mxu0 %v1825
    %v1883 = vpop.f32.mrf.mxu0
    %v1884 = vadd.f32 0.0, %v1883
    %1885 = vdwg.mxu0
    %1886 = vmatpush.msra.mxu0 %v1521
    %1887 = vmatpush.msra.mxu0 %v1517
    %1888 = vmatpush.msra.mxu0 %v1513
    %1889 = vmatpush.msra.mxu0 %v1509
    %1890 = vmatpush.msra.mxu0 %v1505
    %1891 = vmatpush.msra.mxu0 %v1501
    %1892 = vmatpush.msra.mxu0 %v1497
    %1893 = vmatpush.msra.mxu0 %v1493
    %1894 = vmatpush.msra.mxu0 %v1489
    %1895 = vmatpush.msra.mxu0 %v1485
    %1896 = vmatpush.msra.mxu0 %v1481
    %1897 = vmatpush.msra.mxu0 %v1477
    %1898 = vmatpush.msra.mxu0 %v1473
    %1899 = vmatpush.msra.mxu0 %v1469
    %1900 = vmatpush.msra.mxu0 %v1465
    %1901 = vmatpush.msra.mxu0 %v1461
    %1902 = vmatmul.f32.gmra.mxu0 %v1825
    %v1903 = vpop.f32.mrf.mxu0
    %v1904 = vadd.f32 0.0, %v1903
    %1905 = vdwg.mxu0
    %v1906 = vadd.f32 %v1821, %v1844
    %v1907 = vadd.f32 %v1822, %v1864
    %v1908 = vadd.f32 %v1823, %v1884
    %v1909 = vadd.f32 %v1824, %v1904
    %v1910 = vmul.f32 %v1906, 0.5
    %v1911 = vtanh.pop %v1910
    %v1912 = vadd.f32 %v1911, 1.0
    %v1913 = vmul.f32 %v1912, 0.5
    %v1914 = vmul.f32 %v1907, 0.5
    %v1915 = vtanh.pop %v1914
    %v1916 = vadd.f32 %v1915, 1.0
    %v1917 = vmul.f32 %v1916, 0.5
    %v1918 = vtanh.pop %v1908
    %v1919 = vmul.f32 %v1909, 0.5
    %v1920 = vtanh.pop %v1919
    %v1921 = vadd.f32 %v1920, 1.0
    %v1922 = vmul.f32 %v1921, 0.5
    %v1923 = vld [vmem:[#allocation4] sm:$0xff]
    %v1924 = vmul.f32 %v1917, %v1923
    %v1925 = vmul.f32 %v1913, %v1918
    %v1926 = vadd.f32 %v1924, %v1925
    %v1927 = vtanh.pop %v1926
    %v1928 = vmul.f32 %v1922, %v1927
    %1929 = vst [vmem:[#allocation4] sm:$0xff] %v1926
    %1930 = vst [vmem:[#allocation3] sm:$0xff] %v1928
    %1931 = vst [vmem:[#allocation13] sm:$0xff] %v1928
    %v1932 = vld [vmem:[%s553] sm:$0xff]
    %v1933 = vld [vmem:[%s553 + $0x8] sm:$0xff]
    %v1934 = vld [vmem:[%s553 + $0x10] sm:$0xff]
    %v1935 = vld [vmem:[%s553 + $0x18] sm:$0xff]
    %v1936 = vld [vmem:[#allocation3] sm:$0xff]
    %1937 = vmatpush.msra.mxu0 %v1518
    %1938 = vmatpush.msra.mxu0 %v1514
    %1939 = vmatpush.msra.mxu0 %v1510
    %1940 = vmatpush.msra.mxu0 %v1506
    %1941 = vmatpush.msra.mxu0 %v1502
    %1942 = vmatpush.msra.mxu0 %v1498
    %1943 = vmatpush.msra.mxu0 %v1494
    %1944 = vmatpush.msra.mxu0 %v1490
    %1945 = vmatpush.msra.mxu0 %v1486
    %1946 = vmatpush.msra.mxu0 %v1482
    %1947 = vmatpush.msra.mxu0 %v1478
    %1948 = vmatpush.msra.mxu0 %v1474
    %1949 = vmatpush.msra.mxu0 %v1470
    %1950 = vmatpush.msra.mxu0 %v1466
    %1951 = vmatpush.msra.mxu0 %v1462
    %1952 = vmatpush.msra.mxu0 %v1458
    %1953 = vmatmul.f32.gmra.mxu0 %v1936
    %v1954 = vpop.f32.mrf.mxu0
    %v1955 = vadd.f32 0.0, %v1954
    %1956 = vdwg.mxu0
    %1957 = vmatpush.msra.mxu0 %v1519
    %1958 = vmatpush.msra.mxu0 %v1515
    %1959 = vmatpush.msra.mxu0 %v1511
    %1960 = vmatpush.msra.mxu0 %v1507
    %1961 = vmatpush.msra.mxu0 %v1503
    %1962 = vmatpush.msra.mxu0 %v1499
    %1963 = vmatpush.msra.mxu0 %v1495
    %1964 = vmatpush.msra.mxu0 %v1491
    %1965 = vmatpush.msra.mxu0 %v1487
    %1966 = vmatpush.msra.mxu0 %v1483
    %1967 = vmatpush.msra.mxu0 %v1479
    %1968 = vmatpush.msra.mxu0 %v1475
    %1969 = vmatpush.msra.mxu0 %v1471
    %1970 = vmatpush.msra.mxu0 %v1467
    %1971 = vmatpush.msra.mxu0 %v1463
    %1972 = vmatpush.msra.mxu0 %v1459
    %1973 = vmatmul.f32.gmra.mxu0 %v1936
    %v1974 = vpop.f32.mrf.mxu0
    %v1975 = vadd.f32 0.0, %v1974
    %1976 = vdwg.mxu0
    %1977 = vmatpush.msra.mxu0 %v1520
    %1978 = vmatpush.msra.mxu0 %v1516
    %1979 = vmatpush.msra.mxu0 %v1512
    %1980 = vmatpush.msra.mxu0 %v1508
    %1981 = vmatpush.msra.mxu0 %v1504
    %1982 = vmatpush.msra.mxu0 %v1500
    %1983 = vmatpush.msra.mxu0 %v1496
    %1984 = vmatpush.msra.mxu0 %v1492
    %1985 = vmatpush.msra.mxu0 %v1488
    %1986 = vmatpush.msra.mxu0 %v1484
    %1987 = vmatpush.msra.mxu0 %v1480
    %1988 = vmatpush.msra.mxu0 %v1476
    %1989 = vmatpush.msra.mxu0 %v1472
    %1990 = vmatpush.msra.mxu0 %v1468
    %1991 = vmatpush.msra.mxu0 %v1464
    %1992 = vmatpush.msra.mxu0 %v1460
    %1993 = vmatmul.f32.gmra.mxu0 %v1936
    %v1994 = vpop.f32.mrf.mxu0
    %v1995 = vadd.f32 0.0, %v1994
    %1996 = vdwg.mxu0
    %1997 = vmatpush.msra.mxu0 %v1521
    %1998 = vmatpush.msra.mxu0 %v1517
    %1999 = vmatpush.msra.mxu0 %v1513
    %2000 = vmatpush.msra.mxu0 %v1509
    %2001 = vmatpush.msra.mxu0 %v1505
    %2002 = vmatpush.msra.mxu0 %v1501
    %2003 = vmatpush.msra.mxu0 %v1497
    %2004 = vmatpush.msra.mxu0 %v1493
    %2005 = vmatpush.msra.mxu0 %v1489
    %2006 = vmatpush.msra.mxu0 %v1485
    %2007 = vmatpush.msra.mxu0 %v1481
    %2008 = vmatpush.msra.mxu0 %v1477
    %2009 = vmatpush.msra.mxu0 %v1473
    %2010 = vmatpush.msra.mxu0 %v1469
    %2011 = vmatpush.msra.mxu0 %v1465
    %2012 = vmatpush.msra.mxu0 %v1461
    %2013 = vmatmul.f32.gmra.mxu0 %v1936
    %v2014 = vpop.f32.mrf.mxu0
    %v2015 = vadd.f32 0.0, %v2014
    %2016 = vdwg.mxu0
    %v2017 = vadd.f32 %v1932, %v1955
    %v2018 = vadd.f32 %v1933, %v1975
    %v2019 = vadd.f32 %v1934, %v1995
    %v2020 = vadd.f32 %v1935, %v2015
    %v2021 = vmul.f32 %v2017, 0.5
    %v2022 = vtanh.pop %v2021
    %v2023 = vadd.f32 %v2022, 1.0
    %v2024 = vmul.f32 %v2023, 0.5
    %v2025 = vmul.f32 %v2018, 0.5
    %v2026 = vtanh.pop %v2025
    %v2027 = vadd.f32 %v2026, 1.0
    %v2028 = vmul.f32 %v2027, 0.5
    %v2029 = vtanh.pop %v2019
    %v2030 = vmul.f32 %v2020, 0.5
    %v2031 = vtanh.pop %v2030
    %v2032 = vadd.f32 %v2031, 1.0
    %v2033 = vmul.f32 %v2032, 0.5
    %v2034 = vld [vmem:[#allocation4] sm:$0xff]
    %v2035 = vmul.f32 %v2028, %v2034
    %v2036 = vmul.f32 %v2024, %v2029
    %v2037 = vadd.f32 %v2035, %v2036
    %v2038 = vtanh.pop %v2037
    %v2039 = vmul.f32 %v2033, %v2038
    %2040 = vst [vmem:[#allocation4] sm:$0xff] %v2037
    %2041 = vst [vmem:[#allocation3] sm:$0xff] %v2039
    %2042 = vst [vmem:[%s664] sm:$0xff] %v2039
    %v2043 = vld [vmem:[%s666] sm:$0xff]
    %v2044 = vld [vmem:[%s666 + $0x8] sm:$0xff]
    %v2045 = vld [vmem:[%s666 + $0x10] sm:$0xff]
    %v2046 = vld [vmem:[%s666 + $0x18] sm:$0xff]
    %v2047 = vld [vmem:[#allocation3] sm:$0xff]
    %2048 = vmatpush.msra.mxu0 %v1518
    %2049 = vmatpush.msra.mxu0 %v1514
    %2050 = vmatpush.msra.mxu0 %v1510
    %2051 = vmatpush.msra.mxu0 %v1506
    %2052 = vmatpush.msra.mxu0 %v1502
    %2053 = vmatpush.msra.mxu0 %v1498
    %2054 = vmatpush.msra.mxu0 %v1494
    %2055 = vmatpush.msra.mxu0 %v1490
    %2056 = vmatpush.msra.mxu0 %v1486
    %2057 = vmatpush.msra.mxu0 %v1482
    %2058 = vmatpush.msra.mxu0 %v1478
    %2059 = vmatpush.msra.mxu0 %v1474
    %2060 = vmatpush.msra.mxu0 %v1470
    %2061 = vmatpush.msra.mxu0 %v1466
    %2062 = vmatpush.msra.mxu0 %v1462
    %2063 = vmatpush.msra.mxu0 %v1458
    %2064 = vmatmul.f32.gmra.mxu0 %v2047
    %v2065 = vpop.f32.mrf.mxu0
    %v2066 = vadd.f32 0.0, %v2065
    %2067 = vdwg.mxu0
    %2068 = vmatpush.msra.mxu0 %v1519
    %2069 = vmatpush.msra.mxu0 %v1515
    %2070 = vmatpush.msra.mxu0 %v1511
    %2071 = vmatpush.msra.mxu0 %v1507
    %2072 = vmatpush.msra.mxu0 %v1503
    %2073 = vmatpush.msra.mxu0 %v1499
    %2074 = vmatpush.msra.mxu0 %v1495
    %2075 = vmatpush.msra.mxu0 %v1491
    %2076 = vmatpush.msra.mxu0 %v1487
    %2077 = vmatpush.msra.mxu0 %v1483
    %2078 = vmatpush.msra.mxu0 %v1479
    %2079 = vmatpush.msra.mxu0 %v1475
    %2080 = vmatpush.msra.mxu0 %v1471
    %2081 = vmatpush.msra.mxu0 %v1467
    %2082 = vmatpush.msra.mxu0 %v1463
    %2083 = vmatpush.msra.mxu0 %v1459
    %2084 = vmatmul.f32.gmra.mxu0 %v2047
    %v2085 = vpop.f32.mrf.mxu0
    %v2086 = vadd.f32 0.0, %v2085
    %2087 = vdwg.mxu0
    %2088 = vmatpush.msra.mxu0 %v1520
    %2089 = vmatpush.msra.mxu0 %v1516
    %2090 = vmatpush.msra.mxu0 %v1512
    %2091 = vmatpush.msra.mxu0 %v1508
    %2092 = vmatpush.msra.mxu0 %v1504
    %2093 = vmatpush.msra.mxu0 %v1500
    %2094 = vmatpush.msra.mxu0 %v1496
    %2095 = vmatpush.msra.mxu0 %v1492
    %2096 = vmatpush.msra.mxu0 %v1488
    %2097 = vmatpush.msra.mxu0 %v1484
    %2098 = vmatpush.msra.mxu0 %v1480
    %2099 = vmatpush.msra.mxu0 %v1476
    %2100 = vmatpush.msra.mxu0 %v1472
    %2101 = vmatpush.msra.mxu0 %v1468
    %2102 = vmatpush.msra.mxu0 %v1464
    %2103 = vmatpush.msra.mxu0 %v1460
    %2104 = vmatmul.f32.gmra.mxu0 %v2047
    %v2105 = vpop.f32.mrf.mxu0
    %v2106 = vadd.f32 0.0, %v2105
    %2107 = vdwg.mxu0
    %2108 = vmatpush.msra.mxu0 %v1521
    %2109 = vmatpush.msra.mxu0 %v1517
    %2110 = vmatpush.msra.mxu0 %v1513
    %2111 = vmatpush.msra.mxu0 %v1509
    %2112 = vmatpush.msra.mxu0 %v1505
    %2113 = vmatpush.msra.mxu0 %v1501
    %2114 = vmatpush.msra.mxu0 %v1497
    %2115 = vmatpush.msra.mxu0 %v1493
    %2116 = vmatpush.msra.mxu0 %v1489
    %2117 = vmatpush.msra.mxu0 %v1485
    %2118 = vmatpush.msra.mxu0 %v1481
    %2119 = vmatpush.msra.mxu0 %v1477
    %2120 = vmatpush.msra.mxu0 %v1473
    %2121 = vmatpush.msra.mxu0 %v1469
    %2122 = vmatpush.msra.mxu0 %v1465
    %2123 = vmatpush.msra.mxu0 %v1461
    %2124 = vmatmul.f32.gmra.mxu0 %v2047
    %v2125 = vpop.f32.mrf.mxu0
    %v2126 = vadd.f32 0.0, %v2125
    %2127 = vdwg.mxu0
    %v2128 = vadd.f32 %v2043, %v2066
    %v2129 = vadd.f32 %v2044, %v2086
    %v2130 = vadd.f32 %v2045, %v2106
    %v2131 = vadd.f32 %v2046, %v2126
    %v2132 = vmul.f32 %v2128, 0.5
    %v2133 = vtanh.pop %v2132
    %v2134 = vadd.f32 %v2133, 1.0
    %v2135 = vmul.f32 %v2134, 0.5
    %v2136 = vmul.f32 %v2129, 0.5
    %v2137 = vtanh.pop %v2136
    %v2138 = vadd.f32 %v2137, 1.0
    %v2139 = vmul.f32 %v2138, 0.5
    %v2140 = vtanh.pop %v2130
    %v2141 = vmul.f32 %v2131, 0.5
    %v2142 = vtanh.pop %v2141
    %v2143 = vadd.f32 %v2142, 1.0
    %v2144 = vmul.f32 %v2143, 0.5
    %v2145 = vld [vmem:[#allocation4] sm:$0xff]
    %v2146 = vmul.f32 %v2139, %v2145
    %v2147 = vmul.f32 %v2135, %v2140
    %v2148 = vadd.f32 %v2146, %v2147
    %v2149 = vtanh.pop %v2148
    %v2150 = vmul.f32 %v2144, %v2149
    %2151 = vst [vmem:[#allocation4] sm:$0xff] %v2148
    %2152 = vst [vmem:[#allocation3] sm:$0xff] %v2150
    %2153 = vst [vmem:[%s777] sm:$0xff] %v2150
    %v2154 = vld [vmem:[%s779] sm:$0xff]
    %v2155 = vld [vmem:[%s779 + $0x8] sm:$0xff]
    %v2156 = vld [vmem:[%s779 + $0x10] sm:$0xff]
    %v2157 = vld [vmem:[%s779 + $0x18] sm:$0xff]
    %v2158 = vld [vmem:[#allocation3] sm:$0xff]
    %2159 = vmatpush.msra.mxu0 %v1518
    %2160 = vmatpush.msra.mxu0 %v1514
    %2161 = vmatpush.msra.mxu0 %v1510
    %2162 = vmatpush.msra.mxu0 %v1506
    %2163 = vmatpush.msra.mxu0 %v1502
    %2164 = vmatpush.msra.mxu0 %v1498
    %2165 = vmatpush.msra.mxu0 %v1494
    %2166 = vmatpush.msra.mxu0 %v1490
    %2167 = vmatpush.msra.mxu0 %v1486
    %2168 = vmatpush.msra.mxu0 %v1482
    %2169 = vmatpush.msra.mxu0 %v1478
    %2170 = vmatpush.msra.mxu0 %v1474
    %2171 = vmatpush.msra.mxu0 %v1470
    %2172 = vmatpush.msra.mxu0 %v1466
    %2173 = vmatpush.msra.mxu0 %v1462
    %2174 = vmatpush.msra.mxu0 %v1458
    %2175 = vmatmul.f32.gmra.mxu0 %v2158
    %v2176 = vpop.f32.mrf.mxu0
    %v2177 = vadd.f32 0.0, %v2176
    %2178 = vdwg.mxu0
    %2179 = vmatpush.msra.mxu0 %v1519
    %2180 = vmatpush.msra.mxu0 %v1515
    %2181 = vmatpush.msra.mxu0 %v1511
    %2182 = vmatpush.msra.mxu0 %v1507
    %2183 = vmatpush.msra.mxu0 %v1503
    %2184 = vmatpush.msra.mxu0 %v1499
    %2185 = vmatpush.msra.mxu0 %v1495
    %2186 = vmatpush.msra.mxu0 %v1491
    %2187 = vmatpush.msra.mxu0 %v1487
    %2188 = vmatpush.msra.mxu0 %v1483
    %2189 = vmatpush.msra.mxu0 %v1479
    %2190 = vmatpush.msra.mxu0 %v1475
    %2191 = vmatpush.msra.mxu0 %v1471
    %2192 = vmatpush.msra.mxu0 %v1467
    %2193 = vmatpush.msra.mxu0 %v1463
    %2194 = vmatpush.msra.mxu0 %v1459
    %2195 = vmatmul.f32.gmra.mxu0 %v2158
    %v2196 = vpop.f32.mrf.mxu0
    %v2197 = vadd.f32 0.0, %v2196
    %2198 = vdwg.mxu0
    %2199 = vmatpush.msra.mxu0 %v1520
    %2200 = vmatpush.msra.mxu0 %v1516
    %2201 = vmatpush.msra.mxu0 %v1512
    %2202 = vmatpush.msra.mxu0 %v1508
    %2203 = vmatpush.msra.mxu0 %v1504
    %2204 = vmatpush.msra.mxu0 %v1500
    %2205 = vmatpush.msra.mxu0 %v1496
    %2206 = vmatpush.msra.mxu0 %v1492
    %2207 = vmatpush.msra.mxu0 %v1488
    %2208 = vmatpush.msra.mxu0 %v1484
    %2209 = vmatpush.msra.mxu0 %v1480
    %2210 = vmatpush.msra.mxu0 %v1476
    %2211 = vmatpush.msra.mxu0 %v1472
    %2212 = vmatpush.msra.mxu0 %v1468
    %2213 = vmatpush.msra.mxu0 %v1464
    %2214 = vmatpush.msra.mxu0 %v1460
    %2215 = vmatmul.f32.gmra.mxu0 %v2158
    %v2216 = vpop.f32.mrf.mxu0
    %v2217 = vadd.f32 0.0, %v2216
    %2218 = vdwg.mxu0
    %2219 = vmatpush.msra.mxu0 %v1521
    %2220 = vmatpush.msra.mxu0 %v1517
    %2221 = vmatpush.msra.mxu0 %v1513
    %2222 = vmatpush.msra.mxu0 %v1509
    %2223 = vmatpush.msra.mxu0 %v1505
    %2224 = vmatpush.msra.mxu0 %v1501
    %2225 = vmatpush.msra.mxu0 %v1497
    %2226 = vmatpush.msra.mxu0 %v1493
    %2227 = vmatpush.msra.mxu0 %v1489
    %2228 = vmatpush.msra.mxu0 %v1485
    %2229 = vmatpush.msra.mxu0 %v1481
    %2230 = vmatpush.msra.mxu0 %v1477
    %2231 = vmatpush.msra.mxu0 %v1473
    %2232 = vmatpush.msra.mxu0 %v1469
    %2233 = vmatpush.msra.mxu0 %v1465
    %2234 = vmatpush.msra.mxu0 %v1461
    %2235 = vmatmul.f32.gmra.mxu0 %v2158
    %v2236 = vpop.f32.mrf.mxu0
    %v2237 = vadd.f32 0.0, %v2236
    %2238 = vdwg.mxu0
    %v2239 = vadd.f32 %v2154, %v2177
    %v2240 = vadd.f32 %v2155, %v2197
    %v2241 = vadd.f32 %v2156, %v2217
    %v2242 = vadd.f32 %v2157, %v2237
    %v2243 = vmul.f32 %v2239, 0.5
    %v2244 = vtanh.pop %v2243
    %v2245 = vadd.f32 %v2244, 1.0
    %v2246 = vmul.f32 %v2245, 0.5
    %v2247 = vmul.f32 %v2240, 0.5
    %v2248 = vtanh.pop %v2247
    %v2249 = vadd.f32 %v2248, 1.0
    %v2250 = vmul.f32 %v2249, 0.5
    %v2251 = vtanh.pop %v2241
    %v2252 = vmul.f32 %v2242, 0.5
    %v2253 = vtanh.pop %v2252
    %v2254 = vadd.f32 %v2253, 1.0
    %v2255 = vmul.f32 %v2254, 0.5
    %v2256 = vld [vmem:[#allocation4] sm:$0xff]
    %v2257 = vmul.f32 %v2250, %v2256
    %v2258 = vmul.f32 %v2246, %v2251
    %v2259 = vadd.f32 %v2257, %v2258
    %v2260 = vtanh.pop %v2259
    %v2261 = vmul.f32 %v2255, %v2260
    %2262 = vst [vmem:[#allocation4] sm:$0xff] %v2259
    %2263 = vst [vmem:[#allocation3] sm:$0xff] %v2261
    %2264 = vst [vmem:[%s890] sm:$0xff] %v2261
    %v2265 = vld [vmem:[%s892] sm:$0xff]
    %v2266 = vld [vmem:[%s892 + $0x8] sm:$0xff]
    %v2267 = vld [vmem:[%s892 + $0x10] sm:$0xff]
    %v2268 = vld [vmem:[%s892 + $0x18] sm:$0xff]
    %v2269 = vld [vmem:[#allocation3] sm:$0xff]
    %2270 = vmatpush.msra.mxu0 %v1518
    %2271 = vmatpush.msra.mxu0 %v1514
    %2272 = vmatpush.msra.mxu0 %v1510
    %2273 = vmatpush.msra.mxu0 %v1506
    %2274 = vmatpush.msra.mxu0 %v1502
    %2275 = vmatpush.msra.mxu0 %v1498
    %2276 = vmatpush.msra.mxu0 %v1494
    %2277 = vmatpush.msra.mxu0 %v1490
    %2278 = vmatpush.msra.mxu0 %v1486
    %2279 = vmatpush.msra.mxu0 %v1482
    %2280 = vmatpush.msra.mxu0 %v1478
    %2281 = vmatpush.msra.mxu0 %v1474
    %2282 = vmatpush.msra.mxu0 %v1470
    %2283 = vmatpush.msra.mxu0 %v1466
    %2284 = vmatpush.msra.mxu0 %v1462
    %2285 = vmatpush.msra.mxu0 %v1458
    %2286 = vmatmul.f32.gmra.mxu0 %v2269
    %v2287 = vpop.f32.mrf.mxu0
    %v2288 = vadd.f32 0.0, %v2287
    %2289 = vdwg.mxu0
    %2290 = vmatpush.msra.mxu0 %v1519
    %2291 = vmatpush.msra.mxu0 %v1515
    %2292 = vmatpush.msra.mxu0 %v1511
    %2293 = vmatpush.msra.mxu0 %v1507
    %2294 = vmatpush.msra.mxu0 %v1503
    %2295 = vmatpush.msra.mxu0 %v1499
    %2296 = vmatpush.msra.mxu0 %v1495
    %2297 = vmatpush.msra.mxu0 %v1491
    %2298 = vmatpush.msra.mxu0 %v1487
    %2299 = vmatpush.msra.mxu0 %v1483
    %2300 = vmatpush.msra.mxu0 %v1479
    %2301 = vmatpush.msra.mxu0 %v1475
    %2302 = vmatpush.msra.mxu0 %v1471
    %2303 = vmatpush.msra.mxu0 %v1467
    %2304 = vmatpush.msra.mxu0 %v1463
    %2305 = vmatpush.msra.mxu0 %v1459
    %2306 = vmatmul.f32.gmra.mxu0 %v2269
    %v2307 = vpop.f32.mrf.mxu0
    %v2308 = vadd.f32 0.0, %v2307
    %2309 = vdwg.mxu0
    %2310 = vmatpush.msra.mxu0 %v1520
    %2311 = vmatpush.msra.mxu0 %v1516
    %2312 = vmatpush.msra.mxu0 %v1512
    %2313 = vmatpush.msra.mxu0 %v1508
    %2314 = vmatpush.msra.mxu0 %v1504
    %2315 = vmatpush.msra.mxu0 %v1500
    %2316 = vmatpush.msra.mxu0 %v1496
    %2317 = vmatpush.msra.mxu0 %v1492
    %2318 = vmatpush.msra.mxu0 %v1488
    %2319 = vmatpush.msra.mxu0 %v1484
    %2320 = vmatpush.msra.mxu0 %v1480
    %2321 = vmatpush.msra.mxu0 %v1476
    %2322 = vmatpush.msra.mxu0 %v1472
    %2323 = vmatpush.msra.mxu0 %v1468
    %2324 = vmatpush.msra.mxu0 %v1464
    %2325 = vmatpush.msra.mxu0 %v1460
    %2326 = vmatmul.f32.gmra.mxu0 %v2269
    %v2327 = vpop.f32.mrf.mxu0
    %v2328 = vadd.f32 0.0, %v2327
    %2329 = vdwg.mxu0
    %2330 = vmatpush.msra.mxu0 %v1521
    %2331 = vmatpush.msra.mxu0 %v1517
    %2332 = vmatpush.msra.mxu0 %v1513
    %2333 = vmatpush.msra.mxu0 %v1509
    %2334 = vmatpush.msra.mxu0 %v1505
    %2335 = vmatpush.msra.mxu0 %v1501
    %2336 = vmatpush.msra.mxu0 %v1497
    %2337 = vmatpush.msra.mxu0 %v1493
    %2338 = vmatpush.msra.mxu0 %v1489
    %2339 = vmatpush.msra.mxu0 %v1485
    %2340 = vmatpush.msra.mxu0 %v1481
    %2341 = vmatpush.msra.mxu0 %v1477
    %2342 = vmatpush.msra.mxu0 %v1473
    %2343 = vmatpush.msra.mxu0 %v1469
    %2344 = vmatpush.msra.mxu0 %v1465
    %2345 = vmatpush.msra.mxu0 %v1461
    %2346 = vmatmul.f32.gmra.mxu0 %v2269
    %v2347 = vpop.f32.mrf.mxu0
    %v2348 = vadd.f32 0.0, %v2347
    %2349 = vdwg.mxu0
    %v2350 = vadd.f32 %v2265, %v2288
    %v2351 = vadd.f32 %v2266, %v2308
    %v2352 = vadd.f32 %v2267, %v2328
    %v2353 = vadd.f32 %v2268, %v2348
    %v2354 = vmul.f32 %v2350, 0.5
    %v2355 = vtanh.pop %v2354
    %v2356 = vadd.f32 %v2355, 1.0
    %v2357 = vmul.f32 %v2356, 0.5
    %v2358 = vmul.f32 %v2351, 0.5
    %v2359 = vtanh.pop %v2358
    %v2360 = vadd.f32 %v2359, 1.0
    %v2361 = vmul.f32 %v2360, 0.5
    %v2362 = vtanh.pop %v2352
    %v2363 = vmul.f32 %v2353, 0.5
    %v2364 = vtanh.pop %v2363
    %v2365 = vadd.f32 %v2364, 1.0
    %v2366 = vmul.f32 %v2365, 0.5
    %v2367 = vld [vmem:[#allocation4] sm:$0xff]
    %v2368 = vmul.f32 %v2361, %v2367
    %v2369 = vmul.f32 %v2357, %v2362
    %v2370 = vadd.f32 %v2368, %v2369
    %v2371 = vtanh.pop %v2370
    %v2372 = vmul.f32 %v2366, %v2371
    %2373 = vst [vmem:[#allocation4] sm:$0xff] %v2370
    %2374 = vst [vmem:[#allocation3] sm:$0xff] %v2372
    %2375 = vst [vmem:[%s1003] sm:$0xff] %v2372
    %v2376 = vld [vmem:[%s1005] sm:$0xff]
    %v2377 = vld [vmem:[%s1005 + $0x8] sm:$0xff]
    %v2378 = vld [vmem:[%s1005 + $0x10] sm:$0xff]
    %v2379 = vld [vmem:[%s1005 + $0x18] sm:$0xff]
    %v2380 = vld [vmem:[#allocation3] sm:$0xff]
    %2381 = vmatpush.msra.mxu0 %v1518
    %2382 = vmatpush.msra.mxu0 %v1514
    %2383 = vmatpush.msra.mxu0 %v1510
    %2384 = vmatpush.msra.mxu0 %v1506
    %2385 = vmatpush.msra.mxu0 %v1502
    %2386 = vmatpush.msra.mxu0 %v1498
    %2387 = vmatpush.msra.mxu0 %v1494
    %2388 = vmatpush.msra.mxu0 %v1490
    %2389 = vmatpush.msra.mxu0 %v1486
    %2390 = vmatpush.msra.mxu0 %v1482
    %2391 = vmatpush.msra.mxu0 %v1478
    %2392 = vmatpush.msra.mxu0 %v1474
    %2393 = vmatpush.msra.mxu0 %v1470
    %2394 = vmatpush.msra.mxu0 %v1466
    %2395 = vmatpush.msra.mxu0 %v1462
    %2396 = vmatpush.msra.mxu0 %v1458
    %2397 = vmatmul.f32.gmra.mxu0 %v2380
    %v2398 = vpop.f32.mrf.mxu0
    %v2399 = vadd.f32 0.0, %v2398
    %2400 = vdwg.mxu0
    %2401 = vmatpush.msra.mxu0 %v1519
    %2402 = vmatpush.msra.mxu0 %v1515
    %2403 = vmatpush.msra.mxu0 %v1511
    %2404 = vmatpush.msra.mxu0 %v1507
    %2405 = vmatpush.msra.mxu0 %v1503
    %2406 = vmatpush.msra.mxu0 %v1499
    %2407 = vmatpush.msra.mxu0 %v1495
    %2408 = vmatpush.msra.mxu0 %v1491
    %2409 = vmatpush.msra.mxu0 %v1487
    %2410 = vmatpush.msra.mxu0 %v1483
    %2411 = vmatpush.msra.mxu0 %v1479
    %2412 = vmatpush.msra.mxu0 %v1475
    %2413 = vmatpush.msra.mxu0 %v1471
    %2414 = vmatpush.msra.mxu0 %v1467
    %2415 = vmatpush.msra.mxu0 %v1463
    %2416 = vmatpush.msra.mxu0 %v1459
    %2417 = vmatmul.f32.gmra.mxu0 %v2380
    %v2418 = vpop.f32.mrf.mxu0
    %v2419 = vadd.f32 0.0, %v2418
    %2420 = vdwg.mxu0
    %2421 = vmatpush.msra.mxu0 %v1520
    %2422 = vmatpush.msra.mxu0 %v1516
    %2423 = vmatpush.msra.mxu0 %v1512
    %2424 = vmatpush.msra.mxu0 %v1508
    %2425 = vmatpush.msra.mxu0 %v1504
    %2426 = vmatpush.msra.mxu0 %v1500
    %2427 = vmatpush.msra.mxu0 %v1496
    %2428 = vmatpush.msra.mxu0 %v1492
    %2429 = vmatpush.msra.mxu0 %v1488
    %2430 = vmatpush.msra.mxu0 %v1484
    %2431 = vmatpush.msra.mxu0 %v1480
    %2432 = vmatpush.msra.mxu0 %v1476
    %2433 = vmatpush.msra.mxu0 %v1472
    %2434 = vmatpush.msra.mxu0 %v1468
    %2435 = vmatpush.msra.mxu0 %v1464
    %2436 = vmatpush.msra.mxu0 %v1460
    %2437 = vmatmul.f32.gmra.mxu0 %v2380
    %v2438 = vpop.f32.mrf.mxu0
    %v2439 = vadd.f32 0.0, %v2438
    %2440 = vdwg.mxu0
    %2441 = vmatpush.msra.mxu0 %v1521
    %2442 = vmatpush.msra.mxu0 %v1517
    %2443 = vmatpush.msra.mxu0 %v1513
    %2444 = vmatpush.msra.mxu0 %v1509
    %2445 = vmatpush.msra.mxu0 %v1505
    %2446 = vmatpush.msra.mxu0 %v1501
    %2447 = vmatpush.msra.mxu0 %v1497
    %2448 = vmatpush.msra.mxu0 %v1493
    %2449 = vmatpush.msra.mxu0 %v1489
    %2450 = vmatpush.msra.mxu0 %v1485
    %2451 = vmatpush.msra.mxu0 %v1481
    %2452 = vmatpush.msra.mxu0 %v1477
    %2453 = vmatpush.msra.mxu0 %v1473
    %2454 = vmatpush.msra.mxu0 %v1469
    %2455 = vmatpush.msra.mxu0 %v1465
    %2456 = vmatpush.msra.mxu0 %v1461
    %2457 = vmatmul.f32.gmra.mxu0 %v2380
    %v2458 = vpop.f32.mrf.mxu0
    %v2459 = vadd.f32 0.0, %v2458
    %2460 = vdwg.mxu0
    %v2461 = vadd.f32 %v2376, %v2399
    %v2462 = vadd.f32 %v2377, %v2419
    %v2463 = vadd.f32 %v2378, %v2439
    %v2464 = vadd.f32 %v2379, %v2459
    %v2465 = vmul.f32 %v2461, 0.5
    %v2466 = vtanh.pop %v2465
    %v2467 = vadd.f32 %v2466, 1.0
    %v2468 = vmul.f32 %v2467, 0.5
    %v2469 = vmul.f32 %v2462, 0.5
    %v2470 = vtanh.pop %v2469
    %v2471 = vadd.f32 %v2470, 1.0
    %v2472 = vmul.f32 %v2471, 0.5
    %v2473 = vtanh.pop %v2463
    %v2474 = vmul.f32 %v2464, 0.5
    %v2475 = vtanh.pop %v2474
    %v2476 = vadd.f32 %v2475, 1.0
    %v2477 = vmul.f32 %v2476, 0.5
    %v2478 = vld [vmem:[#allocation4] sm:$0xff]
    %v2479 = vmul.f32 %v2472, %v2478
    %v2480 = vmul.f32 %v2468, %v2473
    %v2481 = vadd.f32 %v2479, %v2480
    %v2482 = vtanh.pop %v2481
    %v2483 = vmul.f32 %v2477, %v2482
    %2484 = vst [vmem:[#allocation4] sm:$0xff] %v2481
    %2485 = vst [vmem:[#allocation3] sm:$0xff] %v2483
    %2486 = vst [vmem:[%s1116] sm:$0xff] %v2483
    %v2487 = vld [vmem:[%s1118] sm:$0xff]
    %v2488 = vld [vmem:[%s1118 + $0x8] sm:$0xff]
    %v2489 = vld [vmem:[%s1118 + $0x10] sm:$0xff]
    %v2490 = vld [vmem:[%s1118 + $0x18] sm:$0xff]
    %v2491 = vld [vmem:[#allocation3] sm:$0xff]
    %2492 = vmatpush.msra.mxu0 %v1518
    %2493 = vmatpush.msra.mxu0 %v1514
    %2494 = vmatpush.msra.mxu0 %v1510
    %2495 = vmatpush.msra.mxu0 %v1506
    %2496 = vmatpush.msra.mxu0 %v1502
    %2497 = vmatpush.msra.mxu0 %v1498
    %2498 = vmatpush.msra.mxu0 %v1494
    %2499 = vmatpush.msra.mxu0 %v1490
    %2500 = vmatpush.msra.mxu0 %v1486
    %2501 = vmatpush.msra.mxu0 %v1482
    %2502 = vmatpush.msra.mxu0 %v1478
    %2503 = vmatpush.msra.mxu0 %v1474
    %2504 = vmatpush.msra.mxu0 %v1470
    %2505 = vmatpush.msra.mxu0 %v1466
    %2506 = vmatpush.msra.mxu0 %v1462
    %2507 = vmatpush.msra.mxu0 %v1458
    %2508 = vmatmul.f32.gmra.mxu0 %v2491
    %v2509 = vpop.f32.mrf.mxu0
    %v2510 = vadd.f32 0.0, %v2509
    %2511 = vdwg.mxu0
    %2512 = vmatpush.msra.mxu0 %v1519
    %2513 = vmatpush.msra.mxu0 %v1515
    %2514 = vmatpush.msra.mxu0 %v1511
    %2515 = vmatpush.msra.mxu0 %v1507
    %2516 = vmatpush.msra.mxu0 %v1503
    %2517 = vmatpush.msra.mxu0 %v1499
    %2518 = vmatpush.msra.mxu0 %v1495
    %2519 = vmatpush.msra.mxu0 %v1491
    %2520 = vmatpush.msra.mxu0 %v1487
    %2521 = vmatpush.msra.mxu0 %v1483
    %2522 = vmatpush.msra.mxu0 %v1479
    %2523 = vmatpush.msra.mxu0 %v1475
    %2524 = vmatpush.msra.mxu0 %v1471
    %2525 = vmatpush.msra.mxu0 %v1467
    %2526 = vmatpush.msra.mxu0 %v1463
    %2527 = vmatpush.msra.mxu0 %v1459
    %2528 = vmatmul.f32.gmra.mxu0 %v2491
    %v2529 = vpop.f32.mrf.mxu0
    %v2530 = vadd.f32 0.0, %v2529
    %2531 = vdwg.mxu0
    %2532 = vmatpush.msra.mxu0 %v1520
    %2533 = vmatpush.msra.mxu0 %v1516
    %2534 = vmatpush.msra.mxu0 %v1512
    %2535 = vmatpush.msra.mxu0 %v1508
    %2536 = vmatpush.msra.mxu0 %v1504
    %2537 = vmatpush.msra.mxu0 %v1500
    %2538 = vmatpush.msra.mxu0 %v1496
    %2539 = vmatpush.msra.mxu0 %v1492
    %2540 = vmatpush.msra.mxu0 %v1488
    %2541 = vmatpush.msra.mxu0 %v1484
    %2542 = vmatpush.msra.mxu0 %v1480
    %2543 = vmatpush.msra.mxu0 %v1476
    %2544 = vmatpush.msra.mxu0 %v1472
    %2545 = vmatpush.msra.mxu0 %v1468
    %2546 = vmatpush.msra.mxu0 %v1464
    %2547 = vmatpush.msra.mxu0 %v1460
    %2548 = vmatmul.f32.gmra.mxu0 %v2491
    %v2549 = vpop.f32.mrf.mxu0
    %v2550 = vadd.f32 0.0, %v2549
    %2551 = vdwg.mxu0
    %2552 = vmatpush.msra.mxu0 %v1521
    %2553 = vmatpush.msra.mxu0 %v1517
    %2554 = vmatpush.msra.mxu0 %v1513
    %2555 = vmatpush.msra.mxu0 %v1509
    %2556 = vmatpush.msra.mxu0 %v1505
    %2557 = vmatpush.msra.mxu0 %v1501
    %2558 = vmatpush.msra.mxu0 %v1497
    %2559 = vmatpush.msra.mxu0 %v1493
    %2560 = vmatpush.msra.mxu0 %v1489
    %2561 = vmatpush.msra.mxu0 %v1485
    %2562 = vmatpush.msra.mxu0 %v1481
    %2563 = vmatpush.msra.mxu0 %v1477
    %2564 = vmatpush.msra.mxu0 %v1473
    %2565 = vmatpush.msra.mxu0 %v1469
    %2566 = vmatpush.msra.mxu0 %v1465
    %2567 = vmatpush.msra.mxu0 %v1461
    %2568 = vmatmul.f32.gmra.mxu0 %v2491
    %v2569 = vpop.f32.mrf.mxu0
    %v2570 = vadd.f32 0.0, %v2569
    %2571 = vdwg.mxu0
    %v2572 = vadd.f32 %v2487, %v2510
    %v2573 = vadd.f32 %v2488, %v2530
    %v2574 = vadd.f32 %v2489, %v2550
    %v2575 = vadd.f32 %v2490, %v2570
    %v2576 = vmul.f32 %v2572, 0.5
    %v2577 = vtanh.pop %v2576
    %v2578 = vadd.f32 %v2577, 1.0
    %v2579 = vmul.f32 %v2578, 0.5
    %v2580 = vmul.f32 %v2573, 0.5
    %v2581 = vtanh.pop %v2580
    %v2582 = vadd.f32 %v2581, 1.0
    %v2583 = vmul.f32 %v2582, 0.5
    %v2584 = vtanh.pop %v2574
    %v2585 = vmul.f32 %v2575, 0.5
    %v2586 = vtanh.pop %v2585
    %v2587 = vadd.f32 %v2586, 1.0
    %v2588 = vmul.f32 %v2587, 0.5
    %v2589 = vld [vmem:[#allocation4] sm:$0xff]
    %v2590 = vmul.f32 %v2583, %v2589
    %v2591 = vmul.f32 %v2579, %v2584
    %v2592 = vadd.f32 %v2590, %v2591
    %v2593 = vtanh.pop %v2592
    %v2594 = vmul.f32 %v2588, %v2593
    %2595 = vst [vmem:[#allocation4] sm:$0xff] %v2592
    %2596 = vst [vmem:[#allocation3] sm:$0xff] %v2594
    %2597 = vst [vmem:[%s1229] sm:$0xff] %v2594
    %v2598 = vld [vmem:[%s1231] sm:$0xff]
    %v2599 = vld [vmem:[%s1231 + $0x8] sm:$0xff]
    %v2600 = vld [vmem:[%s1231 + $0x10] sm:$0xff]
    %v2601 = vld [vmem:[%s1231 + $0x18] sm:$0xff]
    %v2602 = vld [vmem:[#allocation3] sm:$0xff]
    %2603 = vmatpush.msra.mxu0 %v1518
    %2604 = vmatpush.msra.mxu0 %v1514
    %2605 = vmatpush.msra.mxu0 %v1510
    %2606 = vmatpush.msra.mxu0 %v1506
    %2607 = vmatpush.msra.mxu0 %v1502
    %2608 = vmatpush.msra.mxu0 %v1498
    %2609 = vmatpush.msra.mxu0 %v1494
    %2610 = vmatpush.msra.mxu0 %v1490
    %2611 = vmatpush.msra.mxu0 %v1486
    %2612 = vmatpush.msra.mxu0 %v1482
    %2613 = vmatpush.msra.mxu0 %v1478
    %2614 = vmatpush.msra.mxu0 %v1474
    %2615 = vmatpush.msra.mxu0 %v1470
    %2616 = vmatpush.msra.mxu0 %v1466
    %2617 = vmatpush.msra.mxu0 %v1462
    %2618 = vmatpush.msra.mxu0 %v1458
    %2619 = vmatmul.f32.gmra.mxu0 %v2602
    %v2620 = vpop.f32.mrf.mxu0
    %v2621 = vadd.f32 0.0, %v2620
    %2622 = vdwg.mxu0
    %2623 = vmatpush.msra.mxu0 %v1519
    %2624 = vmatpush.msra.mxu0 %v1515
    %2625 = vmatpush.msra.mxu0 %v1511
    %2626 = vmatpush.msra.mxu0 %v1507
    %2627 = vmatpush.msra.mxu0 %v1503
    %2628 = vmatpush.msra.mxu0 %v1499
    %2629 = vmatpush.msra.mxu0 %v1495
    %2630 = vmatpush.msra.mxu0 %v1491
    %2631 = vmatpush.msra.mxu0 %v1487
    %2632 = vmatpush.msra.mxu0 %v1483
    %2633 = vmatpush.msra.mxu0 %v1479
    %2634 = vmatpush.msra.mxu0 %v1475
    %2635 = vmatpush.msra.mxu0 %v1471
    %2636 = vmatpush.msra.mxu0 %v1467
    %2637 = vmatpush.msra.mxu0 %v1463
    %2638 = vmatpush.msra.mxu0 %v1459
    %2639 = vmatmul.f32.gmra.mxu0 %v2602
    %v2640 = vpop.f32.mrf.mxu0
    %v2641 = vadd.f32 0.0, %v2640
    %2642 = vdwg.mxu0
    %2643 = vmatpush.msra.mxu0 %v1520
    %2644 = vmatpush.msra.mxu0 %v1516
    %2645 = vmatpush.msra.mxu0 %v1512
    %2646 = vmatpush.msra.mxu0 %v1508
    %2647 = vmatpush.msra.mxu0 %v1504
    %2648 = vmatpush.msra.mxu0 %v1500
    %2649 = vmatpush.msra.mxu0 %v1496
    %2650 = vmatpush.msra.mxu0 %v1492
    %2651 = vmatpush.msra.mxu0 %v1488
    %2652 = vmatpush.msra.mxu0 %v1484
    %2653 = vmatpush.msra.mxu0 %v1480
    %2654 = vmatpush.msra.mxu0 %v1476
    %2655 = vmatpush.msra.mxu0 %v1472
    %2656 = vmatpush.msra.mxu0 %v1468
    %2657 = vmatpush.msra.mxu0 %v1464
    %2658 = vmatpush.msra.mxu0 %v1460
    %2659 = vmatmul.f32.gmra.mxu0 %v2602
    %v2660 = vpop.f32.mrf.mxu0
    %v2661 = vadd.f32 0.0, %v2660
    %2662 = vdwg.mxu0
    %2663 = vmatpush.msra.mxu0 %v1521
    %2664 = vmatpush.msra.mxu0 %v1517
    %2665 = vmatpush.msra.mxu0 %v1513
    %2666 = vmatpush.msra.mxu0 %v1509
    %2667 = vmatpush.msra.mxu0 %v1505
    %2668 = vmatpush.msra.mxu0 %v1501
    %2669 = vmatpush.msra.mxu0 %v1497
    %2670 = vmatpush.msra.mxu0 %v1493
    %2671 = vmatpush.msra.mxu0 %v1489
    %2672 = vmatpush.msra.mxu0 %v1485
    %2673 = vmatpush.msra.mxu0 %v1481
    %2674 = vmatpush.msra.mxu0 %v1477
    %2675 = vmatpush.msra.mxu0 %v1473
    %2676 = vmatpush.msra.mxu0 %v1469
    %2677 = vmatpush.msra.mxu0 %v1465
    %2678 = vmatpush.msra.mxu0 %v1461
    %2679 = vmatmul.f32.gmra.mxu0 %v2602
    %v2680 = vpop.f32.mrf.mxu0
    %v2681 = vadd.f32 0.0, %v2680
    %2682 = vdwg.mxu0
    %v2683 = vadd.f32 %v2598, %v2621
    %v2684 = vadd.f32 %v2599, %v2641
    %v2685 = vadd.f32 %v2600, %v2661
    %v2686 = vadd.f32 %v2601, %v2681
    %v2687 = vmul.f32 %v2683, 0.5
    %v2688 = vtanh.pop %v2687
    %v2689 = vadd.f32 %v2688, 1.0
    %v2690 = vmul.f32 %v2689, 0.5
    %v2691 = vmul.f32 %v2684, 0.5
    %v2692 = vtanh.pop %v2691
    %v2693 = vadd.f32 %v2692, 1.0
    %v2694 = vmul.f32 %v2693, 0.5
    %v2695 = vtanh.pop %v2685
    %v2696 = vmul.f32 %v2686, 0.5
    %v2697 = vtanh.pop %v2696
    %v2698 = vadd.f32 %v2697, 1.0
    %v2699 = vmul.f32 %v2698, 0.5
    %v2700 = vld [vmem:[#allocation4] sm:$0xff]
    %v2701 = vmul.f32 %v2694, %v2700
    %v2702 = vmul.f32 %v2690, %v2695
    %v2703 = vadd.f32 %v2701, %v2702
    %v2704 = vtanh.pop %v2703
    %v2705 = vmul.f32 %v2699, %v2704
    %2706 = vst [vmem:[#allocation4] sm:$0xff] %v2703
    %2707 = vst [vmem:[#allocation3] sm:$0xff] %v2705
    %2708 = vst [vmem:[%s1342] sm:$0xff] %v2705
    %v2709 = vld [vmem:[%s1344] sm:$0xff]
    %v2710 = vld [vmem:[%s1344 + $0x8] sm:$0xff]
    %v2711 = vld [vmem:[%s1344 + $0x10] sm:$0xff]
    %v2712 = vld [vmem:[%s1344 + $0x18] sm:$0xff]
    %v2713 = vld [vmem:[#allocation3] sm:$0xff]
    %2714 = vmatpush.msra.mxu0 %v1518
    %2715 = vmatpush.msra.mxu0 %v1514
    %2716 = vmatpush.msra.mxu0 %v1510
    %2717 = vmatpush.msra.mxu0 %v1506
    %2718 = vmatpush.msra.mxu0 %v1502
    %2719 = vmatpush.msra.mxu0 %v1498
    %2720 = vmatpush.msra.mxu0 %v1494
    %2721 = vmatpush.msra.mxu0 %v1490
    %2722 = vmatpush.msra.mxu0 %v1486
    %2723 = vmatpush.msra.mxu0 %v1482
    %2724 = vmatpush.msra.mxu0 %v1478
    %2725 = vmatpush.msra.mxu0 %v1474
    %2726 = vmatpush.msra.mxu0 %v1470
    %2727 = vmatpush.msra.mxu0 %v1466
    %2728 = vmatpush.msra.mxu0 %v1462
    %2729 = vmatpush.msra.mxu0 %v1458
    %2730 = vmatmul.f32.gmra.mxu0 %v2713
    %v2731 = vpop.f32.mrf.mxu0
    %v2732 = vadd.f32 0.0, %v2731
    %2733 = vdwg.mxu0
    %2734 = vmatpush.msra.mxu0 %v1519
    %2735 = vmatpush.msra.mxu0 %v1515
    %2736 = vmatpush.msra.mxu0 %v1511
    %2737 = vmatpush.msra.mxu0 %v1507
    %2738 = vmatpush.msra.mxu0 %v1503
    %2739 = vmatpush.msra.mxu0 %v1499
    %2740 = vmatpush.msra.mxu0 %v1495
    %2741 = vmatpush.msra.mxu0 %v1491
    %2742 = vmatpush.msra.mxu0 %v1487
    %2743 = vmatpush.msra.mxu0 %v1483
    %2744 = vmatpush.msra.mxu0 %v1479
    %2745 = vmatpush.msra.mxu0 %v1475
    %2746 = vmatpush.msra.mxu0 %v1471
    %2747 = vmatpush.msra.mxu0 %v1467
    %2748 = vmatpush.msra.mxu0 %v1463
    %2749 = vmatpush.msra.mxu0 %v1459
    %2750 = vmatmul.f32.gmra.mxu0 %v2713
    %v2751 = vpop.f32.mrf.mxu0
    %v2752 = vadd.f32 0.0, %v2751
    %2753 = vdwg.mxu0
    %2754 = vmatpush.msra.mxu0 %v1520
    %2755 = vmatpush.msra.mxu0 %v1516
    %2756 = vmatpush.msra.mxu0 %v1512
    %2757 = vmatpush.msra.mxu0 %v1508
    %2758 = vmatpush.msra.mxu0 %v1504
    %2759 = vmatpush.msra.mxu0 %v1500
    %2760 = vmatpush.msra.mxu0 %v1496
    %2761 = vmatpush.msra.mxu0 %v1492
    %2762 = vmatpush.msra.mxu0 %v1488
    %2763 = vmatpush.msra.mxu0 %v1484
    %2764 = vmatpush.msra.mxu0 %v1480
    %2765 = vmatpush.msra.mxu0 %v1476
    %2766 = vmatpush.msra.mxu0 %v1472
    %2767 = vmatpush.msra.mxu0 %v1468
    %2768 = vmatpush.msra.mxu0 %v1464
    %2769 = vmatpush.msra.mxu0 %v1460
    %2770 = vmatmul.f32.gmra.mxu0 %v2713
    %v2771 = vpop.f32.mrf.mxu0
    %v2772 = vadd.f32 0.0, %v2771
    %2773 = vdwg.mxu0
    %2774 = vmatpush.msra.mxu0 %v1521
    %2775 = vmatpush.msra.mxu0 %v1517
    %2776 = vmatpush.msra.mxu0 %v1513
    %2777 = vmatpush.msra.mxu0 %v1509
    %2778 = vmatpush.msra.mxu0 %v1505
    %2779 = vmatpush.msra.mxu0 %v1501
    %2780 = vmatpush.msra.mxu0 %v1497
    %2781 = vmatpush.msra.mxu0 %v1493
    %2782 = vmatpush.msra.mxu0 %v1489
    %2783 = vmatpush.msra.mxu0 %v1485
    %2784 = vmatpush.msra.mxu0 %v1481
    %2785 = vmatpush.msra.mxu0 %v1477
    %2786 = vmatpush.msra.mxu0 %v1473
    %2787 = vmatpush.msra.mxu0 %v1469
    %2788 = vmatpush.msra.mxu0 %v1465
    %2789 = vmatpush.msra.mxu0 %v1461
    %2790 = vmatmul.f32.gmra.mxu0 %v2713
    %v2791 = vpop.f32.mrf.mxu0
    %v2792 = vadd.f32 0.0, %v2791
    %2793 = vdwg.mxu0
    %v2794 = vadd.f32 %v2709, %v2732
    %v2795 = vadd.f32 %v2710, %v2752
    %v2796 = vadd.f32 %v2711, %v2772
    %v2797 = vadd.f32 %v2712, %v2792
    %v2798 = vmul.f32 %v2794, 0.5
    %v2799 = vtanh.pop %v2798
    %v2800 = vadd.f32 %v2799, 1.0
    %v2801 = vmul.f32 %v2800, 0.5
    %v2802 = vmul.f32 %v2795, 0.5
    %v2803 = vtanh.pop %v2802
    %v2804 = vadd.f32 %v2803, 1.0
    %v2805 = vmul.f32 %v2804, 0.5
    %v2806 = vtanh.pop %v2796
    %v2807 = vmul.f32 %v2797, 0.5
    %v2808 = vtanh.pop %v2807
    %v2809 = vadd.f32 %v2808, 1.0
    %v2810 = vmul.f32 %v2809, 0.5
    %v2811 = vld [vmem:[#allocation4] sm:$0xff]
    %v2812 = vmul.f32 %v2805, %v2811
    %v2813 = vmul.f32 %v2801, %v2806
    %v2814 = vadd.f32 %v2812, %v2813
    %v2815 = vtanh.pop %v2814
    %v2816 = vmul.f32 %v2810, %v2815
    %2817 = vst [vmem:[#allocation4] sm:$0xff] %v2814
    %2818 = vst [vmem:[#allocation3] sm:$0xff] %v2816
    %2819 = vst [vmem:[%s1455] sm:$0xff] %v2816
    // Predicated region
    $region34: #{tpu_custom_call.1} parent=1 // pred_check
      _
    $region35: #{tpu_custom_call.1} parent=1 // pred_check_branch
      %2821 = sbr.rel (0) target = $region37
    $region36: #{tpu_custom_call.1} parent=1 // pred_region
      %2823 = vsyncadd [#allocation7], 0
      %s2824 = sshll.u32 [#allocation13], 4
      %s2825 = int_to_ptr.vmem [resolvable:$true] %s2824
      %s2826 = sshll.u32 %s4, 4
      %s2827 = int_to_ptr.hbm [resolvable:$true] %s2826
      %2832 = dma.vmem_to_hbm [thread:$0]  %s2825, 1152, %s2827, [#allocation7], 128, 128, 8
    $region37: #{tpu_custom_call.1} parent=1 // pred_fallthru
      _
    // Predicated region
    $region38: #{tpu_custom_call.1} parent=1 // pred_check
      _
    $region39: #{tpu_custom_call.1} parent=1 // pred_check_branch
      %2834 = sbr.rel (0) target = $region41
    $region40: #{tpu_custom_call.1} parent=1 // pred_region
      %2836 = dma.done [#allocation7], 1152
    $region41: #{tpu_custom_call.1} parent=1 // pred_fallthru
      _
    %2837 = vsyncpa [#allocation6], 1
    %2838 = vsyncpa [#allocation9], 1
    %2839 = vsyncpa [#allocation12], 1
    %2840 = vsyncpa [#allocation7], 1

</llo_original>
